<compile_context>
chip_gen: v7x
topology: tpu7x:2x2x1
jax: 0.10.0
libtpu: 0.0.40
codegen_flags: <defaults>
</compile_context>

<pallas_src>
import jax
import jax.numpy as jnp
from jax.experimental import pallas as pl
from jax.experimental.pallas import tpu as pltpu


def _border_indices(full_extent, phase, s):
    """Indices of a phase buffer that land on the zero-pad border (padded
    full-resolution indices 0 and full_extent+1)."""
    idx = []
    if phase == 0:
        idx.append(0)
    if (full_extent + 1 - phase) % s == 0:
        idx.append((full_extent + 1 - phase) // s)
    return idx


def _make_bottleneck_kernel(H, W, Cin, D, stride, use_conv_shortcut, Nb):
    s = stride
    nph = s * s
    Ho, Wo = H // s, W // s
    Rp, Cp = Ho + 2, Wo + 2          # per-phase padded scratch extents
    M = Nb * Ho * Wo                 # matmul M dimension (batch folded in)

    def kernel(*refs):
        xph_refs = refs[:nph]
        (w1_ref, w2_ref, alpha_ref, s1_ref, b1_ref, s2_ref, b2_ref) = refs[nph:nph + 7]
        idx = nph + 7
        if use_conv_shortcut:
            wsc_ref, ssc_ref, bsc_ref = refs[idx:idx + 3]
            idx += 3
        o_ref = refs[idx]
        ypad_refs = refs[idx + 1: idx + 1 + nph]
        zpad_refs = refs[idx + 1 + nph: idx + 1 + 2 * nph]

        f32 = jnp.float32
        bf16 = jnp.bfloat16

        # ---- hoist per-step constant reads (weights / folded BN / PReLU) ----
        w1 = w1_ref[...]
        w2 = w2_ref[...]
        alpha = alpha_ref[...]
        s1, b1 = s1_ref[...], b1_ref[...]
        s2, b2 = s2_ref[...], b2_ref[...]

        # ---- zero only the pad-border strips of the phase scratches --------
        for a in range(s):
            for b in range(s):
                p = a * s + b
                for r0 in _border_indices(H, a, s):
                    ypad_refs[p][:, pl.ds(r0, 1), :, :] = jnp.zeros((Nb, 1, Cp, Cin), f32)
                    zpad_refs[p][:, pl.ds(r0, 1), :, :] = jnp.zeros((Nb, 1, Cp, D), f32)
                for c0 in _border_indices(W, b, s):
                    ypad_refs[p][:, :, pl.ds(c0, 1), :] = jnp.zeros((Nb, Rp, 1, Cin), f32)
                    zpad_refs[p][:, :, pl.ds(c0, 1), :] = jnp.zeros((Nb, Rp, 1, D), f32)

        # ---- BN1 (eval, folded scale/shift) per input phase -> padded scratch
        # y phase (A, B) lives in ypad phase ((A+1)%s, (B+1)%s) at offset
        # ((A+1)//s, (B+1)//s)   (padded index = s*r + a  <->  y index s*j + A).
        for A in range(s):
            for B in range(s):
                xin = xph_refs[A * s + B][...].astype(f32)        # (Nb, Ho, Wo, Cin)
                y = xin * s1 + b1
                tgt = ((A + 1) % s) * s + ((B + 1) % s)
                ro, co = (A + 1) // s, (B + 1) // s
                ypad_refs[tgt][:, pl.ds(ro, Ho), pl.ds(co, Wo), :] = y

        # ---- conv1 (3x3, stride 1, pad 1) + PReLU: one im2col matmul / phase
        for P in range(s):
            for Q in range(s):
                pieces = []
                for k1 in range(3):
                    a, ro = (P + k1) % s, (P + k1) // s
                    for k2 in range(3):
                        b, co = (Q + k2) % s, (Q + k2) // s
                        patch = ypad_refs[a * s + b][:, pl.ds(ro, Ho), pl.ds(co, Wo), :]
                        pieces.append(patch.reshape(M, Cin))
                cols = jnp.concatenate(pieces, axis=1).astype(bf16)   # (M, 9*Cin)
                acc = jnp.dot(cols, w1, preferred_element_type=f32)
                z = jnp.where(acc >= 0.0, acc, acc * alpha)           # PReLU (per-chan)
                tgt = ((P + 1) % s) * s + ((Q + 1) % s)
                ro, co = (P + 1) // s, (Q + 1) // s
                zpad_refs[tgt][:, pl.ds(ro, Ho), pl.ds(co, Wo), :] = z.reshape(Nb, Ho, Wo, D)

        # ---- conv2 (3x3, stride s, pad 1): one im2col matmul over strided taps
        pieces = []
        for kh in range(3):
            p, ro = kh % s, kh // s
            for kw in range(3):
                q, co = kw % s, kw // s
                patch = zpad_refs[p * s + q][:, pl.ds(ro, Ho), pl.ds(co, Wo), :]
                pieces.append(patch.reshape(M, D))
        cols2 = jnp.concatenate(pieces, axis=1).astype(bf16)          # (M, 9*D)
        res = jnp.dot(cols2, w2, preferred_element_type=f32)
        res = res * s2 + b2                                           # BN2 (eval)

        # ---- shortcut: stride handled by taking phase (0, 0) of x ----------
        # Cast to f32 before the collapse-reshape (f32 reshape is layout-safe).
        x00 = xph_refs[0][...].astype(f32).reshape(M, Cin)            # (M, Cin)
        if use_conv_shortcut:
            sc = jnp.dot(x00.astype(bf16), wsc_ref[...], preferred_element_type=f32)
            sc = sc * ssc_ref[...] + bsc_ref[...]                     # BN (eval)
        else:
            sc = x00                                                  # MaxPool2d(1, s), Cin == D

        o_ref[...] = (res + sc).reshape(Nb, Ho, Wo, D)

    return kernel


def _fold_bn(bn, eps=1e-5):
    gamma, beta, mean, var = bn
    scale = gamma / jnp.sqrt(var + eps)
    return scale.astype(jnp.float32), (beta - mean * scale).astype(jnp.float32)


def bottleneck_ir_pallas(x_nchw, params, stride):
    """bottleneck_IR forward. x_nchw: (N, Cin, H, W) f32 -> (N, D, Ho, Wo) f32."""
    N, Cin, H, W = x_nchw.shape
    D = params["w1"].shape[0]
    s = int(stride)
    assert s in (1, 2) and H % s == 0 and W % s == 0
    nph = s * s
    Ho, Wo = H // s, W // s
    use_conv_shortcut = (Cin != D)

    # Fold a few batch images into each grid step (bigger matmul M, fewer
    # per-step pipeline overheads); remaining steps go on the parallel axis.
    Nb = 1
    for d in range(1, min(N, 4) + 1):
        if N % d == 0:
            Nb = d
    grid = (N // Nb,)

    # NCHW -> phase-decomposed NHWC in one XLA transpose (bf16 halves HBM DMA):
    #   phase[a*s + b][n, ho, wo, c] = x[n, c, s*ho + a, s*wo + b]
    xphase = jnp.transpose(x_nchw.reshape(N, Cin, Ho, s, Wo, s), (3, 5, 0, 2, 4, 1))
    xphase = xphase.reshape(nph, N, Ho, Wo, Cin).astype(jnp.bfloat16)
    x_phases = [xphase[k] for k in range(nph)]

    # conv weights -> im2col layout (kH, kW, Cin) x D, bf16 for full-rate MXU.
    w1 = jnp.transpose(params["w1"], (2, 3, 1, 0)).reshape(9 * Cin, D).astype(jnp.bfloat16)
    w2 = jnp.transpose(params["w2"], (2, 3, 1, 0)).reshape(9 * D, D).astype(jnp.bfloat16)
    s1, b1 = _fold_bn(params["bn1"])
    s2, b2 = _fold_bn(params["bn2"])
    alpha = params["alpha"].reshape(1, D).astype(jnp.float32)
    s1, b1 = s1.reshape(1, Cin), b1.reshape(1, Cin)
    s2, b2 = s2.reshape(1, D), b2.reshape(1, D)

    inputs = list(x_phases) + [w1, w2, alpha, s1, b1, s2, b2]
    in_specs = (
        [pl.BlockSpec((Nb, Ho, Wo, Cin), lambda n: (n, 0, 0, 0)) for _ in range(nph)]
        + [
            pl.BlockSpec((9 * Cin, D), lambda n: (0, 0)),   # conv1 im2col weights
            pl.BlockSpec((9 * D, D), lambda n: (0, 0)),     # conv2 im2col weights
            pl.BlockSpec((1, D), lambda n: (0, 0)),         # PReLU alpha
            pl.BlockSpec((1, Cin), lambda n: (0, 0)),       # bn1 scale
            pl.BlockSpec((1, Cin), lambda n: (0, 0)),       # bn1 shift
            pl.BlockSpec((1, D), lambda n: (0, 0)),         # bn2 scale
            pl.BlockSpec((1, D), lambda n: (0, 0)),         # bn2 shift
        ]
    )
    if use_conv_shortcut:
        wsc = params["wsc"][:, :, 0, 0].T.astype(jnp.bfloat16)        # (Cin, D)
        ssc, bsc = _fold_bn(params["bnsc"])
        inputs += [wsc, ssc.reshape(1, D), bsc.reshape(1, D)]
        in_specs += [
            pl.BlockSpec((Cin, D), lambda n: (0, 0)),
            pl.BlockSpec((1, D), lambda n: (0, 0)),
            pl.BlockSpec((1, D), lambda n: (0, 0)),
        ]
    # else: identity / MaxPool2d(1, stride) shortcut -> no dummy inputs DMA'd.

    kernel = _make_bottleneck_kernel(H, W, Cin, D, s, use_conv_shortcut, Nb)

    out = pl.pallas_call(
        kernel,
        out_shape=jax.ShapeDtypeStruct((N, Ho, Wo, D), jnp.float32),
        grid=grid,
        in_specs=in_specs,
        out_specs=pl.BlockSpec((Nb, Ho, Wo, D), lambda n: (n, 0, 0, 0)),
        scratch_shapes=(
            [pltpu.VMEM((Nb, Ho + 2, Wo + 2, Cin), jnp.float32) for _ in range(nph)]   # BN1 phases
            + [pltpu.VMEM((Nb, Ho + 2, Wo + 2, D), jnp.float32) for _ in range(nph)]   # PReLU phases
        ),
        compiler_params=pltpu.CompilerParams(
            dimension_semantics=("parallel",),          # batch images are independent
            vmem_limit_bytes=32 * 1024 * 1024,
        ),
    )(*inputs)

    return jnp.transpose(out, (0, 3, 1, 2))             # NHWC -> NCHW


# ---------------------------- pure-JAX reference ----------------------------
def bottleneck_ir_ref(x, params, stride, eps=1e-5):
    """Reference forward pass.  Mirrors the kernel's MXU precision: conv inputs
    (activations and weights) are rounded to bf16, accumulation stays f32."""
    f32 = jnp.float32

    def r16(t):
        return t.astype(jnp.bfloat16).astype(f32)

    def bn(t, p):
        gamma, beta, mean, var = p
        sc = gamma / jnp.sqrt(var + eps)
        sh = beta - mean * sc
        return t * sc[None, :, None, None] + sh[None, :, None, None]

    def conv(t, w, s, pad):
        return jax.lax.conv_general_dilated(
            r16(t), r16(w), (s, s), [(pad, pad), (pad, pad)],
            dimension_numbers=("NCHW", "OIHW", "NCHW"),
            precision=jax.lax.Precision.HIGHEST)

    Cin = x.shape[1]
    D = params["w1"].shape[0]
    xr = r16(x)

    if Cin == D:
        shortcut = xr[:, :, ::stride, ::stride]                # MaxPool2d(1, stride)
    else:
        shortcut = bn(conv(xr, params["wsc"], stride, 0), params["bnsc"])

    y = bn(xr, params["bn1"])
    y = conv(y, params["w1"], 1, 1)
    a = params["alpha"][None, :, None, None]
    y = jnp.where(y >= 0.0, y, a * y)                          # PReLU
    y = conv(y, params["w2"], stride, 1)
    y = bn(y, params["bn2"])
    return y + shortcut


def _make_params(key, Cin, D):
    keys = jax.random.split(key, 7)

    def bn_params(k, C):
        k1, k2, k3, k4 = jax.random.split(k, 4)
        return (jax.random.uniform(k1, (C,), jnp.float32, 0.5, 1.5),   # gamma
                0.1 * jax.random.normal(k2, (C,), jnp.float32),        # beta
                0.1 * jax.random.normal(k3, (C,), jnp.float32),        # running_mean
                jax.random.uniform(k4, (C,), jnp.float32, 0.5, 1.5))   # running_var

    return {
        "w1": 0.2 * jax.random.normal(keys[0], (D, Cin, 3, 3), jnp.float32),
        "w2": 0.2 * jax.random.normal(keys[1], (D, D, 3, 3), jnp.float32),
        "wsc": 0.2 * jax.random.normal(keys[2], (D, Cin, 1, 1), jnp.float32),
        "alpha": jnp.full((D,), 0.25, jnp.float32),  # PyTorch PReLU default init
        "bn1": bn_params(keys[3], Cin),
        "bn2": bn_params(keys[4], D),
        "bnsc": bn_params(keys[5], D),
    }


if __name__ == "__main__":
    root = jax.random.PRNGKey(0)
    k_p1, k_x1, k_p2, k_x2 = jax.random.split(root, 4)

    # Config 1: in_channel != depth -> Conv1x1 + BN shortcut, stride 2.
    N, Cin, H, W, D, stride = 2, 4, 16, 16, 8, 2
    params1 = _make_params(k_p1, Cin, D)
    x1 = jax.random.normal(k_x1, (N, Cin, H, W), jnp.float32)
    out1 = jax.block_until_ready(bottleneck_ir_pallas(x1, params1, stride))
    ref1 = bottleneck_ir_ref(x1, params1, stride)
    assert out1.shape == ref1.shape == (N, D, 8, 8)
    err1 = float(jnp.max(jnp.abs(out1 - ref1)))
    assert err1 < 2e-3, f"config1 max abs err {err1}"

    # Config 2: in_channel == depth -> MaxPool2d(1, stride) shortcut, stride 1.
    Cin2, D2, stride2 = 8, 8, 1
    params2 = _make_params(k_p2, Cin2, D2)
    x2 = jax.random.normal(k_x2, (N, Cin2, H, W), jnp.float32)
    out2 = jax.block_until_ready(bottleneck_ir_pallas(x2, params2, stride2))
    ref2 = bottleneck_ir_ref(x2, params2, stride2)
    assert out2.shape == ref2.shape == (N, D2, H, W)
    err2 = float(jnp.max(jnp.abs(out2 - ref2)))
    assert err2 < 2e-3, f"config2 max abs err {err2}"

    print("KERNEL_OK")
</pallas_src>

<mosaic_0001>
module attributes {stable_mosaic.version = 11 : i64} {
  func.func @kernel(%arg0: i32, %arg1: memref<2x8x8x4xbf16, #tpu.memory_space<vmem>>, %arg2: memref<2x8x8x4xbf16, #tpu.memory_space<vmem>>, %arg3: memref<2x8x8x4xbf16, #tpu.memory_space<vmem>>, %arg4: memref<2x8x8x4xbf16, #tpu.memory_space<vmem>>, %arg5: memref<36x8xbf16, #tpu.memory_space<vmem>>, %arg6: memref<72x8xbf16, #tpu.memory_space<vmem>>, %arg7: memref<1x8xf32, #tpu.memory_space<vmem>>, %arg8: memref<1x4xf32, #tpu.memory_space<vmem>>, %arg9: memref<1x4xf32, #tpu.memory_space<vmem>>, %arg10: memref<1x8xf32, #tpu.memory_space<vmem>>, %arg11: memref<1x8xf32, #tpu.memory_space<vmem>>, %arg12: memref<4x8xbf16, #tpu.memory_space<vmem>>, %arg13: memref<1x8xf32, #tpu.memory_space<vmem>>, %arg14: memref<1x8xf32, #tpu.memory_space<vmem>>, %arg15: memref<2x8x8x8xf32, #tpu.memory_space<vmem>>, %arg16: memref<2x10x10x4xf32, #tpu.memory_space<vmem>>, %arg17: memref<2x10x10x4xf32, #tpu.memory_space<vmem>>, %arg18: memref<2x10x10x4xf32, #tpu.memory_space<vmem>>, %arg19: memref<2x10x10x4xf32, #tpu.memory_space<vmem>>, %arg20: memref<2x10x10x8xf32, #tpu.memory_space<vmem>>, %arg21: memref<2x10x10x8xf32, #tpu.memory_space<vmem>>, %arg22: memref<2x10x10x8xf32, #tpu.memory_space<vmem>>, %arg23: memref<2x10x10x8xf32, #tpu.memory_space<vmem>>) attributes {dimension_semantics = [#tpu.dimension_semantics<parallel>], iteration_bounds = array<i64: 1>, scalar_prefetch = 0 : i64, scratch_operands = 8 : i64, tpu.core_type = #tpu.core_type<tc>, window_params = [{transform_indices = @transform_0, window_bounds = array<i64: 2, 8, 8, 4>}, {transform_indices = @transform_1, window_bounds = array<i64: 2, 8, 8, 4>}, {transform_indices = @transform_2, window_bounds = array<i64: 2, 8, 8, 4>}, {transform_indices = @transform_3, window_bounds = array<i64: 2, 8, 8, 4>}, {pipeline_mode = #tpu.pipeline_mode<synchronous>, transform_indices = @transform_4, window_bounds = array<i64: 36, 8>}, {pipeline_mode = #tpu.pipeline_mode<synchronous>, transform_indices = @transform_5, window_bounds = array<i64: 72, 8>}, {pipeline_mode = #tpu.pipeline_mode<synchronous>, transform_indices = @transform_6, window_bounds = array<i64: 1, 8>}, {pipeline_mode = #tpu.pipeline_mode<synchronous>, transform_indices = @transform_7, window_bounds = array<i64: 1, 4>}, {pipeline_mode = #tpu.pipeline_mode<synchronous>, transform_indices = @transform_8, window_bounds = array<i64: 1, 4>}, {pipeline_mode = #tpu.pipeline_mode<synchronous>, transform_indices = @transform_9, window_bounds = array<i64: 1, 8>}, {pipeline_mode = #tpu.pipeline_mode<synchronous>, transform_indices = @transform_10, window_bounds = array<i64: 1, 8>}, {pipeline_mode = #tpu.pipeline_mode<synchronous>, transform_indices = @transform_11, window_bounds = array<i64: 4, 8>}, {pipeline_mode = #tpu.pipeline_mode<synchronous>, transform_indices = @transform_12, window_bounds = array<i64: 1, 8>}, {pipeline_mode = #tpu.pipeline_mode<synchronous>, transform_indices = @transform_13, window_bounds = array<i64: 1, 8>}, {transform_indices = @transform_14, window_bounds = array<i64: 2, 8, 8, 8>}]} {
    %c0 = arith.constant 0 : index
    %c0_0 = arith.constant 0 : index
    %0 = vector.load %arg5[%c0, %c0_0] : memref<36x8xbf16, #tpu.memory_space<vmem>>, vector<36x8xbf16>
    %c0_1 = arith.constant 0 : index
    %c0_2 = arith.constant 0 : index
    %1 = vector.load %arg6[%c0_1, %c0_2] : memref<72x8xbf16, #tpu.memory_space<vmem>>, vector<72x8xbf16>
    %c0_3 = arith.constant 0 : index
    %c0_4 = arith.constant 0 : index
    %2 = vector.load %arg7[%c0_3, %c0_4] : memref<1x8xf32, #tpu.memory_space<vmem>>, vector<1x8xf32>
    %c0_5 = arith.constant 0 : index
    %c0_6 = arith.constant 0 : index
    %3 = vector.load %arg8[%c0_5, %c0_6] : memref<1x4xf32, #tpu.memory_space<vmem>>, vector<1x4xf32>
    %c0_7 = arith.constant 0 : index
    %c0_8 = arith.constant 0 : index
    %4 = vector.load %arg9[%c0_7, %c0_8] : memref<1x4xf32, #tpu.memory_space<vmem>>, vector<1x4xf32>
    %c0_9 = arith.constant 0 : index
    %c0_10 = arith.constant 0 : index
    %5 = vector.load %arg10[%c0_9, %c0_10] : memref<1x8xf32, #tpu.memory_space<vmem>>, vector<1x8xf32>
    %c0_11 = arith.constant 0 : index
    %c0_12 = arith.constant 0 : index
    %6 = vector.load %arg11[%c0_11, %c0_12] : memref<1x8xf32, #tpu.memory_space<vmem>>, vector<1x8xf32>
    %cst = arith.constant 0.000000e+00 : f32
    %7 = vector.broadcast %cst : f32 to vector<2x1x10x4xf32>
    %c0_13 = arith.constant 0 : index
    %c0_14 = arith.constant 0 : index
    %c0_15 = arith.constant 0 : index
    %c0_16 = arith.constant 0 : index
    %8 = vector.load %arg16[%c0_13, %c0_14, %c0_15, %c0_16] : memref<2x10x10x4xf32, #tpu.memory_space<vmem>>, vector<2x1x10x4xf32>
    tpu.vector_store %arg16[%c0_13, %c0_14, %c0_15, %c0_16], %7 {strides = array<i32>} : memref<2x10x10x4xf32, #tpu.memory_space<vmem>>, vector<2x1x10x4xf32>,
    %cst_17 = arith.constant 0.000000e+00 : f32
    %9 = vector.broadcast %cst_17 : f32 to vector<2x1x10x8xf32>
    %c0_18 = arith.constant 0 : index
    %c0_19 = arith.constant 0 : index
    %c0_20 = arith.constant 0 : index
    %c0_21 = arith.constant 0 : index
    %10 = vector.load %arg20[%c0_18, %c0_19, %c0_20, %c0_21] : memref<2x10x10x8xf32, #tpu.memory_space<vmem>>, vector<2x1x10x8xf32>
    tpu.vector_store %arg20[%c0_18, %c0_19, %c0_20, %c0_21], %9 {strides = array<i32>} : memref<2x10x10x8xf32, #tpu.memory_space<vmem>>, vector<2x1x10x8xf32>,
    %cst_22 = arith.constant 0.000000e+00 : f32
    %11 = vector.broadcast %cst_22 : f32 to vector<2x10x1x4xf32>
    %c0_23 = arith.constant 0 : index
    %c0_24 = arith.constant 0 : index
    %c0_25 = arith.constant 0 : index
    %c0_26 = arith.constant 0 : index
    %12 = vector.load %arg16[%c0_23, %c0_24, %c0_25, %c0_26] : memref<2x10x10x4xf32, #tpu.memory_space<vmem>>, vector<2x10x1x4xf32>
    tpu.vector_store %arg16[%c0_23, %c0_24, %c0_25, %c0_26], %11 {strides = array<i32>} : memref<2x10x10x4xf32, #tpu.memory_space<vmem>>, vector<2x10x1x4xf32>,
    %cst_27 = arith.constant 0.000000e+00 : f32
    %13 = vector.broadcast %cst_27 : f32 to vector<2x10x1x8xf32>
    %c0_28 = arith.constant 0 : index
    %c0_29 = arith.constant 0 : index
    %c0_30 = arith.constant 0 : index
    %c0_31 = arith.constant 0 : index
    %14 = vector.load %arg20[%c0_28, %c0_29, %c0_30, %c0_31] : memref<2x10x10x8xf32, #tpu.memory_space<vmem>>, vector<2x10x1x8xf32>
    tpu.vector_store %arg20[%c0_28, %c0_29, %c0_30, %c0_31], %13 {strides = array<i32>} : memref<2x10x10x8xf32, #tpu.memory_space<vmem>>, vector<2x10x1x8xf32>,
    %cst_32 = arith.constant 0.000000e+00 : f32
    %15 = vector.broadcast %cst_32 : f32 to vector<2x1x10x4xf32>
    %c0_33 = arith.constant 0 : index
    %c0_34 = arith.constant 0 : index
    %c0_35 = arith.constant 0 : index
    %c0_36 = arith.constant 0 : index
    %16 = vector.load %arg17[%c0_33, %c0_34, %c0_35, %c0_36] : memref<2x10x10x4xf32, #tpu.memory_space<vmem>>, vector<2x1x10x4xf32>
    tpu.vector_store %arg17[%c0_33, %c0_34, %c0_35, %c0_36], %15 {strides = array<i32>} : memref<2x10x10x4xf32, #tpu.memory_space<vmem>>, vector<2x1x10x4xf32>,
    %cst_37 = arith.constant 0.000000e+00 : f32
    %17 = vector.broadcast %cst_37 : f32 to vector<2x1x10x8xf32>
    %c0_38 = arith.constant 0 : index
    %c0_39 = arith.constant 0 : index
    %c0_40 = arith.constant 0 : index
    %c0_41 = arith.constant 0 : index
    %18 = vector.load %arg21[%c0_38, %c0_39, %c0_40, %c0_41] : memref<2x10x10x8xf32, #tpu.memory_space<vmem>>, vector<2x1x10x8xf32>
    tpu.vector_store %arg21[%c0_38, %c0_39, %c0_40, %c0_41], %17 {strides = array<i32>} : memref<2x10x10x8xf32, #tpu.memory_space<vmem>>, vector<2x1x10x8xf32>,
    %cst_42 = arith.constant 0.000000e+00 : f32
    %19 = vector.broadcast %cst_42 : f32 to vector<2x10x1x4xf32>
    %c0_43 = arith.constant 0 : index
    %c0_44 = arith.constant 0 : index
    %c8 = arith.constant 8 : index
    %c0_45 = arith.constant 0 : index
    %20 = vector.load %arg17[%c0_43, %c0_44, %c8, %c0_45] : memref<2x10x10x4xf32, #tpu.memory_space<vmem>>, vector<2x10x1x4xf32>
    tpu.vector_store %arg17[%c0_43, %c0_44, %c8, %c0_45], %19 {strides = array<i32>} : memref<2x10x10x4xf32, #tpu.memory_space<vmem>>, vector<2x10x1x4xf32>,
    %cst_46 = arith.constant 0.000000e+00 : f32
    %21 = vector.broadcast %cst_46 : f32 to vector<2x10x1x8xf32>
    %c0_47 = arith.constant 0 : index
    %c0_48 = arith.constant 0 : index
    %c8_49 = arith.constant 8 : index
    %c0_50 = arith.constant 0 : index
    %22 = vector.load %arg21[%c0_47, %c0_48, %c8_49, %c0_50] : memref<2x10x10x8xf32, #tpu.memory_space<vmem>>, vector<2x10x1x8xf32>
    tpu.vector_store %arg21[%c0_47, %c0_48, %c8_49, %c0_50], %21 {strides = array<i32>} : memref<2x10x10x8xf32, #tpu.memory_space<vmem>>, vector<2x10x1x8xf32>,
    %cst_51 = arith.constant 0.000000e+00 : f32
    %23 = vector.broadcast %cst_51 : f32 to vector<2x1x10x4xf32>
    %c0_52 = arith.constant 0 : index
    %c8_53 = arith.constant 8 : index
    %c0_54 = arith.constant 0 : index
    %c0_55 = arith.constant 0 : index
    %24 = vector.load %arg18[%c0_52, %c8_53, %c0_54, %c0_55] : memref<2x10x10x4xf32, #tpu.memory_space<vmem>>, vector<2x1x10x4xf32>
    tpu.vector_store %arg18[%c0_52, %c8_53, %c0_54, %c0_55], %23 {strides = array<i32>} : memref<2x10x10x4xf32, #tpu.memory_space<vmem>>, vector<2x1x10x4xf32>,
    %cst_56 = arith.constant 0.000000e+00 : f32
    %25 = vector.broadcast %cst_56 : f32 to vector<2x1x10x8xf32>
    %c0_57 = arith.constant 0 : index
    %c8_58 = arith.constant 8 : index
    %c0_59 = arith.constant 0 : index
    %c0_60 = arith.constant 0 : index
    %26 = vector.load %arg22[%c0_57, %c8_58, %c0_59, %c0_60] : memref<2x10x10x8xf32, #tpu.memory_space<vmem>>, vector<2x1x10x8xf32>
    tpu.vector_store %arg22[%c0_57, %c8_58, %c0_59, %c0_60], %25 {strides = array<i32>} : memref<2x10x10x8xf32, #tpu.memory_space<vmem>>, vector<2x1x10x8xf32>,
    %cst_61 = arith.constant 0.000000e+00 : f32
    %27 = vector.broadcast %cst_61 : f32 to vector<2x10x1x4xf32>
    %c0_62 = arith.constant 0 : index
    %c0_63 = arith.constant 0 : index
    %c0_64 = arith.constant 0 : index
    %c0_65 = arith.constant 0 : index
    %28 = vector.load %arg18[%c0_62, %c0_63, %c0_64, %c0_65] : memref<2x10x10x4xf32, #tpu.memory_space<vmem>>, vector<2x10x1x4xf32>
    tpu.vector_store %arg18[%c0_62, %c0_63, %c0_64, %c0_65], %27 {strides = array<i32>} : memref<2x10x10x4xf32, #tpu.memory_space<vmem>>, vector<2x10x1x4xf32>,
    %cst_66 = arith.constant 0.000000e+00 : f32
    %29 = vector.broadcast %cst_66 : f32 to vector<2x10x1x8xf32>
    %c0_67 = arith.constant 0 : index
    %c0_68 = arith.constant 0 : index
    %c0_69 = arith.constant 0 : index
    %c0_70 = arith.constant 0 : index
    %30 = vector.load %arg22[%c0_67, %c0_68, %c0_69, %c0_70] : memref<2x10x10x8xf32, #tpu.memory_space<vmem>>, vector<2x10x1x8xf32>
    tpu.vector_store %arg22[%c0_67, %c0_68, %c0_69, %c0_70], %29 {strides = array<i32>} : memref<2x10x10x8xf32, #tpu.memory_space<vmem>>, vector<2x10x1x8xf32>,
    %cst_71 = arith.constant 0.000000e+00 : f32
    %31 = vector.broadcast %cst_71 : f32 to vector<2x1x10x4xf32>
    %c0_72 = arith.constant 0 : index
    %c8_73 = arith.constant 8 : index
    %c0_74 = arith.constant 0 : index
    %c0_75 = arith.constant 0 : index
    %32 = vector.load %arg19[%c0_72, %c8_73, %c0_74, %c0_75] : memref<2x10x10x4xf32, #tpu.memory_space<vmem>>, vector<2x1x10x4xf32>
    tpu.vector_store %arg19[%c0_72, %c8_73, %c0_74, %c0_75], %31 {strides = array<i32>} : memref<2x10x10x4xf32, #tpu.memory_space<vmem>>, vector<2x1x10x4xf32>,
    %cst_76 = arith.constant 0.000000e+00 : f32
    %33 = vector.broadcast %cst_76 : f32 to vector<2x1x10x8xf32>
    %c0_77 = arith.constant 0 : index
    %c8_78 = arith.constant 8 : index
    %c0_79 = arith.constant 0 : index
    %c0_80 = arith.constant 0 : index
    %34 = vector.load %arg23[%c0_77, %c8_78, %c0_79, %c0_80] : memref<2x10x10x8xf32, #tpu.memory_space<vmem>>, vector<2x1x10x8xf32>
    tpu.vector_store %arg23[%c0_77, %c8_78, %c0_79, %c0_80], %33 {strides = array<i32>} : memref<2x10x10x8xf32, #tpu.memory_space<vmem>>, vector<2x1x10x8xf32>,
    %cst_81 = arith.constant 0.000000e+00 : f32
    %35 = vector.broadcast %cst_81 : f32 to vector<2x10x1x4xf32>
    %c0_82 = arith.constant 0 : index
    %c0_83 = arith.constant 0 : index
    %c8_84 = arith.constant 8 : index
    %c0_85 = arith.constant 0 : index
    %36 = vector.load %arg19[%c0_82, %c0_83, %c8_84, %c0_85] : memref<2x10x10x4xf32, #tpu.memory_space<vmem>>, vector<2x10x1x4xf32>
    tpu.vector_store %arg19[%c0_82, %c0_83, %c8_84, %c0_85], %35 {strides = array<i32>} : memref<2x10x10x4xf32, #tpu.memory_space<vmem>>, vector<2x10x1x4xf32>,
    %cst_86 = arith.constant 0.000000e+00 : f32
    %37 = vector.broadcast %cst_86 : f32 to vector<2x10x1x8xf32>
    %c0_87 = arith.constant 0 : index
    %c0_88 = arith.constant 0 : index
    %c8_89 = arith.constant 8 : index
    %c0_90 = arith.constant 0 : index
    %38 = vector.load %arg23[%c0_87, %c0_88, %c8_89, %c0_90] : memref<2x10x10x8xf32, #tpu.memory_space<vmem>>, vector<2x10x1x8xf32>
    tpu.vector_store %arg23[%c0_87, %c0_88, %c8_89, %c0_90], %37 {strides = array<i32>} : memref<2x10x10x8xf32, #tpu.memory_space<vmem>>, vector<2x10x1x8xf32>,
    %c0_91 = arith.constant 0 : index
    %c0_92 = arith.constant 0 : index
    %c0_93 = arith.constant 0 : index
    %c0_94 = arith.constant 0 : index
    %39 = vector.load %arg1[%c0_91, %c0_92, %c0_93, %c0_94] : memref<2x8x8x4xbf16, #tpu.memory_space<vmem>>, vector<2x8x8x4xbf16>
    %40 = arith.extf %39 : vector<2x8x8x4xbf16> to vector<2x8x8x4xf32>
    %41 = vector.shape_cast %3 : vector<1x4xf32> to vector<1x1x1x4xf32>
    %42 = vector.broadcast %41 : vector<1x1x1x4xf32> to vector<2x8x8x4xf32>
    %43 = arith.mulf %40, %42 : vector<2x8x8x4xf32>
    %44 = vector.shape_cast %4 : vector<1x4xf32> to vector<1x1x1x4xf32>
    %45 = vector.broadcast %44 : vector<1x1x1x4xf32> to vector<2x8x8x4xf32>
    %46 = arith.addf %43, %45 : vector<2x8x8x4xf32>
    %c0_95 = arith.constant 0 : index
    %c0_96 = arith.constant 0 : index
    %c0_97 = arith.constant 0 : index
    %c0_98 = arith.constant 0 : index
    %47 = vector.load %arg19[%c0_95, %c0_96, %c0_97, %c0_98] : memref<2x10x10x4xf32, #tpu.memory_space<vmem>>, vector<2x8x8x4xf32>
    tpu.vector_store %arg19[%c0_95, %c0_96, %c0_97, %c0_98], %46 {strides = array<i32>} : memref<2x10x10x4xf32, #tpu.memory_space<vmem>>, vector<2x8x8x4xf32>,
    %c0_99 = arith.constant 0 : index
    %c0_100 = arith.constant 0 : index
    %c0_101 = arith.constant 0 : index
    %c0_102 = arith.constant 0 : index
    %48 = vector.load %arg2[%c0_99, %c0_100, %c0_101, %c0_102] : memref<2x8x8x4xbf16, #tpu.memory_space<vmem>>, vector<2x8x8x4xbf16>
    %49 = arith.extf %48 : vector<2x8x8x4xbf16> to vector<2x8x8x4xf32>
    %50 = vector.shape_cast %3 : vector<1x4xf32> to vector<1x1x1x4xf32>
    %51 = vector.broadcast %50 : vector<1x1x1x4xf32> to vector<2x8x8x4xf32>
    %52 = arith.mulf %49, %51 : vector<2x8x8x4xf32>
    %53 = vector.shape_cast %4 : vector<1x4xf32> to vector<1x1x1x4xf32>
    %54 = vector.broadcast %53 : vector<1x1x1x4xf32> to vector<2x8x8x4xf32>
    %55 = arith.addf %52, %54 : vector<2x8x8x4xf32>
    %c0_103 = arith.constant 0 : index
    %c0_104 = arith.constant 0 : index
    %c1 = arith.constant 1 : index
    %c0_105 = arith.constant 0 : index
    %56 = vector.load %arg18[%c0_103, %c0_104, %c1, %c0_105] : memref<2x10x10x4xf32, #tpu.memory_space<vmem>>, vector<2x8x8x4xf32>
    tpu.vector_store %arg18[%c0_103, %c0_104, %c1, %c0_105], %55 {strides = array<i32>} : memref<2x10x10x4xf32, #tpu.memory_space<vmem>>, vector<2x8x8x4xf32>,
    %c0_106 = arith.constant 0 : index
    %c0_107 = arith.constant 0 : index
    %c0_108 = arith.constant 0 : index
    %c0_109 = arith.constant 0 : index
    %57 = vector.load %arg3[%c0_106, %c0_107, %c0_108, %c0_109] : memref<2x8x8x4xbf16, #tpu.memory_space<vmem>>, vector<2x8x8x4xbf16>
    %58 = arith.extf %57 : vector<2x8x8x4xbf16> to vector<2x8x8x4xf32>
    %59 = vector.shape_cast %3 : vector<1x4xf32> to vector<1x1x1x4xf32>
    %60 = vector.broadcast %59 : vector<1x1x1x4xf32> to vector<2x8x8x4xf32>
    %61 = arith.mulf %58, %60 : vector<2x8x8x4xf32>
    %62 = vector.shape_cast %4 : vector<1x4xf32> to vector<1x1x1x4xf32>
    %63 = vector.broadcast %62 : vector<1x1x1x4xf32> to vector<2x8x8x4xf32>
    %64 = arith.addf %61, %63 : vector<2x8x8x4xf32>
    %c0_110 = arith.constant 0 : index
    %c1_111 = arith.constant 1 : index
    %c0_112 = arith.constant 0 : index
    %c0_113 = arith.constant 0 : index
    %65 = vector.load %arg17[%c0_110, %c1_111, %c0_112, %c0_113] : memref<2x10x10x4xf32, #tpu.memory_space<vmem>>, vector<2x8x8x4xf32>
    tpu.vector_store %arg17[%c0_110, %c1_111, %c0_112, %c0_113], %64 {strides = array<i32>} : memref<2x10x10x4xf32, #tpu.memory_space<vmem>>, vector<2x8x8x4xf32>,
    %c0_114 = arith.constant 0 : index
    %c0_115 = arith.constant 0 : index
    %c0_116 = arith.constant 0 : index
    %c0_117 = arith.constant 0 : index
    %66 = vector.load %arg4[%c0_114, %c0_115, %c0_116, %c0_117] : memref<2x8x8x4xbf16, #tpu.memory_space<vmem>>, vector<2x8x8x4xbf16>
    %67 = arith.extf %66 : vector<2x8x8x4xbf16> to vector<2x8x8x4xf32>
    %68 = vector.shape_cast %3 : vector<1x4xf32> to vector<1x1x1x4xf32>
    %69 = vector.broadcast %68 : vector<1x1x1x4xf32> to vector<2x8x8x4xf32>
    %70 = arith.mulf %67, %69 : vector<2x8x8x4xf32>
    %71 = vector.shape_cast %4 : vector<1x4xf32> to vector<1x1x1x4xf32>
    %72 = vector.broadcast %71 : vector<1x1x1x4xf32> to vector<2x8x8x4xf32>
    %73 = arith.addf %70, %72 : vector<2x8x8x4xf32>
    %c0_118 = arith.constant 0 : index
    %c1_119 = arith.constant 1 : index
    %c1_120 = arith.constant 1 : index
    %c0_121 = arith.constant 0 : index
    %74 = vector.load %arg16[%c0_118, %c1_119, %c1_120, %c0_121] : memref<2x10x10x4xf32, #tpu.memory_space<vmem>>, vector<2x8x8x4xf32>
    tpu.vector_store %arg16[%c0_118, %c1_119, %c1_120, %c0_121], %73 {strides = array<i32>} : memref<2x10x10x4xf32, #tpu.memory_space<vmem>>, vector<2x8x8x4xf32>,
    %c0_122 = arith.constant 0 : index
    %c0_123 = arith.constant 0 : index
    %c0_124 = arith.constant 0 : index
    %c0_125 = arith.constant 0 : index
    %75 = vector.load %arg16[%c0_122, %c0_123, %c0_124, %c0_125] : memref<2x10x10x4xf32, #tpu.memory_space<vmem>>, vector<2x8x8x4xf32>
    %76 = vector.shape_cast %75 : vector<2x8x8x4xf32> to vector<128x4xf32>
    %c0_126 = arith.constant 0 : index
    %c0_127 = arith.constant 0 : index
    %c0_128 = arith.constant 0 : index
    %c0_129 = arith.constant 0 : index
    %77 = vector.load %arg17[%c0_126, %c0_127, %c0_128, %c0_129] : memref<2x10x10x4xf32, #tpu.memory_space<vmem>>, vector<2x8x8x4xf32>
    %78 = vector.shape_cast %77 : vector<2x8x8x4xf32> to vector<128x4xf32>
    %c0_130 = arith.constant 0 : index
    %c0_131 = arith.constant 0 : index
    %c1_132 = arith.constant 1 : index
    %c0_133 = arith.constant 0 : index
    %79 = vector.load %arg16[%c0_130, %c0_131, %c1_132, %c0_133] : memref<2x10x10x4xf32, #tpu.memory_space<vmem>>, vector<2x8x8x4xf32>
    %80 = vector.shape_cast %79 : vector<2x8x8x4xf32> to vector<128x4xf32>
    %c0_134 = arith.constant 0 : index
    %c0_135 = arith.constant 0 : index
    %c0_136 = arith.constant 0 : index
    %c0_137 = arith.constant 0 : index
    %81 = vector.load %arg18[%c0_134, %c0_135, %c0_136, %c0_137] : memref<2x10x10x4xf32, #tpu.memory_space<vmem>>, vector<2x8x8x4xf32>
    %82 = vector.shape_cast %81 : vector<2x8x8x4xf32> to vector<128x4xf32>
    %c0_138 = arith.constant 0 : index
    %c0_139 = arith.constant 0 : index
    %c0_140 = arith.constant 0 : index
    %c0_141 = arith.constant 0 : index
    %83 = vector.load %arg19[%c0_138, %c0_139, %c0_140, %c0_141] : memref<2x10x10x4xf32, #tpu.memory_space<vmem>>, vector<2x8x8x4xf32>
    %84 = vector.shape_cast %83 : vector<2x8x8x4xf32> to vector<128x4xf32>
    %c0_142 = arith.constant 0 : index
    %c0_143 = arith.constant 0 : index
    %c1_144 = arith.constant 1 : index
    %c0_145 = arith.constant 0 : index
    %85 = vector.load %arg18[%c0_142, %c0_143, %c1_144, %c0_145] : memref<2x10x10x4xf32, #tpu.memory_space<vmem>>, vector<2x8x8x4xf32>
    %86 = vector.shape_cast %85 : vector<2x8x8x4xf32> to vector<128x4xf32>
    %c0_146 = arith.constant 0 : index
    %c1_147 = arith.constant 1 : index
    %c0_148 = arith.constant 0 : index
    %c0_149 = arith.constant 0 : index
    %87 = vector.load %arg16[%c0_146, %c1_147, %c0_148, %c0_149] : memref<2x10x10x4xf32, #tpu.memory_space<vmem>>, vector<2x8x8x4xf32>
    %88 = vector.shape_cast %87 : vector<2x8x8x4xf32> to vector<128x4xf32>
    %c0_150 = arith.constant 0 : index
    %c1_151 = arith.constant 1 : index
    %c0_152 = arith.constant 0 : index
    %c0_153 = arith.constant 0 : index
    %89 = vector.load %arg17[%c0_150, %c1_151, %c0_152, %c0_153] : memref<2x10x10x4xf32, #tpu.memory_space<vmem>>, vector<2x8x8x4xf32>
    %90 = vector.shape_cast %89 : vector<2x8x8x4xf32> to vector<128x4xf32>
    %c0_154 = arith.constant 0 : index
    %c1_155 = arith.constant 1 : index
    %c1_156 = arith.constant 1 : index
    %c0_157 = arith.constant 0 : index
    %91 = vector.load %arg16[%c0_154, %c1_155, %c1_156, %c0_157] : memref<2x10x10x4xf32, #tpu.memory_space<vmem>>, vector<2x8x8x4xf32>
    %92 = vector.shape_cast %91 : vector<2x8x8x4xf32> to vector<128x4xf32>
    %93 = tpu.concatenate %76, %78, %80, %82, %84, %86, %88, %90, %92 in 1 : vector<128x4xf32>, vector<128x4xf32>, vector<128x4xf32>, vector<128x4xf32>, vector<128x4xf32>, vector<128x4xf32>, vector<128x4xf32>, vector<128x4xf32>, vector<128x4xf32> -> vector<128x36xf32>
    %94 = arith.truncf %93 : vector<128x36xf32> to vector<128x36xbf16>
    %cst_158 = arith.constant dense<0.000000e+00> : vector<128x8xf32>
    %95 = tpu.matmul %94, %0, %cst_158 {dimension_numbers = #tpu.dot_dimension_numbers<[1], [0], [0], [1], [0, 0, 1, 1], [], []>} : vector<128x36xbf16>, vector<36x8xbf16>, vector<128x8xf32> -> vector<128x8xf32>
    %cst_159 = arith.constant 0.000000e+00 : f32
    %96 = vector.broadcast %cst_159 : f32 to vector<128x8xf32>
    %97 = arith.cmpf oge, %95, %96 : vector<128x8xf32>
    %98 = vector.broadcast %2 : vector<1x8xf32> to vector<128x8xf32>
    %99 = arith.mulf %95, %98 : vector<128x8xf32>
    %100 = arith.select %97, %95, %99 : vector<128x8xi1>, vector<128x8xf32>
    %101 = vector.shape_cast %100 : vector<128x8xf32> to vector<2x8x8x8xf32>
    %c0_160 = arith.constant 0 : index
    %c0_161 = arith.constant 0 : index
    %c0_162 = arith.constant 0 : index
    %c0_163 = arith.constant 0 : index
    %102 = vector.load %arg23[%c0_160, %c0_161, %c0_162, %c0_163] : memref<2x10x10x8xf32, #tpu.memory_space<vmem>>, vector<2x8x8x8xf32>
    tpu.vector_store %arg23[%c0_160, %c0_161, %c0_162, %c0_163], %101 {strides = array<i32>} : memref<2x10x10x8xf32, #tpu.memory_space<vmem>>, vector<2x8x8x8xf32>,
    %c0_164 = arith.constant 0 : index
    %c0_165 = arith.constant 0 : index
    %c0_166 = arith.constant 0 : index
    %c0_167 = arith.constant 0 : index
    %103 = vector.load %arg17[%c0_164, %c0_165, %c0_166, %c0_167] : memref<2x10x10x4xf32, #tpu.memory_space<vmem>>, vector<2x8x8x4xf32>
    %104 = vector.shape_cast %103 : vector<2x8x8x4xf32> to vector<128x4xf32>
    %c0_168 = arith.constant 0 : index
    %c0_169 = arith.constant 0 : index
    %c1_170 = arith.constant 1 : index
    %c0_171 = arith.constant 0 : index
    %105 = vector.load %arg16[%c0_168, %c0_169, %c1_170, %c0_171] : memref<2x10x10x4xf32, #tpu.memory_space<vmem>>, vector<2x8x8x4xf32>
    %106 = vector.shape_cast %105 : vector<2x8x8x4xf32> to vector<128x4xf32>
    %c0_172 = arith.constant 0 : index
    %c0_173 = arith.constant 0 : index
    %c1_174 = arith.constant 1 : index
    %c0_175 = arith.constant 0 : index
    %107 = vector.load %arg17[%c0_172, %c0_173, %c1_174, %c0_175] : memref<2x10x10x4xf32, #tpu.memory_space<vmem>>, vector<2x8x8x4xf32>
    %108 = vector.shape_cast %107 : vector<2x8x8x4xf32> to vector<128x4xf32>
    %c0_176 = arith.constant 0 : index
    %c0_177 = arith.constant 0 : index
    %c0_178 = arith.constant 0 : index
    %c0_179 = arith.constant 0 : index
    %109 = vector.load %arg19[%c0_176, %c0_177, %c0_178, %c0_179] : memref<2x10x10x4xf32, #tpu.memory_space<vmem>>, vector<2x8x8x4xf32>
    %110 = vector.shape_cast %109 : vector<2x8x8x4xf32> to vector<128x4xf32>
    %c0_180 = arith.constant 0 : index
    %c0_181 = arith.constant 0 : index
    %c1_182 = arith.constant 1 : index
    %c0_183 = arith.constant 0 : index
    %111 = vector.load %arg18[%c0_180, %c0_181, %c1_182, %c0_183] : memref<2x10x10x4xf32, #tpu.memory_space<vmem>>, vector<2x8x8x4xf32>
    %112 = vector.shape_cast %111 : vector<2x8x8x4xf32> to vector<128x4xf32>
    %c0_184 = arith.constant 0 : index
    %c0_185 = arith.constant 0 : index
    %c1_186 = arith.constant 1 : index
    %c0_187 = arith.constant 0 : index
    %113 = vector.load %arg19[%c0_184, %c0_185, %c1_186, %c0_187] : memref<2x10x10x4xf32, #tpu.memory_space<vmem>>, vector<2x8x8x4xf32>
    %114 = vector.shape_cast %113 : vector<2x8x8x4xf32> to vector<128x4xf32>
    %c0_188 = arith.constant 0 : index
    %c1_189 = arith.constant 1 : index
    %c0_190 = arith.constant 0 : index
    %c0_191 = arith.constant 0 : index
    %115 = vector.load %arg17[%c0_188, %c1_189, %c0_190, %c0_191] : memref<2x10x10x4xf32, #tpu.memory_space<vmem>>, vector<2x8x8x4xf32>
    %116 = vector.shape_cast %115 : vector<2x8x8x4xf32> to vector<128x4xf32>
    %c0_192 = arith.constant 0 : index
    %c1_193 = arith.constant 1 : index
    %c1_194 = arith.constant 1 : index
    %c0_195 = arith.constant 0 : index
    %117 = vector.load %arg16[%c0_192, %c1_193, %c1_194, %c0_195] : memref<2x10x10x4xf32, #tpu.memory_space<vmem>>, vector<2x8x8x4xf32>
    %118 = vector.shape_cast %117 : vector<2x8x8x4xf32> to vector<128x4xf32>
    %c0_196 = arith.constant 0 : index
    %c1_197 = arith.constant 1 : index
    %c1_198 = arith.constant 1 : index
    %c0_199 = arith.constant 0 : index
    %119 = vector.load %arg17[%c0_196, %c1_197, %c1_198, %c0_199] : memref<2x10x10x4xf32, #tpu.memory_space<vmem>>, vector<2x8x8x4xf32>
    %120 = vector.shape_cast %119 : vector<2x8x8x4xf32> to vector<128x4xf32>
    %121 = tpu.concatenate %104, %106, %108, %110, %112, %114, %116, %118, %120 in 1 : vector<128x4xf32>, vector<128x4xf32>, vector<128x4xf32>, vector<128x4xf32>, vector<128x4xf32>, vector<128x4xf32>, vector<128x4xf32>, vector<128x4xf32>, vector<128x4xf32> -> vector<128x36xf32>
    %122 = arith.truncf %121 : vector<128x36xf32> to vector<128x36xbf16>
    %cst_200 = arith.constant dense<0.000000e+00> : vector<128x8xf32>
    %123 = tpu.matmul %122, %0, %cst_200 {dimension_numbers = #tpu.dot_dimension_numbers<[1], [0], [0], [1], [0, 0, 1, 1], [], []>} : vector<128x36xbf16>, vector<36x8xbf16>, vector<128x8xf32> -> vector<128x8xf32>
    %cst_201 = arith.constant 0.000000e+00 : f32
    %124 = vector.broadcast %cst_201 : f32 to vector<128x8xf32>
    %125 = arith.cmpf oge, %123, %124 : vector<128x8xf32>
    %126 = vector.broadcast %2 : vector<1x8xf32> to vector<128x8xf32>
    %127 = arith.mulf %123, %126 : vector<128x8xf32>
    %128 = arith.select %125, %123, %127 : vector<128x8xi1>, vector<128x8xf32>
    %129 = vector.shape_cast %128 : vector<128x8xf32> to vector<2x8x8x8xf32>
    %c0_202 = arith.constant 0 : index
    %c0_203 = arith.constant 0 : index
    %c1_204 = arith.constant 1 : index
    %c0_205 = arith.constant 0 : index
    %130 = vector.load %arg22[%c0_202, %c0_203, %c1_204, %c0_205] : memref<2x10x10x8xf32, #tpu.memory_space<vmem>>, vector<2x8x8x8xf32>
    tpu.vector_store %arg22[%c0_202, %c0_203, %c1_204, %c0_205], %129 {strides = array<i32>} : memref<2x10x10x8xf32, #tpu.memory_space<vmem>>, vector<2x8x8x8xf32>,
    %c0_206 = arith.constant 0 : index
    %c0_207 = arith.constant 0 : index
    %c0_208 = arith.constant 0 : index
    %c0_209 = arith.constant 0 : index
    %131 = vector.load %arg18[%c0_206, %c0_207, %c0_208, %c0_209] : memref<2x10x10x4xf32, #tpu.memory_space<vmem>>, vector<2x8x8x4xf32>
    %132 = vector.shape_cast %131 : vector<2x8x8x4xf32> to vector<128x4xf32>
    %c0_210 = arith.constant 0 : index
    %c0_211 = arith.constant 0 : index
    %c0_212 = arith.constant 0 : index
    %c0_213 = arith.constant 0 : index
    %133 = vector.load %arg19[%c0_210, %c0_211, %c0_212, %c0_213] : memref<2x10x10x4xf32, #tpu.memory_space<vmem>>, vector<2x8x8x4xf32>
    %134 = vector.shape_cast %133 : vector<2x8x8x4xf32> to vector<128x4xf32>
    %c0_214 = arith.constant 0 : index
    %c0_215 = arith.constant 0 : index
    %c1_216 = arith.constant 1 : index
    %c0_217 = arith.constant 0 : index
    %135 = vector.load %arg18[%c0_214, %c0_215, %c1_216, %c0_217] : memref<2x10x10x4xf32, #tpu.memory_space<vmem>>, vector<2x8x8x4xf32>
    %136 = vector.shape_cast %135 : vector<2x8x8x4xf32> to vector<128x4xf32>
    %c0_218 = arith.constant 0 : index
    %c1_219 = arith.constant 1 : index
    %c0_220 = arith.constant 0 : index
    %c0_221 = arith.constant 0 : index
    %137 = vector.load %arg16[%c0_218, %c1_219, %c0_220, %c0_221] : memref<2x10x10x4xf32, #tpu.memory_space<vmem>>, vector<2x8x8x4xf32>
    %138 = vector.shape_cast %137 : vector<2x8x8x4xf32> to vector<128x4xf32>
    %c0_222 = arith.constant 0 : index
    %c1_223 = arith.constant 1 : index
    %c0_224 = arith.constant 0 : index
    %c0_225 = arith.constant 0 : index
    %139 = vector.load %arg17[%c0_222, %c1_223, %c0_224, %c0_225] : memref<2x10x10x4xf32, #tpu.memory_space<vmem>>, vector<2x8x8x4xf32>
    %140 = vector.shape_cast %139 : vector<2x8x8x4xf32> to vector<128x4xf32>
    %c0_226 = arith.constant 0 : index
    %c1_227 = arith.constant 1 : index
    %c1_228 = arith.constant 1 : index
    %c0_229 = arith.constant 0 : index
    %141 = vector.load %arg16[%c0_226, %c1_227, %c1_228, %c0_229] : memref<2x10x10x4xf32, #tpu.memory_space<vmem>>, vector<2x8x8x4xf32>
    %142 = vector.shape_cast %141 : vector<2x8x8x4xf32> to vector<128x4xf32>
    %c0_230 = arith.constant 0 : index
    %c1_231 = arith.constant 1 : index
    %c0_232 = arith.constant 0 : index
    %c0_233 = arith.constant 0 : index
    %143 = vector.load %arg18[%c0_230, %c1_231, %c0_232, %c0_233] : memref<2x10x10x4xf32, #tpu.memory_space<vmem>>, vector<2x8x8x4xf32>
    %144 = vector.shape_cast %143 : vector<2x8x8x4xf32> to vector<128x4xf32>
    %c0_234 = arith.constant 0 : index
    %c1_235 = arith.constant 1 : index
    %c0_236 = arith.constant 0 : index
    %c0_237 = arith.constant 0 : index
    %145 = vector.load %arg19[%c0_234, %c1_235, %c0_236, %c0_237] : memref<2x10x10x4xf32, #tpu.memory_space<vmem>>, vector<2x8x8x4xf32>
    %146 = vector.shape_cast %145 : vector<2x8x8x4xf32> to vector<128x4xf32>
    %c0_238 = arith.constant 0 : index
    %c1_239 = arith.constant 1 : index
    %c1_240 = arith.constant 1 : index
    %c0_241 = arith.constant 0 : index
    %147 = vector.load %arg18[%c0_238, %c1_239, %c1_240, %c0_241] : memref<2x10x10x4xf32, #tpu.memory_space<vmem>>, vector<2x8x8x4xf32>
    %148 = vector.shape_cast %147 : vector<2x8x8x4xf32> to vector<128x4xf32>
    %149 = tpu.concatenate %132, %134, %136, %138, %140, %142, %144, %146, %148 in 1 : vector<128x4xf32>, vector<128x4xf32>, vector<128x4xf32>, vector<128x4xf32>, vector<128x4xf32>, vector<128x4xf32>, vector<128x4xf32>, vector<128x4xf32>, vector<128x4xf32> -> vector<128x36xf32>
    %150 = arith.truncf %149 : vector<128x36xf32> to vector<128x36xbf16>
    %cst_242 = arith.constant dense<0.000000e+00> : vector<128x8xf32>
    %151 = tpu.matmul %150, %0, %cst_242 {dimension_numbers = #tpu.dot_dimension_numbers<[1], [0], [0], [1], [0, 0, 1, 1], [], []>} : vector<128x36xbf16>, vector<36x8xbf16>, vector<128x8xf32> -> vector<128x8xf32>
    %cst_243 = arith.constant 0.000000e+00 : f32
    %152 = vector.broadcast %cst_243 : f32 to vector<128x8xf32>
    %153 = arith.cmpf oge, %151, %152 : vector<128x8xf32>
    %154 = vector.broadcast %2 : vector<1x8xf32> to vector<128x8xf32>
    %155 = arith.mulf %151, %154 : vector<128x8xf32>
    %156 = arith.select %153, %151, %155 : vector<128x8xi1>, vector<128x8xf32>
    %157 = vector.shape_cast %156 : vector<128x8xf32> to vector<2x8x8x8xf32>
    %c0_244 = arith.constant 0 : index
    %c1_245 = arith.constant 1 : index
    %c0_246 = arith.constant 0 : index
    %c0_247 = arith.constant 0 : index
    %158 = vector.load %arg21[%c0_244, %c1_245, %c0_246, %c0_247] : memref<2x10x10x8xf32, #tpu.memory_space<vmem>>, vector<2x8x8x8xf32>
    tpu.vector_store %arg21[%c0_244, %c1_245, %c0_246, %c0_247], %157 {strides = array<i32>} : memref<2x10x10x8xf32, #tpu.memory_space<vmem>>, vector<2x8x8x8xf32>,
    %c0_248 = arith.constant 0 : index
    %c0_249 = arith.constant 0 : index
    %c0_250 = arith.constant 0 : index
    %c0_251 = arith.constant 0 : index
    %159 = vector.load %arg19[%c0_248, %c0_249, %c0_250, %c0_251] : memref<2x10x10x4xf32, #tpu.memory_space<vmem>>, vector<2x8x8x4xf32>
    %160 = vector.shape_cast %159 : vector<2x8x8x4xf32> to vector<128x4xf32>
    %c0_252 = arith.constant 0 : index
    %c0_253 = arith.constant 0 : index
    %c1_254 = arith.constant 1 : index
    %c0_255 = arith.constant 0 : index
    %161 = vector.load %arg18[%c0_252, %c0_253, %c1_254, %c0_255] : memref<2x10x10x4xf32, #tpu.memory_space<vmem>>, vector<2x8x8x4xf32>
    %162 = vector.shape_cast %161 : vector<2x8x8x4xf32> to vector<128x4xf32>
    %c0_256 = arith.constant 0 : index
    %c0_257 = arith.constant 0 : index
    %c1_258 = arith.constant 1 : index
    %c0_259 = arith.constant 0 : index
    %163 = vector.load %arg19[%c0_256, %c0_257, %c1_258, %c0_259] : memref<2x10x10x4xf32, #tpu.memory_space<vmem>>, vector<2x8x8x4xf32>
    %164 = vector.shape_cast %163 : vector<2x8x8x4xf32> to vector<128x4xf32>
    %c0_260 = arith.constant 0 : index
    %c1_261 = arith.constant 1 : index
    %c0_262 = arith.constant 0 : index
    %c0_263 = arith.constant 0 : index
    %165 = vector.load %arg17[%c0_260, %c1_261, %c0_262, %c0_263] : memref<2x10x10x4xf32, #tpu.memory_space<vmem>>, vector<2x8x8x4xf32>
    %166 = vector.shape_cast %165 : vector<2x8x8x4xf32> to vector<128x4xf32>
    %c0_264 = arith.constant 0 : index
    %c1_265 = arith.constant 1 : index
    %c1_266 = arith.constant 1 : index
    %c0_267 = arith.constant 0 : index
    %167 = vector.load %arg16[%c0_264, %c1_265, %c1_266, %c0_267] : memref<2x10x10x4xf32, #tpu.memory_space<vmem>>, vector<2x8x8x4xf32>
    %168 = vector.shape_cast %167 : vector<2x8x8x4xf32> to vector<128x4xf32>
    %c0_268 = arith.constant 0 : index
    %c1_269 = arith.constant 1 : index
    %c1_270 = arith.constant 1 : index
    %c0_271 = arith.constant 0 : index
    %169 = vector.load %arg17[%c0_268, %c1_269, %c1_270, %c0_271] : memref<2x10x10x4xf32, #tpu.memory_space<vmem>>, vector<2x8x8x4xf32>
    %170 = vector.shape_cast %169 : vector<2x8x8x4xf32> to vector<128x4xf32>
    %c0_272 = arith.constant 0 : index
    %c1_273 = arith.constant 1 : index
    %c0_274 = arith.constant 0 : index
    %c0_275 = arith.constant 0 : index
    %171 = vector.load %arg19[%c0_272, %c1_273, %c0_274, %c0_275] : memref<2x10x10x4xf32, #tpu.memory_space<vmem>>, vector<2x8x8x4xf32>
    %172 = vector.shape_cast %171 : vector<2x8x8x4xf32> to vector<128x4xf32>
    %c0_276 = arith.constant 0 : index
    %c1_277 = arith.constant 1 : index
    %c1_278 = arith.constant 1 : index
    %c0_279 = arith.constant 0 : index
    %173 = vector.load %arg18[%c0_276, %c1_277, %c1_278, %c0_279] : memref<2x10x10x4xf32, #tpu.memory_space<vmem>>, vector<2x8x8x4xf32>
    %174 = vector.shape_cast %173 : vector<2x8x8x4xf32> to vector<128x4xf32>
    %c0_280 = arith.constant 0 : index
    %c1_281 = arith.constant 1 : index
    %c1_282 = arith.constant 1 : index
    %c0_283 = arith.constant 0 : index
    %175 = vector.load %arg19[%c0_280, %c1_281, %c1_282, %c0_283] : memref<2x10x10x4xf32, #tpu.memory_space<vmem>>, vector<2x8x8x4xf32>
    %176 = vector.shape_cast %175 : vector<2x8x8x4xf32> to vector<128x4xf32>
    %177 = tpu.concatenate %160, %162, %164, %166, %168, %170, %172, %174, %176 in 1 : vector<128x4xf32>, vector<128x4xf32>, vector<128x4xf32>, vector<128x4xf32>, vector<128x4xf32>, vector<128x4xf32>, vector<128x4xf32>, vector<128x4xf32>, vector<128x4xf32> -> vector<128x36xf32>
    %178 = arith.truncf %177 : vector<128x36xf32> to vector<128x36xbf16>
    %cst_284 = arith.constant dense<0.000000e+00> : vector<128x8xf32>
    %179 = tpu.matmul %178, %0, %cst_284 {dimension_numbers = #tpu.dot_dimension_numbers<[1], [0], [0], [1], [0, 0, 1, 1], [], []>} : vector<128x36xbf16>, vector<36x8xbf16>, vector<128x8xf32> -> vector<128x8xf32>
    %cst_285 = arith.constant 0.000000e+00 : f32
    %180 = vector.broadcast %cst_285 : f32 to vector<128x8xf32>
    %181 = arith.cmpf oge, %179, %180 : vector<128x8xf32>
    %182 = vector.broadcast %2 : vector<1x8xf32> to vector<128x8xf32>
    %183 = arith.mulf %179, %182 : vector<128x8xf32>
    %184 = arith.select %181, %179, %183 : vector<128x8xi1>, vector<128x8xf32>
    %185 = vector.shape_cast %184 : vector<128x8xf32> to vector<2x8x8x8xf32>
    %c0_286 = arith.constant 0 : index
    %c1_287 = arith.constant 1 : index
    %c1_288 = arith.constant 1 : index
    %c0_289 = arith.constant 0 : index
    %186 = vector.load %arg20[%c0_286, %c1_287, %c1_288, %c0_289] : memref<2x10x10x8xf32, #tpu.memory_space<vmem>>, vector<2x8x8x8xf32>
    tpu.vector_store %arg20[%c0_286, %c1_287, %c1_288, %c0_289], %185 {strides = array<i32>} : memref<2x10x10x8xf32, #tpu.memory_space<vmem>>, vector<2x8x8x8xf32>,
    %c0_290 = arith.constant 0 : index
    %c0_291 = arith.constant 0 : index
    %c0_292 = arith.constant 0 : index
    %c0_293 = arith.constant 0 : index
    %187 = vector.load %arg20[%c0_290, %c0_291, %c0_292, %c0_293] : memref<2x10x10x8xf32, #tpu.memory_space<vmem>>, vector<2x8x8x8xf32>
    %188 = vector.shape_cast %187 : vector<2x8x8x8xf32> to vector<128x8xf32>
    %c0_294 = arith.constant 0 : index
    %c0_295 = arith.constant 0 : index
    %c0_296 = arith.constant 0 : index
    %c0_297 = arith.constant 0 : index
    %189 = vector.load %arg21[%c0_294, %c0_295, %c0_296, %c0_297] : memref<2x10x10x8xf32, #tpu.memory_space<vmem>>, vector<2x8x8x8xf32>
    %190 = vector.shape_cast %189 : vector<2x8x8x8xf32> to vector<128x8xf32>
    %c0_298 = arith.constant 0 : index
    %c0_299 = arith.constant 0 : index
    %c1_300 = arith.constant 1 : index
    %c0_301 = arith.constant 0 : index
    %191 = vector.load %arg20[%c0_298, %c0_299, %c1_300, %c0_301] : memref<2x10x10x8xf32, #tpu.memory_space<vmem>>, vector<2x8x8x8xf32>
    %192 = vector.shape_cast %191 : vector<2x8x8x8xf32> to vector<128x8xf32>
    %c0_302 = arith.constant 0 : index
    %c0_303 = arith.constant 0 : index
    %c0_304 = arith.constant 0 : index
    %c0_305 = arith.constant 0 : index
    %193 = vector.load %arg22[%c0_302, %c0_303, %c0_304, %c0_305] : memref<2x10x10x8xf32, #tpu.memory_space<vmem>>, vector<2x8x8x8xf32>
    %194 = vector.shape_cast %193 : vector<2x8x8x8xf32> to vector<128x8xf32>
    %c0_306 = arith.constant 0 : index
    %c0_307 = arith.constant 0 : index
    %c0_308 = arith.constant 0 : index
    %c0_309 = arith.constant 0 : index
    %195 = vector.load %arg23[%c0_306, %c0_307, %c0_308, %c0_309] : memref<2x10x10x8xf32, #tpu.memory_space<vmem>>, vector<2x8x8x8xf32>
    %196 = vector.shape_cast %195 : vector<2x8x8x8xf32> to vector<128x8xf32>
    %c0_310 = arith.constant 0 : index
    %c0_311 = arith.constant 0 : index
    %c1_312 = arith.constant 1 : index
    %c0_313 = arith.constant 0 : index
    %197 = vector.load %arg22[%c0_310, %c0_311, %c1_312, %c0_313] : memref<2x10x10x8xf32, #tpu.memory_space<vmem>>, vector<2x8x8x8xf32>
    %198 = vector.shape_cast %197 : vector<2x8x8x8xf32> to vector<128x8xf32>
    %c0_314 = arith.constant 0 : index
    %c1_315 = arith.constant 1 : index
    %c0_316 = arith.constant 0 : index
    %c0_317 = arith.constant 0 : index
    %199 = vector.load %arg20[%c0_314, %c1_315, %c0_316, %c0_317] : memref<2x10x10x8xf32, #tpu.memory_space<vmem>>, vector<2x8x8x8xf32>
    %200 = vector.shape_cast %199 : vector<2x8x8x8xf32> to vector<128x8xf32>
    %c0_318 = arith.constant 0 : index
    %c1_319 = arith.constant 1 : index
    %c0_320 = arith.constant 0 : index
    %c0_321 = arith.constant 0 : index
    %201 = vector.load %arg21[%c0_318, %c1_319, %c0_320, %c0_321] : memref<2x10x10x8xf32, #tpu.memory_space<vmem>>, vector<2x8x8x8xf32>
    %202 = vector.shape_cast %201 : vector<2x8x8x8xf32> to vector<128x8xf32>
    %c0_322 = arith.constant 0 : index
    %c1_323 = arith.constant 1 : index
    %c1_324 = arith.constant 1 : index
    %c0_325 = arith.constant 0 : index
    %203 = vector.load %arg20[%c0_322, %c1_323, %c1_324, %c0_325] : memref<2x10x10x8xf32, #tpu.memory_space<vmem>>, vector<2x8x8x8xf32>
    %204 = vector.shape_cast %203 : vector<2x8x8x8xf32> to vector<128x8xf32>
    %205 = tpu.concatenate %188, %190, %192, %194, %196, %198, %200, %202, %204 in 1 : vector<128x8xf32>, vector<128x8xf32>, vector<128x8xf32>, vector<128x8xf32>, vector<128x8xf32>, vector<128x8xf32>, vector<128x8xf32>, vector<128x8xf32>, vector<128x8xf32> -> vector<128x72xf32>
    %206 = arith.truncf %205 : vector<128x72xf32> to vector<128x72xbf16>
    %cst_326 = arith.constant dense<0.000000e+00> : vector<128x8xf32>
    %207 = tpu.matmul %206, %1, %cst_326 {dimension_numbers = #tpu.dot_dimension_numbers<[1], [0], [0], [1], [0, 0, 1, 1], [], []>} : vector<128x72xbf16>, vector<72x8xbf16>, vector<128x8xf32> -> vector<128x8xf32>
    %208 = vector.broadcast %5 : vector<1x8xf32> to vector<128x8xf32>
    %209 = arith.mulf %207, %208 : vector<128x8xf32>
    %210 = vector.broadcast %6 : vector<1x8xf32> to vector<128x8xf32>
    %211 = arith.addf %209, %210 : vector<128x8xf32>
    %c0_327 = arith.constant 0 : index
    %c0_328 = arith.constant 0 : index
    %c0_329 = arith.constant 0 : index
    %c0_330 = arith.constant 0 : index
    %212 = vector.load %arg1[%c0_327, %c0_328, %c0_329, %c0_330] : memref<2x8x8x4xbf16, #tpu.memory_space<vmem>>, vector<2x8x8x4xbf16>
    %213 = arith.extf %212 : vector<2x8x8x4xbf16> to vector<2x8x8x4xf32>
    %214 = vector.shape_cast %213 : vector<2x8x8x4xf32> to vector<128x4xf32>
    %215 = arith.truncf %214 : vector<128x4xf32> to vector<128x4xbf16>
    %c0_331 = arith.constant 0 : index
    %c0_332 = arith.constant 0 : index
    %216 = vector.load %arg12[%c0_331, %c0_332] : memref<4x8xbf16, #tpu.memory_space<vmem>>, vector<4x8xbf16>
    %cst_333 = arith.constant dense<0.000000e+00> : vector<128x8xf32>
    %217 = tpu.matmul %215, %216, %cst_333 {dimension_numbers = #tpu.dot_dimension_numbers<[1], [0], [0], [1], [0, 0, 1, 1], [], []>} : vector<128x4xbf16>, vector<4x8xbf16>, vector<128x8xf32> -> vector<128x8xf32>
    %c0_334 = arith.constant 0 : index
    %c0_335 = arith.constant 0 : index
    %218 = vector.load %arg13[%c0_334, %c0_335] : memref<1x8xf32, #tpu.memory_space<vmem>>, vector<1x8xf32>
    %219 = vector.broadcast %218 : vector<1x8xf32> to vector<128x8xf32>
    %220 = arith.mulf %217, %219 : vector<128x8xf32>
    %c0_336 = arith.constant 0 : index
    %c0_337 = arith.constant 0 : index
    %221 = vector.load %arg14[%c0_336, %c0_337] : memref<1x8xf32, #tpu.memory_space<vmem>>, vector<1x8xf32>
    %222 = vector.broadcast %221 : vector<1x8xf32> to vector<128x8xf32>
    %223 = arith.addf %220, %222 : vector<128x8xf32>
    %224 = arith.addf %211, %223 : vector<128x8xf32>
    %225 = vector.shape_cast %224 : vector<128x8xf32> to vector<2x8x8x8xf32>
    %c0_338 = arith.constant 0 : index
    %c0_339 = arith.constant 0 : index
    %c0_340 = arith.constant 0 : index
    %c0_341 = arith.constant 0 : index
    %226 = vector.load %arg15[%c0_338, %c0_339, %c0_340, %c0_341] : memref<2x8x8x8xf32, #tpu.memory_space<vmem>>, vector<2x8x8x8xf32>
    tpu.vector_store %arg15[%c0_338, %c0_339, %c0_340, %c0_341], %225 {strides = array<i32>} : memref<2x8x8x8xf32, #tpu.memory_space<vmem>>, vector<2x8x8x8xf32>,
    return
  }
  func.func @transform_0(%arg0: i32) -> (i32, i32, i32, i32) {
    %c0_i32 = arith.constant 0 : i32
    %c0_i32_0 = arith.constant 0 : i32
    %c0_i32_1 = arith.constant 0 : i32
    %c0_i32_2 = arith.constant 0 : i32
    return %arg0, %c0_i32, %c0_i32_0, %c0_i32_1 : i32, i32, i32, i32
  }
  func.func @transform_1(%arg0: i32) -> (i32, i32, i32, i32) {
    %c0_i32 = arith.constant 0 : i32
    %c0_i32_0 = arith.constant 0 : i32
    %c0_i32_1 = arith.constant 0 : i32
    %c0_i32_2 = arith.constant 0 : i32
    return %arg0, %c0_i32, %c0_i32_0, %c0_i32_1 : i32, i32, i32, i32
  }
  func.func @transform_2(%arg0: i32) -> (i32, i32, i32, i32) {
    %c0_i32 = arith.constant 0 : i32
    %c0_i32_0 = arith.constant 0 : i32
    %c0_i32_1 = arith.constant 0 : i32
    %c0_i32_2 = arith.constant 0 : i32
    return %arg0, %c0_i32, %c0_i32_0, %c0_i32_1 : i32, i32, i32, i32
  }
  func.func @transform_3(%arg0: i32) -> (i32, i32, i32, i32) {
    %c0_i32 = arith.constant 0 : i32
    %c0_i32_0 = arith.constant 0 : i32
    %c0_i32_1 = arith.constant 0 : i32
    %c0_i32_2 = arith.constant 0 : i32
    return %arg0, %c0_i32, %c0_i32_0, %c0_i32_1 : i32, i32, i32, i32
  }
  func.func @transform_4(%arg0: i32) -> (i32, i32) {
    %c0_i32 = arith.constant 0 : i32
    %c0_i32_0 = arith.constant 0 : i32
    %c0_i32_1 = arith.constant 0 : i32
    return %c0_i32, %c0_i32_0 : i32, i32
  }
  func.func @transform_5(%arg0: i32) -> (i32, i32) {
    %c0_i32 = arith.constant 0 : i32
    %c0_i32_0 = arith.constant 0 : i32
    %c0_i32_1 = arith.constant 0 : i32
    return %c0_i32, %c0_i32_0 : i32, i32
  }
  func.func @transform_6(%arg0: i32) -> (i32, i32) {
    %c0_i32 = arith.constant 0 : i32
    %c0_i32_0 = arith.constant 0 : i32
    %c0_i32_1 = arith.constant 0 : i32
    return %c0_i32, %c0_i32_0 : i32, i32
  }
  func.func @transform_7(%arg0: i32) -> (i32, i32) {
    %c0_i32 = arith.constant 0 : i32
    %c0_i32_0 = arith.constant 0 : i32
    %c0_i32_1 = arith.constant 0 : i32
    return %c0_i32, %c0_i32_0 : i32, i32
  }
  func.func @transform_8(%arg0: i32) -> (i32, i32) {
    %c0_i32 = arith.constant 0 : i32
    %c0_i32_0 = arith.constant 0 : i32
    %c0_i32_1 = arith.constant 0 : i32
    return %c0_i32, %c0_i32_0 : i32, i32
  }
  func.func @transform_9(%arg0: i32) -> (i32, i32) {
    %c0_i32 = arith.constant 0 : i32
    %c0_i32_0 = arith.constant 0 : i32
    %c0_i32_1 = arith.constant 0 : i32
    return %c0_i32, %c0_i32_0 : i32, i32
  }
  func.func @transform_10(%arg0: i32) -> (i32, i32) {
    %c0_i32 = arith.constant 0 : i32
    %c0_i32_0 = arith.constant 0 : i32
    %c0_i32_1 = arith.constant 0 : i32
    return %c0_i32, %c0_i32_0 : i32, i32
  }
  func.func @transform_11(%arg0: i32) -> (i32, i32) {
    %c0_i32 = arith.constant 0 : i32
    %c0_i32_0 = arith.constant 0 : i32
    %c0_i32_1 = arith.constant 0 : i32
    return %c0_i32, %c0_i32_0 : i32, i32
  }
  func.func @transform_12(%arg0: i32) -> (i32, i32) {
    %c0_i32 = arith.constant 0 : i32
    %c0_i32_0 = arith.constant 0 : i32
    %c0_i32_1 = arith.constant 0 : i32
    return %c0_i32, %c0_i32_0 : i32, i32
  }
  func.func @transform_13(%arg0: i32) -> (i32, i32) {
    %c0_i32 = arith.constant 0 : i32
    %c0_i32_0 = arith.constant 0 : i32
    %c0_i32_1 = arith.constant 0 : i32
    return %c0_i32, %c0_i32_0 : i32, i32
  }
  func.func @transform_14(%arg0: i32) -> (i32, i32, i32, i32) {
    %c0_i32 = arith.constant 0 : i32
    %c0_i32_0 = arith.constant 0 : i32
    %c0_i32_1 = arith.constant 0 : i32
    %c0_i32_2 = arith.constant 0 : i32
    return %arg0, %c0_i32, %c0_i32_0, %c0_i32_1 : i32, i32, i32, i32
  }
}

</mosaic_0001>

<llo_original>
// kernel: tpu_custom_call.1
$region0: #{tpu_custom_call.1}
  #allocation0 [shape = 'u32[]', space=smem, size = 0x4, offset = 0x4, fixed_abs, tag = 'smem constant byte address 0x4 - core index']
  #allocation1 [shape = 'u32[144,128]{1,0:T(1,128)}', space=vmem, size = 0x12000, scoped, tag = 'internal scratch']
  #allocation2 [shape = 'f32[2,10,10,4]{3,2,1,0:T(8,128)}', space=vmem, size = 0x28000, scoped, tag = 'scratch operand']
  #allocation3 [shape = 'f32[2,10,10,4]{3,2,1,0:T(8,128)}', space=vmem, size = 0x28000, scoped, tag = 'scratch operand']
  #allocation4 [shape = 'f32[2,10,10,4]{3,2,1,0:T(8,128)}', space=vmem, size = 0x28000, scoped, tag = 'scratch operand']
  #allocation5 [shape = 'f32[2,10,10,4]{3,2,1,0:T(8,128)}', space=vmem, size = 0x28000, scoped, tag = 'scratch operand']
  #allocation6 [shape = 'f32[2,10,10,8]{3,2,1,0:T(8,128)}', space=vmem, size = 0x28000, scoped, tag = 'scratch operand']
  #allocation7 [shape = 'f32[2,10,10,8]{3,2,1,0:T(8,128)}', space=vmem, size = 0x28000, scoped, tag = 'scratch operand']
  #allocation8 [shape = 'f32[2,10,10,8]{3,2,1,0:T(8,128)}', space=vmem, size = 0x28000, scoped, tag = 'scratch operand']
  #allocation9 [shape = 'f32[2,10,10,8]{3,2,1,0:T(8,128)}', space=vmem, size = 0x28000, scoped, tag = 'scratch operand']
  %s0 = inlined_call_operand.vmem [shape: bf16[2,8,8,4], index: 0, kind: input, shape index: {}]
  %s1 = inlined_call_operand.vmem [shape: bf16[2,8,8,4], index: 1, kind: input, shape index: {}]
  %s2 = inlined_call_operand.vmem [shape: bf16[2,8,8,4], index: 2, kind: input, shape index: {}]
  %s3 = inlined_call_operand.vmem [shape: bf16[2,8,8,4], index: 3, kind: input, shape index: {}]
  %s4 = inlined_call_operand.vmem [shape: bf16[36,8], index: 4, kind: input, shape index: {}]
  %s5 = inlined_call_operand.vmem [shape: bf16[72,8], index: 5, kind: input, shape index: {}]
  %s6 = inlined_call_operand.vmem [shape: f32[1,8], index: 6, kind: input, shape index: {}]
  %s7 = inlined_call_operand.vmem [shape: f32[1,4], index: 7, kind: input, shape index: {}]
  %s8 = inlined_call_operand.vmem [shape: f32[1,4], index: 8, kind: input, shape index: {}]
  %s9 = inlined_call_operand.vmem [shape: f32[1,8], index: 9, kind: input, shape index: {}]
  %s10 = inlined_call_operand.vmem [shape: f32[1,8], index: 10, kind: input, shape index: {}]
  %s11 = inlined_call_operand.vmem [shape: bf16[4,8], index: 11, kind: input, shape index: {}]
  %s12 = inlined_call_operand.vmem [shape: f32[1,8], index: 12, kind: input, shape index: {}]
  %s13 = inlined_call_operand.vmem [shape: f32[1,8], index: 13, kind: input, shape index: {}]
  %s14 = inlined_call_operand.hbm [shape: f32[2,8,8,8], index: 14, kind: output, shape index: {}]
  %s15 = sld [smem:[#allocation0]]
  $region66: #{tpu_custom_call.1} parent=0
    _
  %s17 = ssub.s32 1, %s15
  %s18 = scalar_select 0, %s17, %s15
  $region1: #{tpu_custom_call.1} parent=0
    #allocation10 [shape = 'u8[65536]{0}', space=vmem, size = 0x10000, scoped, tag = 'output window, operand 0, single buffered']
    #allocation11 [shape = 's32[1]{0}', space=sflag, size = 0x4, scoped, tag = 'scoped memory for tpu_custom_call.1']
    %19 = vsyncpa [#allocation11], 0
    // Predicated region
    $region2: #{tpu_custom_call.1} parent=1 // pred_check
      _
    $region3: #{tpu_custom_call.1} parent=1 // pred_check_branch
      %21 = sbr.rel (0) target = $region5
    $region4: #{tpu_custom_call.1} parent=1 // pred_region
      _
    $region5: #{tpu_custom_call.1} parent=1 // pred_fallthru
      _
    // Predicated region
    $region6: #{tpu_custom_call.1} parent=1 // pred_check
      _
    $region7: #{tpu_custom_call.1} parent=1 // pred_check_branch
      %23 = sbr.rel (0) target = $region9
    $region8: #{tpu_custom_call.1} parent=1 // pred_region
      _
    $region9: #{tpu_custom_call.1} parent=1 // pred_fallthru
      _
    // Predicated region
    $region10: #{tpu_custom_call.1} parent=1 // pred_check
      _
    $region11: #{tpu_custom_call.1} parent=1 // pred_check_branch
      %25 = sbr.rel (0) target = $region13
    $region12: #{tpu_custom_call.1} parent=1 // pred_region
      _
    $region13: #{tpu_custom_call.1} parent=1 // pred_fallthru
      _
    // Predicated region
    $region14: #{tpu_custom_call.1} parent=1 // pred_check
      _
    $region15: #{tpu_custom_call.1} parent=1 // pred_check_branch
      %27 = sbr.rel (0) target = $region17
    $region16: #{tpu_custom_call.1} parent=1 // pred_region
      _
    $region17: #{tpu_custom_call.1} parent=1 // pred_fallthru
      _
    // Predicated region
    $region18: #{tpu_custom_call.1} parent=1 // pred_check
      _
    $region19: #{tpu_custom_call.1} parent=1 // pred_check_branch
      %29 = sbr.rel (0) target = $region21
    $region20: #{tpu_custom_call.1} parent=1 // pred_region
      _
    $region21: #{tpu_custom_call.1} parent=1 // pred_fallthru
      _
    // Predicated region
    $region22: #{tpu_custom_call.1} parent=1 // pred_check
      _
    $region23: #{tpu_custom_call.1} parent=1 // pred_check_branch
      %31 = sbr.rel (0) target = $region25
    $region24: #{tpu_custom_call.1} parent=1 // pred_region
      _
    $region25: #{tpu_custom_call.1} parent=1 // pred_fallthru
      _
    // Predicated region
    $region26: #{tpu_custom_call.1} parent=1 // pred_check
      _
    $region27: #{tpu_custom_call.1} parent=1 // pred_check_branch
      %33 = sbr.rel (0) target = $region29
    $region28: #{tpu_custom_call.1} parent=1 // pred_region
      _
    $region29: #{tpu_custom_call.1} parent=1 // pred_fallthru
      _
    // Predicated region
    $region30: #{tpu_custom_call.1} parent=1 // pred_check
      _
    $region31: #{tpu_custom_call.1} parent=1 // pred_check_branch
      %35 = sbr.rel (0) target = $region33
    $region32: #{tpu_custom_call.1} parent=1 // pred_region
      _
    $region33: #{tpu_custom_call.1} parent=1 // pred_fallthru
      _
    // Predicated region
    $region34: #{tpu_custom_call.1} parent=1 // pred_check
      _
    $region35: #{tpu_custom_call.1} parent=1 // pred_check_branch
      %37 = sbr.rel (0) target = $region37
    $region36: #{tpu_custom_call.1} parent=1 // pred_region
      _
    $region37: #{tpu_custom_call.1} parent=1 // pred_fallthru
      _
    // Predicated region
    $region38: #{tpu_custom_call.1} parent=1 // pred_check
      _
    $region39: #{tpu_custom_call.1} parent=1 // pred_check_branch
      %39 = sbr.rel (0) target = $region41
    $region40: #{tpu_custom_call.1} parent=1 // pred_region
      _
    $region41: #{tpu_custom_call.1} parent=1 // pred_fallthru
      _
    // Predicated region
    $region42: #{tpu_custom_call.1} parent=1 // pred_check
      _
    $region43: #{tpu_custom_call.1} parent=1 // pred_check_branch
      %41 = sbr.rel (0) target = $region45
    $region44: #{tpu_custom_call.1} parent=1 // pred_region
      _
    $region45: #{tpu_custom_call.1} parent=1 // pred_fallthru
      _
    // Predicated region
    $region46: #{tpu_custom_call.1} parent=1 // pred_check
      _
    $region47: #{tpu_custom_call.1} parent=1 // pred_check_branch
      %43 = sbr.rel (0) target = $region49
    $region48: #{tpu_custom_call.1} parent=1 // pred_region
      _
    $region49: #{tpu_custom_call.1} parent=1 // pred_fallthru
      _
    // Predicated region
    $region50: #{tpu_custom_call.1} parent=1 // pred_check
      _
    $region51: #{tpu_custom_call.1} parent=1 // pred_check_branch
      %45 = sbr.rel (0) target = $region53
    $region52: #{tpu_custom_call.1} parent=1 // pred_region
      _
    $region53: #{tpu_custom_call.1} parent=1 // pred_fallthru
      _
    // Predicated region
    $region54: #{tpu_custom_call.1} parent=1 // pred_check
      _
    $region55: #{tpu_custom_call.1} parent=1 // pred_check_branch
      %47 = sbr.rel (0) target = $region57
    $region56: #{tpu_custom_call.1} parent=1 // pred_region
      _
    $region57: #{tpu_custom_call.1} parent=1 // pred_fallthru
      _
    %v49 = vld [vmem:[%s4] sm:$0xf]
    %v50 = vld [vmem:[%s4 + $0x4] sm:$0xf]
    %v51 = vld [vmem:[%s4 + $0x8] sm:$0xf]
    %v52 = vld [vmem:[%s4 + $0xc] sm:$0xf]
    %v53 = vld [vmem:[%s4 + $0x10] sm:$0x3]
    %v54 = vld [vmem:[%s5] sm:$0xf]
    %v55 = vld [vmem:[%s5 + $0x4] sm:$0xf]
    %v56 = vld [vmem:[%s5 + $0x8] sm:$0xf]
    %v57 = vld [vmem:[%s5 + $0xc] sm:$0xf]
    %v58 = vld [vmem:[%s5 + $0x10] sm:$0xf]
    %v59 = vld [vmem:[%s5 + $0x14] sm:$0xf]
    %v60 = vld [vmem:[%s5 + $0x18] sm:$0xf]
    %v61 = vld [vmem:[%s5 + $0x1c] sm:$0xf]
    %v62 = vld [vmem:[%s5 + $0x20] sm:$0xf]
    %v63 = vld [vmem:[%s6] sm:$0x1]
    %v64 = vld [vmem:[%s7] sm:$0x1]
    %v65 = vld [vmem:[%s8] sm:$0x1]
    %v66 = vld [vmem:[%s9] sm:$0x1]
    %v67 = vld [vmem:[%s10] sm:$0x1]
    %vm68 = vcmask 31744
    %69 = vst.msk [vmem:[#allocation2] sm:$0xff] %vm68, 0.0
    %vm70 = vcmask 25600
    %71 = vst.msk [vmem:[#allocation2 + $0x8] sm:$0x3] %vm70, 0.0
    %72 = vst.msk [vmem:[#allocation2 + $0xa0] sm:$0xff] %vm68, 0.0
    %73 = vst.msk [vmem:[#allocation2 + $0xa8] sm:$0x3] %vm70, 0.0
    %vm74 = vcmask 64512
    %75 = vst.msk [vmem:[#allocation6] sm:$0xff] %vm74, 0.0
    %vm76 = vcmask 58368
    %77 = vst.msk [vmem:[#allocation6 + $0x8] sm:$0x3] %vm76, 0.0
    %78 = vst.msk [vmem:[#allocation6 + $0xa0] sm:$0xff] %vm74, 0.0
    %79 = vst.msk [vmem:[#allocation6 + $0xa8] sm:$0x3] %vm76, 0.0
    %vm80 = vcmask 24576
    %81 = vst.msk [vmem:[#allocation2] sm:$0x1] %vm80, 0.0
    %82 = vst.msk [vmem:[#allocation2 + $0x10] sm:$0x1] %vm80, 0.0
    %83 = vst.msk [vmem:[#allocation2 + $0x20] sm:$0x1] %vm80, 0.0
    %84 = vst.msk [vmem:[#allocation2 + $0x30] sm:$0x1] %vm80, 0.0
    %85 = vst.msk [vmem:[#allocation2 + $0x40] sm:$0x1] %vm80, 0.0
    %86 = vst.msk [vmem:[#allocation2 + $0x50] sm:$0x1] %vm80, 0.0
    %87 = vst.msk [vmem:[#allocation2 + $0x60] sm:$0x1] %vm80, 0.0
    %88 = vst.msk [vmem:[#allocation2 + $0x70] sm:$0x1] %vm80, 0.0
    %89 = vst.msk [vmem:[#allocation2 + $0x80] sm:$0x1] %vm80, 0.0
    %90 = vst.msk [vmem:[#allocation2 + $0x90] sm:$0x1] %vm80, 0.0
    %91 = vst.msk [vmem:[#allocation2 + $0xa0] sm:$0x1] %vm80, 0.0
    %92 = vst.msk [vmem:[#allocation2 + $0xb0] sm:$0x1] %vm80, 0.0
    %93 = vst.msk [vmem:[#allocation2 + $0xc0] sm:$0x1] %vm80, 0.0
    %94 = vst.msk [vmem:[#allocation2 + $0xd0] sm:$0x1] %vm80, 0.0
    %95 = vst.msk [vmem:[#allocation2 + $0xe0] sm:$0x1] %vm80, 0.0
    %96 = vst.msk [vmem:[#allocation2 + $0xf0] sm:$0x1] %vm80, 0.0
    %97 = vst.msk [vmem:[#allocation2 + $0x100] sm:$0x1] %vm80, 0.0
    %98 = vst.msk [vmem:[#allocation2 + $0x110] sm:$0x1] %vm80, 0.0
    %99 = vst.msk [vmem:[#allocation2 + $0x120] sm:$0x1] %vm80, 0.0
    %100 = vst.msk [vmem:[#allocation2 + $0x130] sm:$0x1] %vm80, 0.0
    %vm101 = vcmask 57344
    %102 = vst.msk [vmem:[#allocation6] sm:$0x1] %vm101, 0.0
    %103 = vst.msk [vmem:[#allocation6 + $0x10] sm:$0x1] %vm101, 0.0
    %104 = vst.msk [vmem:[#allocation6 + $0x20] sm:$0x1] %vm101, 0.0
    %105 = vst.msk [vmem:[#allocation6 + $0x30] sm:$0x1] %vm101, 0.0
    %106 = vst.msk [vmem:[#allocation6 + $0x40] sm:$0x1] %vm101, 0.0
    %107 = vst.msk [vmem:[#allocation6 + $0x50] sm:$0x1] %vm101, 0.0
    %108 = vst.msk [vmem:[#allocation6 + $0x60] sm:$0x1] %vm101, 0.0
    %109 = vst.msk [vmem:[#allocation6 + $0x70] sm:$0x1] %vm101, 0.0
    %110 = vst.msk [vmem:[#allocation6 + $0x80] sm:$0x1] %vm101, 0.0
    %111 = vst.msk [vmem:[#allocation6 + $0x90] sm:$0x1] %vm101, 0.0
    %112 = vst.msk [vmem:[#allocation6 + $0xa0] sm:$0x1] %vm101, 0.0
    %113 = vst.msk [vmem:[#allocation6 + $0xb0] sm:$0x1] %vm101, 0.0
    %114 = vst.msk [vmem:[#allocation6 + $0xc0] sm:$0x1] %vm101, 0.0
    %115 = vst.msk [vmem:[#allocation6 + $0xd0] sm:$0x1] %vm101, 0.0
    %116 = vst.msk [vmem:[#allocation6 + $0xe0] sm:$0x1] %vm101, 0.0
    %117 = vst.msk [vmem:[#allocation6 + $0xf0] sm:$0x1] %vm101, 0.0
    %118 = vst.msk [vmem:[#allocation6 + $0x100] sm:$0x1] %vm101, 0.0
    %119 = vst.msk [vmem:[#allocation6 + $0x110] sm:$0x1] %vm101, 0.0
    %120 = vst.msk [vmem:[#allocation6 + $0x120] sm:$0x1] %vm101, 0.0
    %121 = vst.msk [vmem:[#allocation6 + $0x130] sm:$0x1] %vm101, 0.0
    %122 = vst.msk [vmem:[#allocation3] sm:$0xff] %vm68, 0.0
    %123 = vst.msk [vmem:[#allocation3 + $0x8] sm:$0x3] %vm70, 0.0
    %124 = vst.msk [vmem:[#allocation3 + $0xa0] sm:$0xff] %vm68, 0.0
    %125 = vst.msk [vmem:[#allocation3 + $0xa8] sm:$0x3] %vm70, 0.0
    %126 = vst.msk [vmem:[#allocation7] sm:$0xff] %vm74, 0.0
    %127 = vst.msk [vmem:[#allocation7 + $0x8] sm:$0x3] %vm76, 0.0
    %128 = vst.msk [vmem:[#allocation7 + $0xa0] sm:$0xff] %vm74, 0.0
    %129 = vst.msk [vmem:[#allocation7 + $0xa8] sm:$0x3] %vm76, 0.0
    %130 = vst.msk [vmem:[#allocation3 + $0x8] sm:$0x1] %vm80, 0.0
    %131 = vst.msk [vmem:[#allocation3 + $0x18] sm:$0x1] %vm80, 0.0
    %132 = vst.msk [vmem:[#allocation3 + $0x28] sm:$0x1] %vm80, 0.0
    %133 = vst.msk [vmem:[#allocation3 + $0x38] sm:$0x1] %vm80, 0.0
    %134 = vst.msk [vmem:[#allocation3 + $0x48] sm:$0x1] %vm80, 0.0
    %135 = vst.msk [vmem:[#allocation3 + $0x58] sm:$0x1] %vm80, 0.0
    %136 = vst.msk [vmem:[#allocation3 + $0x68] sm:$0x1] %vm80, 0.0
    %137 = vst.msk [vmem:[#allocation3 + $0x78] sm:$0x1] %vm80, 0.0
    %138 = vst.msk [vmem:[#allocation3 + $0x88] sm:$0x1] %vm80, 0.0
    %139 = vst.msk [vmem:[#allocation3 + $0x98] sm:$0x1] %vm80, 0.0
    %140 = vst.msk [vmem:[#allocation3 + $0xa8] sm:$0x1] %vm80, 0.0
    %141 = vst.msk [vmem:[#allocation3 + $0xb8] sm:$0x1] %vm80, 0.0
    %142 = vst.msk [vmem:[#allocation3 + $0xc8] sm:$0x1] %vm80, 0.0
    %143 = vst.msk [vmem:[#allocation3 + $0xd8] sm:$0x1] %vm80, 0.0
    %144 = vst.msk [vmem:[#allocation3 + $0xe8] sm:$0x1] %vm80, 0.0
    %145 = vst.msk [vmem:[#allocation3 + $0xf8] sm:$0x1] %vm80, 0.0
    %146 = vst.msk [vmem:[#allocation3 + $0x108] sm:$0x1] %vm80, 0.0
    %147 = vst.msk [vmem:[#allocation3 + $0x118] sm:$0x1] %vm80, 0.0
    %148 = vst.msk [vmem:[#allocation3 + $0x128] sm:$0x1] %vm80, 0.0
    %149 = vst.msk [vmem:[#allocation3 + $0x138] sm:$0x1] %vm80, 0.0
    %150 = vst.msk [vmem:[#allocation7 + $0x8] sm:$0x1] %vm101, 0.0
    %151 = vst.msk [vmem:[#allocation7 + $0x18] sm:$0x1] %vm101, 0.0
    %152 = vst.msk [vmem:[#allocation7 + $0x28] sm:$0x1] %vm101, 0.0
    %153 = vst.msk [vmem:[#allocation7 + $0x38] sm:$0x1] %vm101, 0.0
    %154 = vst.msk [vmem:[#allocation7 + $0x48] sm:$0x1] %vm101, 0.0
    %155 = vst.msk [vmem:[#allocation7 + $0x58] sm:$0x1] %vm101, 0.0
    %156 = vst.msk [vmem:[#allocation7 + $0x68] sm:$0x1] %vm101, 0.0
    %157 = vst.msk [vmem:[#allocation7 + $0x78] sm:$0x1] %vm101, 0.0
    %158 = vst.msk [vmem:[#allocation7 + $0x88] sm:$0x1] %vm101, 0.0
    %159 = vst.msk [vmem:[#allocation7 + $0x98] sm:$0x1] %vm101, 0.0
    %160 = vst.msk [vmem:[#allocation7 + $0xa8] sm:$0x1] %vm101, 0.0
    %161 = vst.msk [vmem:[#allocation7 + $0xb8] sm:$0x1] %vm101, 0.0
    %162 = vst.msk [vmem:[#allocation7 + $0xc8] sm:$0x1] %vm101, 0.0
    %163 = vst.msk [vmem:[#allocation7 + $0xd8] sm:$0x1] %vm101, 0.0
    %164 = vst.msk [vmem:[#allocation7 + $0xe8] sm:$0x1] %vm101, 0.0
    %165 = vst.msk [vmem:[#allocation7 + $0xf8] sm:$0x1] %vm101, 0.0
    %166 = vst.msk [vmem:[#allocation7 + $0x108] sm:$0x1] %vm101, 0.0
    %167 = vst.msk [vmem:[#allocation7 + $0x118] sm:$0x1] %vm101, 0.0
    %168 = vst.msk [vmem:[#allocation7 + $0x128] sm:$0x1] %vm101, 0.0
    %169 = vst.msk [vmem:[#allocation7 + $0x138] sm:$0x1] %vm101, 0.0
    %s170 = scalar_lea.vmem [#allocation4], 128
    %171 = vst.msk [vmem:[%s170] sm:$0xff] %vm68, 0.0
    %172 = vst.msk [vmem:[%s170 + $0x8] sm:$0x3] %vm70, 0.0
    %173 = vst.msk [vmem:[%s170 + $0xa0] sm:$0xff] %vm68, 0.0
    %174 = vst.msk [vmem:[%s170 + $0xa8] sm:$0x3] %vm70, 0.0
    %s175 = scalar_lea.vmem [#allocation8], 128
    %176 = vst.msk [vmem:[%s175] sm:$0xff] %vm74, 0.0
    %177 = vst.msk [vmem:[%s175 + $0x8] sm:$0x3] %vm76, 0.0
    %178 = vst.msk [vmem:[%s175 + $0xa0] sm:$0xff] %vm74, 0.0
    %179 = vst.msk [vmem:[%s175 + $0xa8] sm:$0x3] %vm76, 0.0
    %180 = vst.msk [vmem:[#allocation4] sm:$0x1] %vm80, 0.0
    %181 = vst.msk [vmem:[#allocation4 + $0x10] sm:$0x1] %vm80, 0.0
    %182 = vst.msk [vmem:[#allocation4 + $0x20] sm:$0x1] %vm80, 0.0
    %183 = vst.msk [vmem:[#allocation4 + $0x30] sm:$0x1] %vm80, 0.0
    %184 = vst.msk [vmem:[#allocation4 + $0x40] sm:$0x1] %vm80, 0.0
    %185 = vst.msk [vmem:[#allocation4 + $0x50] sm:$0x1] %vm80, 0.0
    %186 = vst.msk [vmem:[#allocation4 + $0x60] sm:$0x1] %vm80, 0.0
    %187 = vst.msk [vmem:[#allocation4 + $0x70] sm:$0x1] %vm80, 0.0
    %188 = vst.msk [vmem:[#allocation4 + $0x80] sm:$0x1] %vm80, 0.0
    %189 = vst.msk [vmem:[#allocation4 + $0x90] sm:$0x1] %vm80, 0.0
    %190 = vst.msk [vmem:[#allocation4 + $0xa0] sm:$0x1] %vm80, 0.0
    %191 = vst.msk [vmem:[#allocation4 + $0xb0] sm:$0x1] %vm80, 0.0
    %192 = vst.msk [vmem:[#allocation4 + $0xc0] sm:$0x1] %vm80, 0.0
    %193 = vst.msk [vmem:[#allocation4 + $0xd0] sm:$0x1] %vm80, 0.0
    %194 = vst.msk [vmem:[#allocation4 + $0xe0] sm:$0x1] %vm80, 0.0
    %195 = vst.msk [vmem:[#allocation4 + $0xf0] sm:$0x1] %vm80, 0.0
    %196 = vst.msk [vmem:[#allocation4 + $0x100] sm:$0x1] %vm80, 0.0
    %197 = vst.msk [vmem:[#allocation4 + $0x110] sm:$0x1] %vm80, 0.0
    %198 = vst.msk [vmem:[#allocation4 + $0x120] sm:$0x1] %vm80, 0.0
    %199 = vst.msk [vmem:[#allocation4 + $0x130] sm:$0x1] %vm80, 0.0
    %200 = vst.msk [vmem:[#allocation8] sm:$0x1] %vm101, 0.0
    %201 = vst.msk [vmem:[#allocation8 + $0x10] sm:$0x1] %vm101, 0.0
    %202 = vst.msk [vmem:[#allocation8 + $0x20] sm:$0x1] %vm101, 0.0
    %203 = vst.msk [vmem:[#allocation8 + $0x30] sm:$0x1] %vm101, 0.0
    %204 = vst.msk [vmem:[#allocation8 + $0x40] sm:$0x1] %vm101, 0.0
    %205 = vst.msk [vmem:[#allocation8 + $0x50] sm:$0x1] %vm101, 0.0
    %206 = vst.msk [vmem:[#allocation8 + $0x60] sm:$0x1] %vm101, 0.0
    %207 = vst.msk [vmem:[#allocation8 + $0x70] sm:$0x1] %vm101, 0.0
    %208 = vst.msk [vmem:[#allocation8 + $0x80] sm:$0x1] %vm101, 0.0
    %209 = vst.msk [vmem:[#allocation8 + $0x90] sm:$0x1] %vm101, 0.0
    %210 = vst.msk [vmem:[#allocation8 + $0xa0] sm:$0x1] %vm101, 0.0
    %211 = vst.msk [vmem:[#allocation8 + $0xb0] sm:$0x1] %vm101, 0.0
    %212 = vst.msk [vmem:[#allocation8 + $0xc0] sm:$0x1] %vm101, 0.0
    %213 = vst.msk [vmem:[#allocation8 + $0xd0] sm:$0x1] %vm101, 0.0
    %214 = vst.msk [vmem:[#allocation8 + $0xe0] sm:$0x1] %vm101, 0.0
    %215 = vst.msk [vmem:[#allocation8 + $0xf0] sm:$0x1] %vm101, 0.0
    %216 = vst.msk [vmem:[#allocation8 + $0x100] sm:$0x1] %vm101, 0.0
    %217 = vst.msk [vmem:[#allocation8 + $0x110] sm:$0x1] %vm101, 0.0
    %218 = vst.msk [vmem:[#allocation8 + $0x120] sm:$0x1] %vm101, 0.0
    %219 = vst.msk [vmem:[#allocation8 + $0x130] sm:$0x1] %vm101, 0.0
    %s220 = scalar_lea.vmem [#allocation5], 128
    %221 = vst.msk [vmem:[%s220] sm:$0xff] %vm68, 0.0
    %222 = vst.msk [vmem:[%s220 + $0x8] sm:$0x3] %vm70, 0.0
    %223 = vst.msk [vmem:[%s220 + $0xa0] sm:$0xff] %vm68, 0.0
    %224 = vst.msk [vmem:[%s220 + $0xa8] sm:$0x3] %vm70, 0.0
    %s225 = scalar_lea.vmem [#allocation9], 128
    %226 = vst.msk [vmem:[%s225] sm:$0xff] %vm74, 0.0
    %227 = vst.msk [vmem:[%s225 + $0x8] sm:$0x3] %vm76, 0.0
    %228 = vst.msk [vmem:[%s225 + $0xa0] sm:$0xff] %vm74, 0.0
    %229 = vst.msk [vmem:[%s225 + $0xa8] sm:$0x3] %vm76, 0.0
    %230 = vst.msk [vmem:[#allocation5 + $0x8] sm:$0x1] %vm80, 0.0
    %231 = vst.msk [vmem:[#allocation5 + $0x18] sm:$0x1] %vm80, 0.0
    %232 = vst.msk [vmem:[#allocation5 + $0x28] sm:$0x1] %vm80, 0.0
    %233 = vst.msk [vmem:[#allocation5 + $0x38] sm:$0x1] %vm80, 0.0
    %234 = vst.msk [vmem:[#allocation5 + $0x48] sm:$0x1] %vm80, 0.0
    %235 = vst.msk [vmem:[#allocation5 + $0x58] sm:$0x1] %vm80, 0.0
    %236 = vst.msk [vmem:[#allocation5 + $0x68] sm:$0x1] %vm80, 0.0
    %237 = vst.msk [vmem:[#allocation5 + $0x78] sm:$0x1] %vm80, 0.0
    %238 = vst.msk [vmem:[#allocation5 + $0x88] sm:$0x1] %vm80, 0.0
    %239 = vst.msk [vmem:[#allocation5 + $0x98] sm:$0x1] %vm80, 0.0
    %240 = vst.msk [vmem:[#allocation5 + $0xa8] sm:$0x1] %vm80, 0.0
    %241 = vst.msk [vmem:[#allocation5 + $0xb8] sm:$0x1] %vm80, 0.0
    %242 = vst.msk [vmem:[#allocation5 + $0xc8] sm:$0x1] %vm80, 0.0
    %243 = vst.msk [vmem:[#allocation5 + $0xd8] sm:$0x1] %vm80, 0.0
    %244 = vst.msk [vmem:[#allocation5 + $0xe8] sm:$0x1] %vm80, 0.0
    %245 = vst.msk [vmem:[#allocation5 + $0xf8] sm:$0x1] %vm80, 0.0
    %246 = vst.msk [vmem:[#allocation5 + $0x108] sm:$0x1] %vm80, 0.0
    %247 = vst.msk [vmem:[#allocation5 + $0x118] sm:$0x1] %vm80, 0.0
    %248 = vst.msk [vmem:[#allocation5 + $0x128] sm:$0x1] %vm80, 0.0
    %249 = vst.msk [vmem:[#allocation5 + $0x138] sm:$0x1] %vm80, 0.0
    %250 = vst.msk [vmem:[#allocation9 + $0x8] sm:$0x1] %vm101, 0.0
    %251 = vst.msk [vmem:[#allocation9 + $0x18] sm:$0x1] %vm101, 0.0
    %252 = vst.msk [vmem:[#allocation9 + $0x28] sm:$0x1] %vm101, 0.0
    %253 = vst.msk [vmem:[#allocation9 + $0x38] sm:$0x1] %vm101, 0.0
    %254 = vst.msk [vmem:[#allocation9 + $0x48] sm:$0x1] %vm101, 0.0
    %255 = vst.msk [vmem:[#allocation9 + $0x58] sm:$0x1] %vm101, 0.0
    %256 = vst.msk [vmem:[#allocation9 + $0x68] sm:$0x1] %vm101, 0.0
    %257 = vst.msk [vmem:[#allocation9 + $0x78] sm:$0x1] %vm101, 0.0
    %258 = vst.msk [vmem:[#allocation9 + $0x88] sm:$0x1] %vm101, 0.0
    %259 = vst.msk [vmem:[#allocation9 + $0x98] sm:$0x1] %vm101, 0.0
    %260 = vst.msk [vmem:[#allocation9 + $0xa8] sm:$0x1] %vm101, 0.0
    %261 = vst.msk [vmem:[#allocation9 + $0xb8] sm:$0x1] %vm101, 0.0
    %262 = vst.msk [vmem:[#allocation9 + $0xc8] sm:$0x1] %vm101, 0.0
    %263 = vst.msk [vmem:[#allocation9 + $0xd8] sm:$0x1] %vm101, 0.0
    %264 = vst.msk [vmem:[#allocation9 + $0xe8] sm:$0x1] %vm101, 0.0
    %265 = vst.msk [vmem:[#allocation9 + $0xf8] sm:$0x1] %vm101, 0.0
    %266 = vst.msk [vmem:[#allocation9 + $0x108] sm:$0x1] %vm101, 0.0
    %267 = vst.msk [vmem:[#allocation9 + $0x118] sm:$0x1] %vm101, 0.0
    %268 = vst.msk [vmem:[#allocation9 + $0x128] sm:$0x1] %vm101, 0.0
    %269 = vst.msk [vmem:[#allocation9 + $0x138] sm:$0x1] %vm101, 0.0
    %v270 = vld [vmem:[%s0] sm:$0xf]
    %v271 = vld [vmem:[%s0 + $0x4] sm:$0xf]
    %v272 = vld [vmem:[%s0 + $0x8] sm:$0xf]
    %v273 = vld [vmem:[%s0 + $0xc] sm:$0xf]
    %v274 = vld [vmem:[%s0 + $0x10] sm:$0xf]
    %v275 = vld [vmem:[%s0 + $0x14] sm:$0xf]
    %v276 = vld [vmem:[%s0 + $0x18] sm:$0xf]
    %v277 = vld [vmem:[%s0 + $0x1c] sm:$0xf]
    %v278 = vld [vmem:[%s0 + $0x20] sm:$0xf]
    %v279 = vld [vmem:[%s0 + $0x24] sm:$0xf]
    %v280 = vld [vmem:[%s0 + $0x28] sm:$0xf]
    %v281 = vld [vmem:[%s0 + $0x2c] sm:$0xf]
    %v282 = vld [vmem:[%s0 + $0x30] sm:$0xf]
    %v283 = vld [vmem:[%s0 + $0x34] sm:$0xf]
    %v284 = vld [vmem:[%s0 + $0x38] sm:$0xf]
    %v285 = vld [vmem:[%s0 + $0x3c] sm:$0xf]
    %v286 = vunpack.c.l.bf16 %v270
    %v287 = vunpack.c.l.bf16 %v271
    %v288 = vunpack.c.l.bf16 %v272
    %v289 = vunpack.c.l.bf16 %v273
    %v290 = vunpack.c.l.bf16 %v274
    %v291 = vunpack.c.l.bf16 %v275
    %v292 = vunpack.c.l.bf16 %v276
    %v293 = vunpack.c.l.bf16 %v277
    %v294 = vunpack.c.l.bf16 %v278
    %v295 = vunpack.c.l.bf16 %v279
    %v296 = vunpack.c.l.bf16 %v280
    %v297 = vunpack.c.l.bf16 %v281
    %v298 = vunpack.c.l.bf16 %v282
    %v299 = vunpack.c.l.bf16 %v283
    %v300 = vunpack.c.l.bf16 %v284
    %v301 = vunpack.c.l.bf16 %v285
    %v303 = vlaneseq
    %v304 = vshrl.u32 %v303, 7
    %v305 = vsub.s32 0, %v304
    %v306 = vrot.slane %v64, %v305
    %v308 = vmul.f32 %v286, %v306
    %v309 = vmul.f32 %v287, %v306
    %v310 = vmul.f32 %v288, %v306
    %v311 = vmul.f32 %v289, %v306
    %v312 = vmul.f32 %v290, %v306
    %v313 = vmul.f32 %v291, %v306
    %v314 = vmul.f32 %v292, %v306
    %v315 = vmul.f32 %v293, %v306
    %v316 = vmul.f32 %v294, %v306
    %v317 = vmul.f32 %v295, %v306
    %v318 = vmul.f32 %v296, %v306
    %v319 = vmul.f32 %v297, %v306
    %v320 = vmul.f32 %v298, %v306
    %v321 = vmul.f32 %v299, %v306
    %v322 = vmul.f32 %v300, %v306
    %v323 = vmul.f32 %v301, %v306
    %v325 = vlaneseq
    %v326 = vshrl.u32 %v325, 7
    %v327 = vsub.s32 0, %v326
    %v328 = vrot.slane %v65, %v327
    %v330 = vadd.f32 %v308, %v328
    %v331 = vadd.f32 %v309, %v328
    %v332 = vadd.f32 %v310, %v328
    %v333 = vadd.f32 %v311, %v328
    %v334 = vadd.f32 %v312, %v328
    %v335 = vadd.f32 %v313, %v328
    %v336 = vadd.f32 %v314, %v328
    %v337 = vadd.f32 %v315, %v328
    %v338 = vadd.f32 %v316, %v328
    %v339 = vadd.f32 %v317, %v328
    %v340 = vadd.f32 %v318, %v328
    %v341 = vadd.f32 %v319, %v328
    %v342 = vadd.f32 %v320, %v328
    %v343 = vadd.f32 %v321, %v328
    %v344 = vadd.f32 %v322, %v328
    %v345 = vadd.f32 %v323, %v328
    %346 = vst.msk [vmem:[#allocation5] sm:$0xff] %vm68, %v330
    %347 = vst.msk [vmem:[#allocation5 + $0x10] sm:$0xff] %vm68, %v331
    %348 = vst.msk [vmem:[#allocation5 + $0x20] sm:$0xff] %vm68, %v332
    %349 = vst.msk [vmem:[#allocation5 + $0x30] sm:$0xff] %vm68, %v333
    %350 = vst.msk [vmem:[#allocation5 + $0x40] sm:$0xff] %vm68, %v334
    %351 = vst.msk [vmem:[#allocation5 + $0x50] sm:$0xff] %vm68, %v335
    %352 = vst.msk [vmem:[#allocation5 + $0x60] sm:$0xff] %vm68, %v336
    %353 = vst.msk [vmem:[#allocation5 + $0x70] sm:$0xff] %vm68, %v337
    %354 = vst.msk [vmem:[#allocation5 + $0xa0] sm:$0xff] %vm68, %v338
    %355 = vst.msk [vmem:[#allocation5 + $0xb0] sm:$0xff] %vm68, %v339
    %356 = vst.msk [vmem:[#allocation5 + $0xc0] sm:$0xff] %vm68, %v340
    %357 = vst.msk [vmem:[#allocation5 + $0xd0] sm:$0xff] %vm68, %v341
    %358 = vst.msk [vmem:[#allocation5 + $0xe0] sm:$0xff] %vm68, %v342
    %359 = vst.msk [vmem:[#allocation5 + $0xf0] sm:$0xff] %vm68, %v343
    %360 = vst.msk [vmem:[#allocation5 + $0x100] sm:$0xff] %vm68, %v344
    %361 = vst.msk [vmem:[#allocation5 + $0x110] sm:$0xff] %vm68, %v345
    %v362 = vld [vmem:[%s1] sm:$0xf]
    %v363 = vld [vmem:[%s1 + $0x4] sm:$0xf]
    %v364 = vld [vmem:[%s1 + $0x8] sm:$0xf]
    %v365 = vld [vmem:[%s1 + $0xc] sm:$0xf]
    %v366 = vld [vmem:[%s1 + $0x10] sm:$0xf]
    %v367 = vld [vmem:[%s1 + $0x14] sm:$0xf]
    %v368 = vld [vmem:[%s1 + $0x18] sm:$0xf]
    %v369 = vld [vmem:[%s1 + $0x1c] sm:$0xf]
    %v370 = vld [vmem:[%s1 + $0x20] sm:$0xf]
    %v371 = vld [vmem:[%s1 + $0x24] sm:$0xf]
    %v372 = vld [vmem:[%s1 + $0x28] sm:$0xf]
    %v373 = vld [vmem:[%s1 + $0x2c] sm:$0xf]
    %v374 = vld [vmem:[%s1 + $0x30] sm:$0xf]
    %v375 = vld [vmem:[%s1 + $0x34] sm:$0xf]
    %v376 = vld [vmem:[%s1 + $0x38] sm:$0xf]
    %v377 = vld [vmem:[%s1 + $0x3c] sm:$0xf]
    %v378 = vunpack.c.l.bf16 %v362
    %v379 = vunpack.c.l.bf16 %v363
    %v380 = vunpack.c.l.bf16 %v364
    %v381 = vunpack.c.l.bf16 %v365
    %v382 = vunpack.c.l.bf16 %v366
    %v383 = vunpack.c.l.bf16 %v367
    %v384 = vunpack.c.l.bf16 %v368
    %v385 = vunpack.c.l.bf16 %v369
    %v386 = vunpack.c.l.bf16 %v370
    %v387 = vunpack.c.l.bf16 %v371
    %v388 = vunpack.c.l.bf16 %v372
    %v389 = vunpack.c.l.bf16 %v373
    %v390 = vunpack.c.l.bf16 %v374
    %v391 = vunpack.c.l.bf16 %v375
    %v392 = vunpack.c.l.bf16 %v376
    %v393 = vunpack.c.l.bf16 %v377
    %v394 = vmul.f32 %v378, %v306
    %v395 = vmul.f32 %v379, %v306
    %v396 = vmul.f32 %v380, %v306
    %v397 = vmul.f32 %v381, %v306
    %v398 = vmul.f32 %v382, %v306
    %v399 = vmul.f32 %v383, %v306
    %v400 = vmul.f32 %v384, %v306
    %v401 = vmul.f32 %v385, %v306
    %v402 = vmul.f32 %v386, %v306
    %v403 = vmul.f32 %v387, %v306
    %v404 = vmul.f32 %v388, %v306
    %v405 = vmul.f32 %v389, %v306
    %v406 = vmul.f32 %v390, %v306
    %v407 = vmul.f32 %v391, %v306
    %v408 = vmul.f32 %v392, %v306
    %v409 = vmul.f32 %v393, %v306
    %v410 = vadd.f32 %v394, %v328
    %v411 = vadd.f32 %v395, %v328
    %v412 = vadd.f32 %v396, %v328
    %v413 = vadd.f32 %v397, %v328
    %v414 = vadd.f32 %v398, %v328
    %v415 = vadd.f32 %v399, %v328
    %v416 = vadd.f32 %v400, %v328
    %v417 = vadd.f32 %v401, %v328
    %v418 = vadd.f32 %v402, %v328
    %v419 = vadd.f32 %v403, %v328
    %v420 = vadd.f32 %v404, %v328
    %v421 = vadd.f32 %v405, %v328
    %v422 = vadd.f32 %v406, %v328
    %v423 = vadd.f32 %v407, %v328
    %v424 = vadd.f32 %v408, %v328
    %v425 = vadd.f32 %v409, %v328
    %426 = vst.msk [vmem:[#allocation4 + $0x1] sm:$0xff] %vm68, %v410
    %427 = vst.msk [vmem:[#allocation4 + $0x11] sm:$0xff] %vm68, %v411
    %428 = vst.msk [vmem:[#allocation4 + $0x21] sm:$0xff] %vm68, %v412
    %429 = vst.msk [vmem:[#allocation4 + $0x31] sm:$0xff] %vm68, %v413
    %430 = vst.msk [vmem:[#allocation4 + $0x41] sm:$0xff] %vm68, %v414
    %431 = vst.msk [vmem:[#allocation4 + $0x51] sm:$0xff] %vm68, %v415
    %432 = vst.msk [vmem:[#allocation4 + $0x61] sm:$0xff] %vm68, %v416
    %433 = vst.msk [vmem:[#allocation4 + $0x71] sm:$0xff] %vm68, %v417
    %434 = vst.msk [vmem:[#allocation4 + $0xa1] sm:$0xff] %vm68, %v418
    %435 = vst.msk [vmem:[#allocation4 + $0xb1] sm:$0xff] %vm68, %v419
    %436 = vst.msk [vmem:[#allocation4 + $0xc1] sm:$0xff] %vm68, %v420
    %437 = vst.msk [vmem:[#allocation4 + $0xd1] sm:$0xff] %vm68, %v421
    %438 = vst.msk [vmem:[#allocation4 + $0xe1] sm:$0xff] %vm68, %v422
    %439 = vst.msk [vmem:[#allocation4 + $0xf1] sm:$0xff] %vm68, %v423
    %440 = vst.msk [vmem:[#allocation4 + $0x101] sm:$0xff] %vm68, %v424
    %441 = vst.msk [vmem:[#allocation4 + $0x111] sm:$0xff] %vm68, %v425
    %v442 = vld [vmem:[%s2] sm:$0xf]
    %v443 = vld [vmem:[%s2 + $0x4] sm:$0xf]
    %v444 = vld [vmem:[%s2 + $0x8] sm:$0xf]
    %v445 = vld [vmem:[%s2 + $0xc] sm:$0xf]
    %v446 = vld [vmem:[%s2 + $0x10] sm:$0xf]
    %v447 = vld [vmem:[%s2 + $0x14] sm:$0xf]
    %v448 = vld [vmem:[%s2 + $0x18] sm:$0xf]
    %v449 = vld [vmem:[%s2 + $0x1c] sm:$0xf]
    %v450 = vld [vmem:[%s2 + $0x20] sm:$0xf]
    %v451 = vld [vmem:[%s2 + $0x24] sm:$0xf]
    %v452 = vld [vmem:[%s2 + $0x28] sm:$0xf]
    %v453 = vld [vmem:[%s2 + $0x2c] sm:$0xf]
    %v454 = vld [vmem:[%s2 + $0x30] sm:$0xf]
    %v455 = vld [vmem:[%s2 + $0x34] sm:$0xf]
    %v456 = vld [vmem:[%s2 + $0x38] sm:$0xf]
    %v457 = vld [vmem:[%s2 + $0x3c] sm:$0xf]
    %v458 = vunpack.c.l.bf16 %v442
    %v459 = vunpack.c.l.bf16 %v443
    %v460 = vunpack.c.l.bf16 %v444
    %v461 = vunpack.c.l.bf16 %v445
    %v462 = vunpack.c.l.bf16 %v446
    %v463 = vunpack.c.l.bf16 %v447
    %v464 = vunpack.c.l.bf16 %v448
    %v465 = vunpack.c.l.bf16 %v449
    %v466 = vunpack.c.l.bf16 %v450
    %v467 = vunpack.c.l.bf16 %v451
    %v468 = vunpack.c.l.bf16 %v452
    %v469 = vunpack.c.l.bf16 %v453
    %v470 = vunpack.c.l.bf16 %v454
    %v471 = vunpack.c.l.bf16 %v455
    %v472 = vunpack.c.l.bf16 %v456
    %v473 = vunpack.c.l.bf16 %v457
    %v474 = vmul.f32 %v458, %v306
    %v475 = vmul.f32 %v459, %v306
    %v476 = vmul.f32 %v460, %v306
    %v477 = vmul.f32 %v461, %v306
    %v478 = vmul.f32 %v462, %v306
    %v479 = vmul.f32 %v463, %v306
    %v480 = vmul.f32 %v464, %v306
    %v481 = vmul.f32 %v465, %v306
    %v482 = vmul.f32 %v466, %v306
    %v483 = vmul.f32 %v467, %v306
    %v484 = vmul.f32 %v468, %v306
    %v485 = vmul.f32 %v469, %v306
    %v486 = vmul.f32 %v470, %v306
    %v487 = vmul.f32 %v471, %v306
    %v488 = vmul.f32 %v472, %v306
    %v489 = vmul.f32 %v473, %v306
    %v490 = vadd.f32 %v474, %v328
    %v491 = vadd.f32 %v475, %v328
    %v492 = vadd.f32 %v476, %v328
    %v493 = vadd.f32 %v477, %v328
    %v494 = vadd.f32 %v478, %v328
    %v495 = vadd.f32 %v479, %v328
    %v496 = vadd.f32 %v480, %v328
    %v497 = vadd.f32 %v481, %v328
    %v498 = vadd.f32 %v482, %v328
    %v499 = vadd.f32 %v483, %v328
    %v500 = vadd.f32 %v484, %v328
    %v501 = vadd.f32 %v485, %v328
    %v502 = vadd.f32 %v486, %v328
    %v503 = vadd.f32 %v487, %v328
    %v504 = vadd.f32 %v488, %v328
    %v505 = vadd.f32 %v489, %v328
    %s506 = scalar_lea.vmem [#allocation3], 16
    %507 = vst.msk [vmem:[%s506] sm:$0xff] %vm68, %v490
    %508 = vst.msk [vmem:[%s506 + $0x10] sm:$0xff] %vm68, %v491
    %509 = vst.msk [vmem:[%s506 + $0x20] sm:$0xff] %vm68, %v492
    %510 = vst.msk [vmem:[%s506 + $0x30] sm:$0xff] %vm68, %v493
    %511 = vst.msk [vmem:[%s506 + $0x40] sm:$0xff] %vm68, %v494
    %512 = vst.msk [vmem:[%s506 + $0x50] sm:$0xff] %vm68, %v495
    %513 = vst.msk [vmem:[%s506 + $0x60] sm:$0xff] %vm68, %v496
    %514 = vst.msk [vmem:[%s506 + $0x70] sm:$0xff] %vm68, %v497
    %515 = vst.msk [vmem:[%s506 + $0xa0] sm:$0xff] %vm68, %v498
    %516 = vst.msk [vmem:[%s506 + $0xb0] sm:$0xff] %vm68, %v499
    %517 = vst.msk [vmem:[%s506 + $0xc0] sm:$0xff] %vm68, %v500
    %518 = vst.msk [vmem:[%s506 + $0xd0] sm:$0xff] %vm68, %v501
    %519 = vst.msk [vmem:[%s506 + $0xe0] sm:$0xff] %vm68, %v502
    %520 = vst.msk [vmem:[%s506 + $0xf0] sm:$0xff] %vm68, %v503
    %521 = vst.msk [vmem:[%s506 + $0x100] sm:$0xff] %vm68, %v504
    %522 = vst.msk [vmem:[%s506 + $0x110] sm:$0xff] %vm68, %v505
    %v523 = vld [vmem:[%s3] sm:$0xf]
    %v524 = vld [vmem:[%s3 + $0x4] sm:$0xf]
    %v525 = vld [vmem:[%s3 + $0x8] sm:$0xf]
    %v526 = vld [vmem:[%s3 + $0xc] sm:$0xf]
    %v527 = vld [vmem:[%s3 + $0x10] sm:$0xf]
    %v528 = vld [vmem:[%s3 + $0x14] sm:$0xf]
    %v529 = vld [vmem:[%s3 + $0x18] sm:$0xf]
    %v530 = vld [vmem:[%s3 + $0x1c] sm:$0xf]
    %v531 = vld [vmem:[%s3 + $0x20] sm:$0xf]
    %v532 = vld [vmem:[%s3 + $0x24] sm:$0xf]
    %v533 = vld [vmem:[%s3 + $0x28] sm:$0xf]
    %v534 = vld [vmem:[%s3 + $0x2c] sm:$0xf]
    %v535 = vld [vmem:[%s3 + $0x30] sm:$0xf]
    %v536 = vld [vmem:[%s3 + $0x34] sm:$0xf]
    %v537 = vld [vmem:[%s3 + $0x38] sm:$0xf]
    %v538 = vld [vmem:[%s3 + $0x3c] sm:$0xf]
    %v539 = vunpack.c.l.bf16 %v523
    %v540 = vunpack.c.l.bf16 %v524
    %v541 = vunpack.c.l.bf16 %v525
    %v542 = vunpack.c.l.bf16 %v526
    %v543 = vunpack.c.l.bf16 %v527
    %v544 = vunpack.c.l.bf16 %v528
    %v545 = vunpack.c.l.bf16 %v529
    %v546 = vunpack.c.l.bf16 %v530
    %v547 = vunpack.c.l.bf16 %v531
    %v548 = vunpack.c.l.bf16 %v532
    %v549 = vunpack.c.l.bf16 %v533
    %v550 = vunpack.c.l.bf16 %v534
    %v551 = vunpack.c.l.bf16 %v535
    %v552 = vunpack.c.l.bf16 %v536
    %v553 = vunpack.c.l.bf16 %v537
    %v554 = vunpack.c.l.bf16 %v538
    %v555 = vmul.f32 %v539, %v306
    %v556 = vmul.f32 %v540, %v306
    %v557 = vmul.f32 %v541, %v306
    %v558 = vmul.f32 %v542, %v306
    %v559 = vmul.f32 %v543, %v306
    %v560 = vmul.f32 %v544, %v306
    %v561 = vmul.f32 %v545, %v306
    %v562 = vmul.f32 %v546, %v306
    %v563 = vmul.f32 %v547, %v306
    %v564 = vmul.f32 %v548, %v306
    %v565 = vmul.f32 %v549, %v306
    %v566 = vmul.f32 %v550, %v306
    %v567 = vmul.f32 %v551, %v306
    %v568 = vmul.f32 %v552, %v306
    %v569 = vmul.f32 %v553, %v306
    %v570 = vmul.f32 %v554, %v306
    %v571 = vadd.f32 %v555, %v328
    %v572 = vadd.f32 %v556, %v328
    %v573 = vadd.f32 %v557, %v328
    %v574 = vadd.f32 %v558, %v328
    %v575 = vadd.f32 %v559, %v328
    %v576 = vadd.f32 %v560, %v328
    %v577 = vadd.f32 %v561, %v328
    %v578 = vadd.f32 %v562, %v328
    %v579 = vadd.f32 %v563, %v328
    %v580 = vadd.f32 %v564, %v328
    %v581 = vadd.f32 %v565, %v328
    %v582 = vadd.f32 %v566, %v328
    %v583 = vadd.f32 %v567, %v328
    %v584 = vadd.f32 %v568, %v328
    %v585 = vadd.f32 %v569, %v328
    %v586 = vadd.f32 %v570, %v328
    %s587 = scalar_lea.vmem [#allocation2], 16
    %588 = vst.msk [vmem:[%s587 + $0x1] sm:$0xff] %vm68, %v571
    %589 = vst.msk [vmem:[%s587 + $0x11] sm:$0xff] %vm68, %v572
    %590 = vst.msk [vmem:[%s587 + $0x21] sm:$0xff] %vm68, %v573
    %591 = vst.msk [vmem:[%s587 + $0x31] sm:$0xff] %vm68, %v574
    %592 = vst.msk [vmem:[%s587 + $0x41] sm:$0xff] %vm68, %v575
    %593 = vst.msk [vmem:[%s587 + $0x51] sm:$0xff] %vm68, %v576
    %594 = vst.msk [vmem:[%s587 + $0x61] sm:$0xff] %vm68, %v577
    %595 = vst.msk [vmem:[%s587 + $0x71] sm:$0xff] %vm68, %v578
    %596 = vst.msk [vmem:[%s587 + $0xa1] sm:$0xff] %vm68, %v579
    %597 = vst.msk [vmem:[%s587 + $0xb1] sm:$0xff] %vm68, %v580
    %598 = vst.msk [vmem:[%s587 + $0xc1] sm:$0xff] %vm68, %v581
    %599 = vst.msk [vmem:[%s587 + $0xd1] sm:$0xff] %vm68, %v582
    %600 = vst.msk [vmem:[%s587 + $0xe1] sm:$0xff] %vm68, %v583
    %601 = vst.msk [vmem:[%s587 + $0xf1] sm:$0xff] %vm68, %v584
    %602 = vst.msk [vmem:[%s587 + $0x101] sm:$0xff] %vm68, %v585
    %603 = vst.msk [vmem:[%s587 + $0x111] sm:$0xff] %vm68, %v586
    %v604 = vld [vmem:[#allocation2] sm:$0xff]
    %v605 = vld [vmem:[#allocation2 + $0x10] sm:$0xff]
    %v606 = vld [vmem:[#allocation2 + $0x20] sm:$0xff]
    %v607 = vld [vmem:[#allocation2 + $0x30] sm:$0xff]
    %v608 = vld [vmem:[#allocation2 + $0x40] sm:$0xff]
    %v609 = vld [vmem:[#allocation2 + $0x50] sm:$0xff]
    %v610 = vld [vmem:[#allocation2 + $0x60] sm:$0xff]
    %v611 = vld [vmem:[#allocation2 + $0x70] sm:$0xff]
    %v612 = vld [vmem:[#allocation2 + $0xa0] sm:$0xff]
    %v613 = vld [vmem:[#allocation2 + $0xb0] sm:$0xff]
    %v614 = vld [vmem:[#allocation2 + $0xc0] sm:$0xff]
    %v615 = vld [vmem:[#allocation2 + $0xd0] sm:$0xff]
    %v616 = vld [vmem:[#allocation2 + $0xe0] sm:$0xff]
    %v617 = vld [vmem:[#allocation2 + $0xf0] sm:$0xff]
    %v618 = vld [vmem:[#allocation2 + $0x100] sm:$0xff]
    %v619 = vld [vmem:[#allocation2 + $0x110] sm:$0xff]
    %v620 = vld [vmem:[#allocation3] sm:$0xff]
    %v621 = vld [vmem:[#allocation3 + $0x10] sm:$0xff]
    %v622 = vld [vmem:[#allocation3 + $0x20] sm:$0xff]
    %v623 = vld [vmem:[#allocation3 + $0x30] sm:$0xff]
    %v624 = vld [vmem:[#allocation3 + $0x40] sm:$0xff]
    %v625 = vld [vmem:[#allocation3 + $0x50] sm:$0xff]
    %v626 = vld [vmem:[#allocation3 + $0x60] sm:$0xff]
    %v627 = vld [vmem:[#allocation3 + $0x70] sm:$0xff]
    %v628 = vld [vmem:[#allocation3 + $0xa0] sm:$0xff]
    %v629 = vld [vmem:[#allocation3 + $0xb0] sm:$0xff]
    %v630 = vld [vmem:[#allocation3 + $0xc0] sm:$0xff]
    %v631 = vld [vmem:[#allocation3 + $0xd0] sm:$0xff]
    %v632 = vld [vmem:[#allocation3 + $0xe0] sm:$0xff]
    %v633 = vld [vmem:[#allocation3 + $0xf0] sm:$0xff]
    %v634 = vld [vmem:[#allocation3 + $0x100] sm:$0xff]
    %v635 = vld [vmem:[#allocation3 + $0x110] sm:$0xff]
    %v636 = vld [vmem:[#allocation2 + $0x1] sm:$0xff]
    %v637 = vld [vmem:[#allocation2 + $0x11] sm:$0xff]
    %v638 = vld [vmem:[#allocation2 + $0x21] sm:$0xff]
    %v639 = vld [vmem:[#allocation2 + $0x31] sm:$0xff]
    %v640 = vld [vmem:[#allocation2 + $0x41] sm:$0xff]
    %v641 = vld [vmem:[#allocation2 + $0x51] sm:$0xff]
    %v642 = vld [vmem:[#allocation2 + $0x61] sm:$0xff]
    %v643 = vld [vmem:[#allocation2 + $0x71] sm:$0xff]
    %v644 = vld [vmem:[#allocation2 + $0xa1] sm:$0xff]
    %v645 = vld [vmem:[#allocation2 + $0xb1] sm:$0xff]
    %v646 = vld [vmem:[#allocation2 + $0xc1] sm:$0xff]
    %v647 = vld [vmem:[#allocation2 + $0xd1] sm:$0xff]
    %v648 = vld [vmem:[#allocation2 + $0xe1] sm:$0xff]
    %v649 = vld [vmem:[#allocation2 + $0xf1] sm:$0xff]
    %v650 = vld [vmem:[#allocation2 + $0x101] sm:$0xff]
    %v651 = vld [vmem:[#allocation2 + $0x111] sm:$0xff]
    %v652 = vld [vmem:[#allocation4] sm:$0xff]
    %v653 = vld [vmem:[#allocation4 + $0x10] sm:$0xff]
    %v654 = vld [vmem:[#allocation4 + $0x20] sm:$0xff]
    %v655 = vld [vmem:[#allocation4 + $0x30] sm:$0xff]
    %v656 = vld [vmem:[#allocation4 + $0x40] sm:$0xff]
    %v657 = vld [vmem:[#allocation4 + $0x50] sm:$0xff]
    %v658 = vld [vmem:[#allocation4 + $0x60] sm:$0xff]
    %v659 = vld [vmem:[#allocation4 + $0x70] sm:$0xff]
    %v660 = vld [vmem:[#allocation4 + $0xa0] sm:$0xff]
    %v661 = vld [vmem:[#allocation4 + $0xb0] sm:$0xff]
    %v662 = vld [vmem:[#allocation4 + $0xc0] sm:$0xff]
    %v663 = vld [vmem:[#allocation4 + $0xd0] sm:$0xff]
    %v664 = vld [vmem:[#allocation4 + $0xe0] sm:$0xff]
    %v665 = vld [vmem:[#allocation4 + $0xf0] sm:$0xff]
    %v666 = vld [vmem:[#allocation4 + $0x100] sm:$0xff]
    %v667 = vld [vmem:[#allocation4 + $0x110] sm:$0xff]
    %v668 = vld [vmem:[#allocation5] sm:$0xff]
    %v669 = vld [vmem:[#allocation5 + $0x10] sm:$0xff]
    %v670 = vld [vmem:[#allocation5 + $0x20] sm:$0xff]
    %v671 = vld [vmem:[#allocation5 + $0x30] sm:$0xff]
    %v672 = vld [vmem:[#allocation5 + $0x40] sm:$0xff]
    %v673 = vld [vmem:[#allocation5 + $0x50] sm:$0xff]
    %v674 = vld [vmem:[#allocation5 + $0x60] sm:$0xff]
    %v675 = vld [vmem:[#allocation5 + $0x70] sm:$0xff]
    %v676 = vld [vmem:[#allocation5 + $0xa0] sm:$0xff]
    %v677 = vld [vmem:[#allocation5 + $0xb0] sm:$0xff]
    %v678 = vld [vmem:[#allocation5 + $0xc0] sm:$0xff]
    %v679 = vld [vmem:[#allocation5 + $0xd0] sm:$0xff]
    %v680 = vld [vmem:[#allocation5 + $0xe0] sm:$0xff]
    %v681 = vld [vmem:[#allocation5 + $0xf0] sm:$0xff]
    %v682 = vld [vmem:[#allocation5 + $0x100] sm:$0xff]
    %v683 = vld [vmem:[#allocation5 + $0x110] sm:$0xff]
    %v684 = vld [vmem:[#allocation4 + $0x1] sm:$0xff]
    %v685 = vld [vmem:[#allocation4 + $0x11] sm:$0xff]
    %v686 = vld [vmem:[#allocation4 + $0x21] sm:$0xff]
    %v687 = vld [vmem:[#allocation4 + $0x31] sm:$0xff]
    %v688 = vld [vmem:[#allocation4 + $0x41] sm:$0xff]
    %v689 = vld [vmem:[#allocation4 + $0x51] sm:$0xff]
    %v690 = vld [vmem:[#allocation4 + $0x61] sm:$0xff]
    %v691 = vld [vmem:[#allocation4 + $0x71] sm:$0xff]
    %v692 = vld [vmem:[#allocation4 + $0xa1] sm:$0xff]
    %v693 = vld [vmem:[#allocation4 + $0xb1] sm:$0xff]
    %v694 = vld [vmem:[#allocation4 + $0xc1] sm:$0xff]
    %v695 = vld [vmem:[#allocation4 + $0xd1] sm:$0xff]
    %v696 = vld [vmem:[#allocation4 + $0xe1] sm:$0xff]
    %v697 = vld [vmem:[#allocation4 + $0xf1] sm:$0xff]
    %v698 = vld [vmem:[#allocation4 + $0x101] sm:$0xff]
    %v699 = vld [vmem:[#allocation4 + $0x111] sm:$0xff]
    %v700 = vld [vmem:[%s587] sm:$0xff]
    %v701 = vld [vmem:[%s587 + $0x10] sm:$0xff]
    %v702 = vld [vmem:[%s587 + $0x20] sm:$0xff]
    %v703 = vld [vmem:[%s587 + $0x30] sm:$0xff]
    %v704 = vld [vmem:[%s587 + $0x40] sm:$0xff]
    %v705 = vld [vmem:[%s587 + $0x50] sm:$0xff]
    %v706 = vld [vmem:[%s587 + $0x60] sm:$0xff]
    %v707 = vld [vmem:[%s587 + $0x70] sm:$0xff]
    %v708 = vld [vmem:[%s587 + $0xa0] sm:$0xff]
    %v709 = vld [vmem:[%s587 + $0xb0] sm:$0xff]
    %v710 = vld [vmem:[%s587 + $0xc0] sm:$0xff]
    %v711 = vld [vmem:[%s587 + $0xd0] sm:$0xff]
    %v712 = vld [vmem:[%s587 + $0xe0] sm:$0xff]
    %v713 = vld [vmem:[%s587 + $0xf0] sm:$0xff]
    %v714 = vld [vmem:[%s587 + $0x100] sm:$0xff]
    %v715 = vld [vmem:[%s587 + $0x110] sm:$0xff]
    %v716 = vld [vmem:[%s506] sm:$0xff]
    %v717 = vld [vmem:[%s506 + $0x10] sm:$0xff]
    %v718 = vld [vmem:[%s506 + $0x20] sm:$0xff]
    %v719 = vld [vmem:[%s506 + $0x30] sm:$0xff]
    %v720 = vld [vmem:[%s506 + $0x40] sm:$0xff]
    %v721 = vld [vmem:[%s506 + $0x50] sm:$0xff]
    %v722 = vld [vmem:[%s506 + $0x60] sm:$0xff]
    %v723 = vld [vmem:[%s506 + $0x70] sm:$0xff]
    %v724 = vld [vmem:[%s506 + $0xa0] sm:$0xff]
    %v725 = vld [vmem:[%s506 + $0xb0] sm:$0xff]
    %v726 = vld [vmem:[%s506 + $0xc0] sm:$0xff]
    %v727 = vld [vmem:[%s506 + $0xd0] sm:$0xff]
    %v728 = vld [vmem:[%s506 + $0xe0] sm:$0xff]
    %v729 = vld [vmem:[%s506 + $0xf0] sm:$0xff]
    %v730 = vld [vmem:[%s506 + $0x100] sm:$0xff]
    %v731 = vld [vmem:[%s506 + $0x110] sm:$0xff]
    %v732 = vld [vmem:[%s587 + $0x1] sm:$0xff]
    %v733 = vld [vmem:[%s587 + $0x11] sm:$0xff]
    %v734 = vld [vmem:[%s587 + $0x21] sm:$0xff]
    %v735 = vld [vmem:[%s587 + $0x31] sm:$0xff]
    %v736 = vld [vmem:[%s587 + $0x41] sm:$0xff]
    %v737 = vld [vmem:[%s587 + $0x51] sm:$0xff]
    %v738 = vld [vmem:[%s587 + $0x61] sm:$0xff]
    %v739 = vld [vmem:[%s587 + $0x71] sm:$0xff]
    %v740 = vld [vmem:[%s587 + $0xa1] sm:$0xff]
    %v741 = vld [vmem:[%s587 + $0xb1] sm:$0xff]
    %v742 = vld [vmem:[%s587 + $0xc1] sm:$0xff]
    %v743 = vld [vmem:[%s587 + $0xd1] sm:$0xff]
    %v744 = vld [vmem:[%s587 + $0xe1] sm:$0xff]
    %v745 = vld [vmem:[%s587 + $0xf1] sm:$0xff]
    %v746 = vld [vmem:[%s587 + $0x101] sm:$0xff]
    %v747 = vld [vmem:[%s587 + $0x111] sm:$0xff]
    %764 = vrot.lane.b32.xlu0 %v620, 4
    %v765 = vpop.permute.xlu0 %764
    %766 = vrot.lane.b32.xlu0 %v621, 4
    %v767 = vpop.permute.xlu0 %766
    %768 = vrot.lane.b32.xlu0 %v622, 4
    %v769 = vpop.permute.xlu0 %768
    %770 = vrot.lane.b32.xlu0 %v623, 4
    %v771 = vpop.permute.xlu0 %770
    %772 = vrot.lane.b32.xlu0 %v624, 4
    %v773 = vpop.permute.xlu0 %772
    %774 = vrot.lane.b32.xlu0 %v625, 4
    %v775 = vpop.permute.xlu0 %774
    %776 = vrot.lane.b32.xlu0 %v626, 4
    %v777 = vpop.permute.xlu0 %776
    %778 = vrot.lane.b32.xlu0 %v627, 4
    %v779 = vpop.permute.xlu0 %778
    %780 = vrot.lane.b32.xlu0 %v628, 4
    %v781 = vpop.permute.xlu0 %780
    %782 = vrot.lane.b32.xlu0 %v629, 4
    %v783 = vpop.permute.xlu0 %782
    %784 = vrot.lane.b32.xlu0 %v630, 4
    %v785 = vpop.permute.xlu0 %784
    %786 = vrot.lane.b32.xlu0 %v631, 4
    %v787 = vpop.permute.xlu0 %786
    %788 = vrot.lane.b32.xlu0 %v632, 4
    %v789 = vpop.permute.xlu0 %788
    %790 = vrot.lane.b32.xlu0 %v633, 4
    %v791 = vpop.permute.xlu0 %790
    %792 = vrot.lane.b32.xlu0 %v634, 4
    %v793 = vpop.permute.xlu0 %792
    %794 = vrot.lane.b32.xlu0 %v635, 4
    %v795 = vpop.permute.xlu0 %794
    %828 = vrot.lane.b32.xlu0 %v636, 8
    %v829 = vpop.permute.xlu0 %828
    %830 = vrot.lane.b32.xlu0 %v637, 8
    %v831 = vpop.permute.xlu0 %830
    %832 = vrot.lane.b32.xlu0 %v638, 8
    %v833 = vpop.permute.xlu0 %832
    %834 = vrot.lane.b32.xlu0 %v639, 8
    %v835 = vpop.permute.xlu0 %834
    %836 = vrot.lane.b32.xlu0 %v640, 8
    %v837 = vpop.permute.xlu0 %836
    %838 = vrot.lane.b32.xlu0 %v641, 8
    %v839 = vpop.permute.xlu0 %838
    %840 = vrot.lane.b32.xlu0 %v642, 8
    %v841 = vpop.permute.xlu0 %840
    %842 = vrot.lane.b32.xlu0 %v643, 8
    %v843 = vpop.permute.xlu0 %842
    %844 = vrot.lane.b32.xlu0 %v644, 8
    %v845 = vpop.permute.xlu0 %844
    %846 = vrot.lane.b32.xlu0 %v645, 8
    %v847 = vpop.permute.xlu0 %846
    %848 = vrot.lane.b32.xlu0 %v646, 8
    %v849 = vpop.permute.xlu0 %848
    %850 = vrot.lane.b32.xlu0 %v647, 8
    %v851 = vpop.permute.xlu0 %850
    %852 = vrot.lane.b32.xlu0 %v648, 8
    %v853 = vpop.permute.xlu0 %852
    %854 = vrot.lane.b32.xlu0 %v649, 8
    %v855 = vpop.permute.xlu0 %854
    %856 = vrot.lane.b32.xlu0 %v650, 8
    %v857 = vpop.permute.xlu0 %856
    %858 = vrot.lane.b32.xlu0 %v651, 8
    %v859 = vpop.permute.xlu0 %858
    %892 = vrot.lane.b32.xlu0 %v652, 12
    %v893 = vpop.permute.xlu0 %892
    %894 = vrot.lane.b32.xlu0 %v653, 12
    %v895 = vpop.permute.xlu0 %894
    %896 = vrot.lane.b32.xlu0 %v654, 12
    %v897 = vpop.permute.xlu0 %896
    %898 = vrot.lane.b32.xlu0 %v655, 12
    %v899 = vpop.permute.xlu0 %898
    %900 = vrot.lane.b32.xlu0 %v656, 12
    %v901 = vpop.permute.xlu0 %900
    %902 = vrot.lane.b32.xlu0 %v657, 12
    %v903 = vpop.permute.xlu0 %902
    %904 = vrot.lane.b32.xlu0 %v658, 12
    %v905 = vpop.permute.xlu0 %904
    %906 = vrot.lane.b32.xlu0 %v659, 12
    %v907 = vpop.permute.xlu0 %906
    %908 = vrot.lane.b32.xlu0 %v660, 12
    %v909 = vpop.permute.xlu0 %908
    %910 = vrot.lane.b32.xlu0 %v661, 12
    %v911 = vpop.permute.xlu0 %910
    %912 = vrot.lane.b32.xlu0 %v662, 12
    %v913 = vpop.permute.xlu0 %912
    %914 = vrot.lane.b32.xlu0 %v663, 12
    %v915 = vpop.permute.xlu0 %914
    %916 = vrot.lane.b32.xlu0 %v664, 12
    %v917 = vpop.permute.xlu0 %916
    %918 = vrot.lane.b32.xlu0 %v665, 12
    %v919 = vpop.permute.xlu0 %918
    %920 = vrot.lane.b32.xlu0 %v666, 12
    %v921 = vpop.permute.xlu0 %920
    %922 = vrot.lane.b32.xlu0 %v667, 12
    %v923 = vpop.permute.xlu0 %922
    %956 = vrot.lane.b32.xlu0 %v668, 16
    %v957 = vpop.permute.xlu0 %956
    %958 = vrot.lane.b32.xlu0 %v669, 16
    %v959 = vpop.permute.xlu0 %958
    %960 = vrot.lane.b32.xlu0 %v670, 16
    %v961 = vpop.permute.xlu0 %960
    %962 = vrot.lane.b32.xlu0 %v671, 16
    %v963 = vpop.permute.xlu0 %962
    %964 = vrot.lane.b32.xlu0 %v672, 16
    %v965 = vpop.permute.xlu0 %964
    %966 = vrot.lane.b32.xlu0 %v673, 16
    %v967 = vpop.permute.xlu0 %966
    %968 = vrot.lane.b32.xlu0 %v674, 16
    %v969 = vpop.permute.xlu0 %968
    %970 = vrot.lane.b32.xlu0 %v675, 16
    %v971 = vpop.permute.xlu0 %970
    %972 = vrot.lane.b32.xlu0 %v676, 16
    %v973 = vpop.permute.xlu0 %972
    %974 = vrot.lane.b32.xlu0 %v677, 16
    %v975 = vpop.permute.xlu0 %974
    %976 = vrot.lane.b32.xlu0 %v678, 16
    %v977 = vpop.permute.xlu0 %976
    %978 = vrot.lane.b32.xlu0 %v679, 16
    %v979 = vpop.permute.xlu0 %978
    %980 = vrot.lane.b32.xlu0 %v680, 16
    %v981 = vpop.permute.xlu0 %980
    %982 = vrot.lane.b32.xlu0 %v681, 16
    %v983 = vpop.permute.xlu0 %982
    %984 = vrot.lane.b32.xlu0 %v682, 16
    %v985 = vpop.permute.xlu0 %984
    %986 = vrot.lane.b32.xlu0 %v683, 16
    %v987 = vpop.permute.xlu0 %986
    %1020 = vrot.lane.b32.xlu0 %v684, 20
    %v1021 = vpop.permute.xlu0 %1020
    %1022 = vrot.lane.b32.xlu0 %v685, 20
    %v1023 = vpop.permute.xlu0 %1022
    %1024 = vrot.lane.b32.xlu0 %v686, 20
    %v1025 = vpop.permute.xlu0 %1024
    %1026 = vrot.lane.b32.xlu0 %v687, 20
    %v1027 = vpop.permute.xlu0 %1026
    %1028 = vrot.lane.b32.xlu0 %v688, 20
    %v1029 = vpop.permute.xlu0 %1028
    %1030 = vrot.lane.b32.xlu0 %v689, 20
    %v1031 = vpop.permute.xlu0 %1030
    %1032 = vrot.lane.b32.xlu0 %v690, 20
    %v1033 = vpop.permute.xlu0 %1032
    %1034 = vrot.lane.b32.xlu0 %v691, 20
    %v1035 = vpop.permute.xlu0 %1034
    %1036 = vrot.lane.b32.xlu0 %v692, 20
    %v1037 = vpop.permute.xlu0 %1036
    %1038 = vrot.lane.b32.xlu0 %v693, 20
    %v1039 = vpop.permute.xlu0 %1038
    %1040 = vrot.lane.b32.xlu0 %v694, 20
    %v1041 = vpop.permute.xlu0 %1040
    %1042 = vrot.lane.b32.xlu0 %v695, 20
    %v1043 = vpop.permute.xlu0 %1042
    %1044 = vrot.lane.b32.xlu0 %v696, 20
    %v1045 = vpop.permute.xlu0 %1044
    %1046 = vrot.lane.b32.xlu0 %v697, 20
    %v1047 = vpop.permute.xlu0 %1046
    %1048 = vrot.lane.b32.xlu0 %v698, 20
    %v1049 = vpop.permute.xlu0 %1048
    %1050 = vrot.lane.b32.xlu0 %v699, 20
    %v1051 = vpop.permute.xlu0 %1050
    %1084 = vrot.lane.b32.xlu0 %v700, 24
    %v1085 = vpop.permute.xlu0 %1084
    %1086 = vrot.lane.b32.xlu0 %v701, 24
    %v1087 = vpop.permute.xlu0 %1086
    %1088 = vrot.lane.b32.xlu0 %v702, 24
    %v1089 = vpop.permute.xlu0 %1088
    %1090 = vrot.lane.b32.xlu0 %v703, 24
    %v1091 = vpop.permute.xlu0 %1090
    %1092 = vrot.lane.b32.xlu0 %v704, 24
    %v1093 = vpop.permute.xlu0 %1092
    %1094 = vrot.lane.b32.xlu0 %v705, 24
    %v1095 = vpop.permute.xlu0 %1094
    %1096 = vrot.lane.b32.xlu0 %v706, 24
    %v1097 = vpop.permute.xlu0 %1096
    %1098 = vrot.lane.b32.xlu0 %v707, 24
    %v1099 = vpop.permute.xlu0 %1098
    %1100 = vrot.lane.b32.xlu0 %v708, 24
    %v1101 = vpop.permute.xlu0 %1100
    %1102 = vrot.lane.b32.xlu0 %v709, 24
    %v1103 = vpop.permute.xlu0 %1102
    %1104 = vrot.lane.b32.xlu0 %v710, 24
    %v1105 = vpop.permute.xlu0 %1104
    %1106 = vrot.lane.b32.xlu0 %v711, 24
    %v1107 = vpop.permute.xlu0 %1106
    %1108 = vrot.lane.b32.xlu0 %v712, 24
    %v1109 = vpop.permute.xlu0 %1108
    %1110 = vrot.lane.b32.xlu0 %v713, 24
    %v1111 = vpop.permute.xlu0 %1110
    %1112 = vrot.lane.b32.xlu0 %v714, 24
    %v1113 = vpop.permute.xlu0 %1112
    %1114 = vrot.lane.b32.xlu0 %v715, 24
    %v1115 = vpop.permute.xlu0 %1114
    %1148 = vrot.lane.b32.xlu0 %v716, 28
    %v1149 = vpop.permute.xlu0 %1148
    %1150 = vrot.lane.b32.xlu0 %v717, 28
    %v1151 = vpop.permute.xlu0 %1150
    %1152 = vrot.lane.b32.xlu0 %v718, 28
    %v1153 = vpop.permute.xlu0 %1152
    %1154 = vrot.lane.b32.xlu0 %v719, 28
    %v1155 = vpop.permute.xlu0 %1154
    %1156 = vrot.lane.b32.xlu0 %v720, 28
    %v1157 = vpop.permute.xlu0 %1156
    %1158 = vrot.lane.b32.xlu0 %v721, 28
    %v1159 = vpop.permute.xlu0 %1158
    %1160 = vrot.lane.b32.xlu0 %v722, 28
    %v1161 = vpop.permute.xlu0 %1160
    %1162 = vrot.lane.b32.xlu0 %v723, 28
    %v1163 = vpop.permute.xlu0 %1162
    %1164 = vrot.lane.b32.xlu0 %v724, 28
    %v1165 = vpop.permute.xlu0 %1164
    %1166 = vrot.lane.b32.xlu0 %v725, 28
    %v1167 = vpop.permute.xlu0 %1166
    %1168 = vrot.lane.b32.xlu0 %v726, 28
    %v1169 = vpop.permute.xlu0 %1168
    %1170 = vrot.lane.b32.xlu0 %v727, 28
    %v1171 = vpop.permute.xlu0 %1170
    %1172 = vrot.lane.b32.xlu0 %v728, 28
    %v1173 = vpop.permute.xlu0 %1172
    %1174 = vrot.lane.b32.xlu0 %v729, 28
    %v1175 = vpop.permute.xlu0 %1174
    %1176 = vrot.lane.b32.xlu0 %v730, 28
    %v1177 = vpop.permute.xlu0 %1176
    %1178 = vrot.lane.b32.xlu0 %v731, 28
    %v1179 = vpop.permute.xlu0 %1178
    %1212 = vrot.lane.b32.xlu0 %v732, 32
    %v1213 = vpop.permute.xlu0 %1212
    %1214 = vrot.lane.b32.xlu0 %v733, 32
    %v1215 = vpop.permute.xlu0 %1214
    %1216 = vrot.lane.b32.xlu0 %v734, 32
    %v1217 = vpop.permute.xlu0 %1216
    %1218 = vrot.lane.b32.xlu0 %v735, 32
    %v1219 = vpop.permute.xlu0 %1218
    %1220 = vrot.lane.b32.xlu0 %v736, 32
    %v1221 = vpop.permute.xlu0 %1220
    %1222 = vrot.lane.b32.xlu0 %v737, 32
    %v1223 = vpop.permute.xlu0 %1222
    %1224 = vrot.lane.b32.xlu0 %v738, 32
    %v1225 = vpop.permute.xlu0 %1224
    %1226 = vrot.lane.b32.xlu0 %v739, 32
    %v1227 = vpop.permute.xlu0 %1226
    %1228 = vrot.lane.b32.xlu0 %v740, 32
    %v1229 = vpop.permute.xlu0 %1228
    %1230 = vrot.lane.b32.xlu0 %v741, 32
    %v1231 = vpop.permute.xlu0 %1230
    %1232 = vrot.lane.b32.xlu0 %v742, 32
    %v1233 = vpop.permute.xlu0 %1232
    %1234 = vrot.lane.b32.xlu0 %v743, 32
    %v1235 = vpop.permute.xlu0 %1234
    %1236 = vrot.lane.b32.xlu0 %v744, 32
    %v1237 = vpop.permute.xlu0 %1236
    %1238 = vrot.lane.b32.xlu0 %v745, 32
    %v1239 = vpop.permute.xlu0 %1238
    %1240 = vrot.lane.b32.xlu0 %v746, 32
    %v1241 = vpop.permute.xlu0 %1240
    %1242 = vrot.lane.b32.xlu0 %v747, 32
    %v1243 = vpop.permute.xlu0 %1242
    %v1260 = vsel %vm68, %v604, %v765
    %v1261 = vsel %vm68, %v605, %v767
    %v1262 = vsel %vm68, %v606, %v769
    %v1263 = vsel %vm68, %v607, %v771
    %v1264 = vsel %vm68, %v608, %v773
    %v1265 = vsel %vm68, %v609, %v775
    %v1266 = vsel %vm68, %v610, %v777
    %v1267 = vsel %vm68, %v611, %v779
    %v1268 = vsel %vm68, %v612, %v781
    %v1269 = vsel %vm68, %v613, %v783
    %v1270 = vsel %vm68, %v614, %v785
    %v1271 = vsel %vm68, %v615, %v787
    %v1272 = vsel %vm68, %v616, %v789
    %v1273 = vsel %vm68, %v617, %v791
    %v1274 = vsel %vm68, %v618, %v793
    %v1275 = vsel %vm68, %v619, %v795
    %v1276 = vsel %vm74, %v1260, %v829
    %v1277 = vsel %vm74, %v1261, %v831
    %v1278 = vsel %vm74, %v1262, %v833
    %v1279 = vsel %vm74, %v1263, %v835
    %v1280 = vsel %vm74, %v1264, %v837
    %v1281 = vsel %vm74, %v1265, %v839
    %v1282 = vsel %vm74, %v1266, %v841
    %v1283 = vsel %vm74, %v1267, %v843
    %v1284 = vsel %vm74, %v1268, %v845
    %v1285 = vsel %vm74, %v1269, %v847
    %v1286 = vsel %vm74, %v1270, %v849
    %v1287 = vsel %vm74, %v1271, %v851
    %v1288 = vsel %vm74, %v1272, %v853
    %v1289 = vsel %vm74, %v1273, %v855
    %v1290 = vsel %vm74, %v1274, %v857
    %v1291 = vsel %vm74, %v1275, %v859
    %vm1292 = vcmask 97280
    %v1293 = vsel %vm1292, %v1276, %v893
    %v1294 = vsel %vm1292, %v1277, %v895
    %v1295 = vsel %vm1292, %v1278, %v897
    %v1296 = vsel %vm1292, %v1279, %v899
    %v1297 = vsel %vm1292, %v1280, %v901
    %v1298 = vsel %vm1292, %v1281, %v903
    %v1299 = vsel %vm1292, %v1282, %v905
    %v1300 = vsel %vm1292, %v1283, %v907
    %v1301 = vsel %vm1292, %v1284, %v909
    %v1302 = vsel %vm1292, %v1285, %v911
    %v1303 = vsel %vm1292, %v1286, %v913
    %v1304 = vsel %vm1292, %v1287, %v915
    %v1305 = vsel %vm1292, %v1288, %v917
    %v1306 = vsel %vm1292, %v1289, %v919
    %v1307 = vsel %vm1292, %v1290, %v921
    %v1308 = vsel %vm1292, %v1291, %v923
    %vm1309 = vcmask 130048
    %v1310 = vsel %vm1309, %v1293, %v957
    %v1311 = vsel %vm1309, %v1294, %v959
    %v1312 = vsel %vm1309, %v1295, %v961
    %v1313 = vsel %vm1309, %v1296, %v963
    %v1314 = vsel %vm1309, %v1297, %v965
    %v1315 = vsel %vm1309, %v1298, %v967
    %v1316 = vsel %vm1309, %v1299, %v969
    %v1317 = vsel %vm1309, %v1300, %v971
    %v1318 = vsel %vm1309, %v1301, %v973
    %v1319 = vsel %vm1309, %v1302, %v975
    %v1320 = vsel %vm1309, %v1303, %v977
    %v1321 = vsel %vm1309, %v1304, %v979
    %v1322 = vsel %vm1309, %v1305, %v981
    %v1323 = vsel %vm1309, %v1306, %v983
    %v1324 = vsel %vm1309, %v1307, %v985
    %v1325 = vsel %vm1309, %v1308, %v987
    %vm1326 = vcmask 162816
    %v1327 = vsel %vm1326, %v1310, %v1021
    %v1328 = vsel %vm1326, %v1311, %v1023
    %v1329 = vsel %vm1326, %v1312, %v1025
    %v1330 = vsel %vm1326, %v1313, %v1027
    %v1331 = vsel %vm1326, %v1314, %v1029
    %v1332 = vsel %vm1326, %v1315, %v1031
    %v1333 = vsel %vm1326, %v1316, %v1033
    %v1334 = vsel %vm1326, %v1317, %v1035
    %v1335 = vsel %vm1326, %v1318, %v1037
    %v1336 = vsel %vm1326, %v1319, %v1039
    %v1337 = vsel %vm1326, %v1320, %v1041
    %v1338 = vsel %vm1326, %v1321, %v1043
    %v1339 = vsel %vm1326, %v1322, %v1045
    %v1340 = vsel %vm1326, %v1323, %v1047
    %v1341 = vsel %vm1326, %v1324, %v1049
    %v1342 = vsel %vm1326, %v1325, %v1051
    %vm1343 = vcmask 195584
    %v1344 = vsel %vm1343, %v1327, %v1085
    %v1345 = vsel %vm1343, %v1328, %v1087
    %v1346 = vsel %vm1343, %v1329, %v1089
    %v1347 = vsel %vm1343, %v1330, %v1091
    %v1348 = vsel %vm1343, %v1331, %v1093
    %v1349 = vsel %vm1343, %v1332, %v1095
    %v1350 = vsel %vm1343, %v1333, %v1097
    %v1351 = vsel %vm1343, %v1334, %v1099
    %v1352 = vsel %vm1343, %v1335, %v1101
    %v1353 = vsel %vm1343, %v1336, %v1103
    %v1354 = vsel %vm1343, %v1337, %v1105
    %v1355 = vsel %vm1343, %v1338, %v1107
    %v1356 = vsel %vm1343, %v1339, %v1109
    %v1357 = vsel %vm1343, %v1340, %v1111
    %v1358 = vsel %vm1343, %v1341, %v1113
    %v1359 = vsel %vm1343, %v1342, %v1115
    %vm1360 = vcmask 228352
    %v1361 = vsel %vm1360, %v1344, %v1149
    %v1362 = vsel %vm1360, %v1345, %v1151
    %v1363 = vsel %vm1360, %v1346, %v1153
    %v1364 = vsel %vm1360, %v1347, %v1155
    %v1365 = vsel %vm1360, %v1348, %v1157
    %v1366 = vsel %vm1360, %v1349, %v1159
    %v1367 = vsel %vm1360, %v1350, %v1161
    %v1368 = vsel %vm1360, %v1351, %v1163
    %v1369 = vsel %vm1360, %v1352, %v1165
    %v1370 = vsel %vm1360, %v1353, %v1167
    %v1371 = vsel %vm1360, %v1354, %v1169
    %v1372 = vsel %vm1360, %v1355, %v1171
    %v1373 = vsel %vm1360, %v1356, %v1173
    %v1374 = vsel %vm1360, %v1357, %v1175
    %v1375 = vsel %vm1360, %v1358, %v1177
    %v1376 = vsel %vm1360, %v1359, %v1179
    %vm1377 = vcmask 261120
    %v1378 = vsel %vm1377, %v1361, %v1213
    %v1379 = vsel %vm1377, %v1362, %v1215
    %v1380 = vsel %vm1377, %v1363, %v1217
    %v1381 = vsel %vm1377, %v1364, %v1219
    %v1382 = vsel %vm1377, %v1365, %v1221
    %v1383 = vsel %vm1377, %v1366, %v1223
    %v1384 = vsel %vm1377, %v1367, %v1225
    %v1385 = vsel %vm1377, %v1368, %v1227
    %v1386 = vsel %vm1377, %v1369, %v1229
    %v1387 = vsel %vm1377, %v1370, %v1231
    %v1388 = vsel %vm1377, %v1371, %v1233
    %v1389 = vsel %vm1377, %v1372, %v1235
    %v1390 = vsel %vm1377, %v1373, %v1237
    %v1391 = vsel %vm1377, %v1374, %v1239
    %v1392 = vsel %vm1377, %v1375, %v1241
    %v1393 = vsel %vm1377, %v1376, %v1243
    %v1394 = vpack.c.bf16 %v1379, %v1378
    %v1395 = vpack.c.bf16 %v1381, %v1380
    %v1396 = vpack.c.bf16 %v1383, %v1382
    %v1397 = vpack.c.bf16 %v1385, %v1384
    %v1398 = vpack.c.bf16 %v1387, %v1386
    %v1399 = vpack.c.bf16 %v1389, %v1388
    %v1400 = vpack.c.bf16 %v1391, %v1390
    %v1401 = vpack.c.bf16 %v1393, %v1392
    %v1407 = vunpack.c.l.b16 %v49
    %v1408 = vunpack.c.l.b16 %v50
    %v1409 = vunpack.c.l.b16 %v51
    %v1410 = vunpack.c.l.b16 %v52
    %v1411 = vunpack.c.l.b16 %v53
    %v1412 = vpack.c.b16 %v1408, %v1407
    %v1413 = vpack.c.b16 %v1410, %v1409
    %v1414 = vpack.c.b16 %v1411, %v1411
    %vm1417 = vcmask 293888
    %v1419 = vsel %vm1417, %v1394, 0
    %v1422 = vsel %vm1417, %v1395, 0
    %v1425 = vsel %vm1417, %v1396, 0
    %v1428 = vsel %vm1417, %v1397, 0
    %v1431 = vsel %vm1417, %v1398, 0
    %v1434 = vsel %vm1417, %v1399, 0
    %v1437 = vsel %vm1417, %v1400, 0
    %v1440 = vsel %vm1417, %v1401, 0
    %vm1442 = vcmask 1041408
    %v1444 = vsel %vm1442, %v1414, 0
    %1446 = vmatprep.subr.bf16.mxu0 0
    %1447 = vmatpush1.bf16.msra.mxu0 %v1412
    %1448 = vmatprep.subr.bf16.mxu0 0
    %1449 = vmatpush1.bf16.msra.mxu0 %v1413
    %1450 = vmatprep.subr.bf16.mxu0 0
    %1451 = vmatpush1.bf16.msra.mxu0 %v1444
    %1452 = vmatprep.subr.bf16.mxu0 0
    %1453 = vmatpush1.bf16.msra.mxu0 0
    %1454 = vmatprep.subr.bf16.mxu0 0
    %1455 = vmatpush1.bf16.msra.mxu0 0
    %1456 = vmatprep.subr.bf16.mxu0 0
    %1457 = vmatpush1.bf16.msra.mxu0 0
    %1458 = vmatprep.subr.bf16.mxu0 0
    %1459 = vmatpush1.bf16.msra.mxu0 0
    %1460 = vmatprep.subr.bf16.mxu0 0
    %1461 = vmatpush1.bf16.msra.mxu0 0
    %1462 = vmatprep.subr.bf16.mxu0 0
    %1463 = vmatpush1.bf16.msra.mxu0 0
    %1464 = vmatprep.subr.bf16.mxu0 0
    %1465 = vmatpush1.bf16.msra.mxu0 0
    %1466 = vmatprep.subr.bf16.mxu0 0
    %1467 = vmatpush1.bf16.msra.mxu0 0
    %1468 = vmatprep.subr.bf16.mxu0 0
    %1469 = vmatpush1.bf16.msra.mxu0 0
    %1470 = vmatprep.subr.bf16.mxu0 0
    %1471 = vmatpush1.bf16.msra.mxu0 0
    %1472 = vmatprep.subr.bf16.mxu0 0
    %1473 = vmatpush1.bf16.msra.mxu0 0
    %1474 = vmatprep.subr.bf16.mxu0 0
    %1475 = vmatpush1.bf16.msra.mxu0 0
    %1476 = vmatprep.subr.bf16.mxu0 0
    %1477 = vmatpush1.bf16.msra.mxu0 0
    %1478 = vmatprep.mubr.bf16.mxu0 0
    %1479 = vmatmul.mubr.bf16.gmra.mrb[0].mxu0 %v1419
    %v1480 = vpop.f32.mrb[0].mxu0
    %v1481 = vadd.f32 0.0, %v1480
    %v1482 = vpop.f32.mrb[0].mxu0
    %v1483 = vpop.f32.mrb[0].mxu0
    %v1484 = vadd.f32 0.0, %v1483
    %v1485 = vpop.f32.mrb[0].mxu0
    %1486 = vmatprep.mubr.bf16.mxu0 0
    %1487 = vmatmul.mubr.bf16.gmra.mrb[0].mxu0 %v1422
    %v1488 = vpop.f32.mrb[0].mxu0
    %v1489 = vadd.f32 0.0, %v1488
    %v1490 = vpop.f32.mrb[0].mxu0
    %v1491 = vpop.f32.mrb[0].mxu0
    %v1492 = vadd.f32 0.0, %v1491
    %v1493 = vpop.f32.mrb[0].mxu0
    %1494 = vmatprep.mubr.bf16.mxu0 0
    %1495 = vmatmul.mubr.bf16.gmra.mrb[0].mxu0 %v1425
    %v1496 = vpop.f32.mrb[0].mxu0
    %v1497 = vadd.f32 0.0, %v1496
    %v1498 = vpop.f32.mrb[0].mxu0
    %v1499 = vpop.f32.mrb[0].mxu0
    %v1500 = vadd.f32 0.0, %v1499
    %v1501 = vpop.f32.mrb[0].mxu0
    %1502 = vmatprep.mubr.bf16.mxu0 0
    %1503 = vmatmul.mubr.bf16.gmra.mrb[0].mxu0 %v1428
    %v1504 = vpop.f32.mrb[0].mxu0
    %v1505 = vadd.f32 0.0, %v1504
    %v1506 = vpop.f32.mrb[0].mxu0
    %v1507 = vpop.f32.mrb[0].mxu0
    %v1508 = vadd.f32 0.0, %v1507
    %v1509 = vpop.f32.mrb[0].mxu0
    %1510 = vmatprep.mubr.bf16.mxu0 0
    %1511 = vmatmul.mubr.bf16.gmra.mrb[0].mxu0 %v1431
    %v1512 = vpop.f32.mrb[0].mxu0
    %v1513 = vadd.f32 0.0, %v1512
    %v1514 = vpop.f32.mrb[0].mxu0
    %v1515 = vpop.f32.mrb[0].mxu0
    %v1516 = vadd.f32 0.0, %v1515
    %v1517 = vpop.f32.mrb[0].mxu0
    %1518 = vmatprep.mubr.bf16.mxu0 0
    %1519 = vmatmul.mubr.bf16.gmra.mrb[0].mxu0 %v1434
    %v1520 = vpop.f32.mrb[0].mxu0
    %v1521 = vadd.f32 0.0, %v1520
    %v1522 = vpop.f32.mrb[0].mxu0
    %v1523 = vpop.f32.mrb[0].mxu0
    %v1524 = vadd.f32 0.0, %v1523
    %v1525 = vpop.f32.mrb[0].mxu0
    %1526 = vmatprep.mubr.bf16.mxu0 0
    %1527 = vmatmul.mubr.bf16.gmra.mrb[0].mxu0 %v1437
    %v1528 = vpop.f32.mrb[0].mxu0
    %v1529 = vadd.f32 0.0, %v1528
    %v1530 = vpop.f32.mrb[0].mxu0
    %v1531 = vpop.f32.mrb[0].mxu0
    %v1532 = vadd.f32 0.0, %v1531
    %v1533 = vpop.f32.mrb[0].mxu0
    %1534 = vmatprep.mubr.bf16.mxu0 0
    %1535 = vmatmul.mubr.bf16.gmra.mrb[0].mxu0 %v1440
    %v1536 = vpop.f32.mrb[0].mxu0
    %v1537 = vadd.f32 0.0, %v1536
    %v1538 = vpop.f32.mrb[0].mxu0
    %v1539 = vpop.f32.mrb[0].mxu0
    %v1540 = vadd.f32 0.0, %v1539
    %v1541 = vpop.f32.mrb[0].mxu0
    %1542 = vdwg.mxu0
    %vm1543 = vcmp.ge.f32.partialorder %v1481, 0.0
    %vm1544 = vcmp.ge.f32.partialorder %v1484, 0.0
    %vm1545 = vcmp.ge.f32.partialorder %v1489, 0.0
    %vm1546 = vcmp.ge.f32.partialorder %v1492, 0.0
    %vm1547 = vcmp.ge.f32.partialorder %v1497, 0.0
    %vm1548 = vcmp.ge.f32.partialorder %v1500, 0.0
    %vm1549 = vcmp.ge.f32.partialorder %v1505, 0.0
    %vm1550 = vcmp.ge.f32.partialorder %v1508, 0.0
    %vm1551 = vcmp.ge.f32.partialorder %v1513, 0.0
    %vm1552 = vcmp.ge.f32.partialorder %v1516, 0.0
    %vm1553 = vcmp.ge.f32.partialorder %v1521, 0.0
    %vm1554 = vcmp.ge.f32.partialorder %v1524, 0.0
    %vm1555 = vcmp.ge.f32.partialorder %v1529, 0.0
    %vm1556 = vcmp.ge.f32.partialorder %v1532, 0.0
    %vm1557 = vcmp.ge.f32.partialorder %v1537, 0.0
    %vm1558 = vcmp.ge.f32.partialorder %v1540, 0.0
    %v1560 = vlaneseq
    %v1561 = vshrl.u32 %v1560, 7
    %v1562 = vsub.s32 0, %v1561
    %v1563 = vrot.slane %v63, %v1562
    %v1565 = vmul.f32 %v1481, %v1563
    %v1566 = vmul.f32 %v1484, %v1563
    %v1567 = vmul.f32 %v1489, %v1563
    %v1568 = vmul.f32 %v1492, %v1563
    %v1569 = vmul.f32 %v1497, %v1563
    %v1570 = vmul.f32 %v1500, %v1563
    %v1571 = vmul.f32 %v1505, %v1563
    %v1572 = vmul.f32 %v1508, %v1563
    %v1573 = vmul.f32 %v1513, %v1563
    %v1574 = vmul.f32 %v1516, %v1563
    %v1575 = vmul.f32 %v1521, %v1563
    %v1576 = vmul.f32 %v1524, %v1563
    %v1577 = vmul.f32 %v1529, %v1563
    %v1578 = vmul.f32 %v1532, %v1563
    %v1579 = vmul.f32 %v1537, %v1563
    %v1580 = vmul.f32 %v1540, %v1563
    %v1581 = vsel %vm1543, %v1481, %v1565
    %v1582 = vsel %vm1544, %v1484, %v1566
    %v1583 = vsel %vm1545, %v1489, %v1567
    %v1584 = vsel %vm1546, %v1492, %v1568
    %v1585 = vsel %vm1547, %v1497, %v1569
    %v1586 = vsel %vm1548, %v1500, %v1570
    %v1587 = vsel %vm1549, %v1505, %v1571
    %v1588 = vsel %vm1550, %v1508, %v1572
    %v1589 = vsel %vm1551, %v1513, %v1573
    %v1590 = vsel %vm1552, %v1516, %v1574
    %v1591 = vsel %vm1553, %v1521, %v1575
    %v1592 = vsel %vm1554, %v1524, %v1576
    %v1593 = vsel %vm1555, %v1529, %v1577
    %v1594 = vsel %vm1556, %v1532, %v1578
    %v1595 = vsel %vm1557, %v1537, %v1579
    %v1596 = vsel %vm1558, %v1540, %v1580
    %1597 = vst.msk [vmem:[#allocation9] sm:$0xff] %vm74, %v1581
    %1598 = vst.msk [vmem:[#allocation9 + $0x10] sm:$0xff] %vm74, %v1582
    %1599 = vst.msk [vmem:[#allocation9 + $0x20] sm:$0xff] %vm74, %v1583
    %1600 = vst.msk [vmem:[#allocation9 + $0x30] sm:$0xff] %vm74, %v1584
    %1601 = vst.msk [vmem:[#allocation9 + $0x40] sm:$0xff] %vm74, %v1585
    %1602 = vst.msk [vmem:[#allocation9 + $0x50] sm:$0xff] %vm74, %v1586
    %1603 = vst.msk [vmem:[#allocation9 + $0x60] sm:$0xff] %vm74, %v1587
    %1604 = vst.msk [vmem:[#allocation9 + $0x70] sm:$0xff] %vm74, %v1588
    %1605 = vst.msk [vmem:[#allocation9 + $0xa0] sm:$0xff] %vm74, %v1589
    %1606 = vst.msk [vmem:[#allocation9 + $0xb0] sm:$0xff] %vm74, %v1590
    %1607 = vst.msk [vmem:[#allocation9 + $0xc0] sm:$0xff] %vm74, %v1591
    %1608 = vst.msk [vmem:[#allocation9 + $0xd0] sm:$0xff] %vm74, %v1592
    %1609 = vst.msk [vmem:[#allocation9 + $0xe0] sm:$0xff] %vm74, %v1593
    %1610 = vst.msk [vmem:[#allocation9 + $0xf0] sm:$0xff] %vm74, %v1594
    %1611 = vst.msk [vmem:[#allocation9 + $0x100] sm:$0xff] %vm74, %v1595
    %1612 = vst.msk [vmem:[#allocation9 + $0x110] sm:$0xff] %vm74, %v1596
    %v1613 = vld [vmem:[#allocation3] sm:$0xff]
    %v1614 = vld [vmem:[#allocation3 + $0x10] sm:$0xff]
    %v1615 = vld [vmem:[#allocation3 + $0x20] sm:$0xff]
    %v1616 = vld [vmem:[#allocation3 + $0x30] sm:$0xff]
    %v1617 = vld [vmem:[#allocation3 + $0x40] sm:$0xff]
    %v1618 = vld [vmem:[#allocation3 + $0x50] sm:$0xff]
    %v1619 = vld [vmem:[#allocation3 + $0x60] sm:$0xff]
    %v1620 = vld [vmem:[#allocation3 + $0x70] sm:$0xff]
    %v1621 = vld [vmem:[#allocation3 + $0xa0] sm:$0xff]
    %v1622 = vld [vmem:[#allocation3 + $0xb0] sm:$0xff]
    %v1623 = vld [vmem:[#allocation3 + $0xc0] sm:$0xff]
    %v1624 = vld [vmem:[#allocation3 + $0xd0] sm:$0xff]
    %v1625 = vld [vmem:[#allocation3 + $0xe0] sm:$0xff]
    %v1626 = vld [vmem:[#allocation3 + $0xf0] sm:$0xff]
    %v1627 = vld [vmem:[#allocation3 + $0x100] sm:$0xff]
    %v1628 = vld [vmem:[#allocation3 + $0x110] sm:$0xff]
    %v1629 = vld [vmem:[#allocation2 + $0x1] sm:$0xff]
    %v1630 = vld [vmem:[#allocation2 + $0x11] sm:$0xff]
    %v1631 = vld [vmem:[#allocation2 + $0x21] sm:$0xff]
    %v1632 = vld [vmem:[#allocation2 + $0x31] sm:$0xff]
    %v1633 = vld [vmem:[#allocation2 + $0x41] sm:$0xff]
    %v1634 = vld [vmem:[#allocation2 + $0x51] sm:$0xff]
    %v1635 = vld [vmem:[#allocation2 + $0x61] sm:$0xff]
    %v1636 = vld [vmem:[#allocation2 + $0x71] sm:$0xff]
    %v1637 = vld [vmem:[#allocation2 + $0xa1] sm:$0xff]
    %v1638 = vld [vmem:[#allocation2 + $0xb1] sm:$0xff]
    %v1639 = vld [vmem:[#allocation2 + $0xc1] sm:$0xff]
    %v1640 = vld [vmem:[#allocation2 + $0xd1] sm:$0xff]
    %v1641 = vld [vmem:[#allocation2 + $0xe1] sm:$0xff]
    %v1642 = vld [vmem:[#allocation2 + $0xf1] sm:$0xff]
    %v1643 = vld [vmem:[#allocation2 + $0x101] sm:$0xff]
    %v1644 = vld [vmem:[#allocation2 + $0x111] sm:$0xff]
    %v1645 = vld [vmem:[#allocation3 + $0x1] sm:$0xff]
    %v1646 = vld [vmem:[#allocation3 + $0x11] sm:$0xff]
    %v1647 = vld [vmem:[#allocation3 + $0x21] sm:$0xff]
    %v1648 = vld [vmem:[#allocation3 + $0x31] sm:$0xff]
    %v1649 = vld [vmem:[#allocation3 + $0x41] sm:$0xff]
    %v1650 = vld [vmem:[#allocation3 + $0x51] sm:$0xff]
    %v1651 = vld [vmem:[#allocation3 + $0x61] sm:$0xff]
    %v1652 = vld [vmem:[#allocation3 + $0x71] sm:$0xff]
    %v1653 = vld [vmem:[#allocation3 + $0xa1] sm:$0xff]
    %v1654 = vld [vmem:[#allocation3 + $0xb1] sm:$0xff]
    %v1655 = vld [vmem:[#allocation3 + $0xc1] sm:$0xff]
    %v1656 = vld [vmem:[#allocation3 + $0xd1] sm:$0xff]
    %v1657 = vld [vmem:[#allocation3 + $0xe1] sm:$0xff]
    %v1658 = vld [vmem:[#allocation3 + $0xf1] sm:$0xff]
    %v1659 = vld [vmem:[#allocation3 + $0x101] sm:$0xff]
    %v1660 = vld [vmem:[#allocation3 + $0x111] sm:$0xff]
    %v1661 = vld [vmem:[#allocation5] sm:$0xff]
    %v1662 = vld [vmem:[#allocation5 + $0x10] sm:$0xff]
    %v1663 = vld [vmem:[#allocation5 + $0x20] sm:$0xff]
    %v1664 = vld [vmem:[#allocation5 + $0x30] sm:$0xff]
    %v1665 = vld [vmem:[#allocation5 + $0x40] sm:$0xff]
    %v1666 = vld [vmem:[#allocation5 + $0x50] sm:$0xff]
    %v1667 = vld [vmem:[#allocation5 + $0x60] sm:$0xff]
    %v1668 = vld [vmem:[#allocation5 + $0x70] sm:$0xff]
    %v1669 = vld [vmem:[#allocation5 + $0xa0] sm:$0xff]
    %v1670 = vld [vmem:[#allocation5 + $0xb0] sm:$0xff]
    %v1671 = vld [vmem:[#allocation5 + $0xc0] sm:$0xff]
    %v1672 = vld [vmem:[#allocation5 + $0xd0] sm:$0xff]
    %v1673 = vld [vmem:[#allocation5 + $0xe0] sm:$0xff]
    %v1674 = vld [vmem:[#allocation5 + $0xf0] sm:$0xff]
    %v1675 = vld [vmem:[#allocation5 + $0x100] sm:$0xff]
    %v1676 = vld [vmem:[#allocation5 + $0x110] sm:$0xff]
    %v1677 = vld [vmem:[#allocation4 + $0x1] sm:$0xff]
    %v1678 = vld [vmem:[#allocation4 + $0x11] sm:$0xff]
    %v1679 = vld [vmem:[#allocation4 + $0x21] sm:$0xff]
    %v1680 = vld [vmem:[#allocation4 + $0x31] sm:$0xff]
    %v1681 = vld [vmem:[#allocation4 + $0x41] sm:$0xff]
    %v1682 = vld [vmem:[#allocation4 + $0x51] sm:$0xff]
    %v1683 = vld [vmem:[#allocation4 + $0x61] sm:$0xff]
    %v1684 = vld [vmem:[#allocation4 + $0x71] sm:$0xff]
    %v1685 = vld [vmem:[#allocation4 + $0xa1] sm:$0xff]
    %v1686 = vld [vmem:[#allocation4 + $0xb1] sm:$0xff]
    %v1687 = vld [vmem:[#allocation4 + $0xc1] sm:$0xff]
    %v1688 = vld [vmem:[#allocation4 + $0xd1] sm:$0xff]
    %v1689 = vld [vmem:[#allocation4 + $0xe1] sm:$0xff]
    %v1690 = vld [vmem:[#allocation4 + $0xf1] sm:$0xff]
    %v1691 = vld [vmem:[#allocation4 + $0x101] sm:$0xff]
    %v1692 = vld [vmem:[#allocation4 + $0x111] sm:$0xff]
    %v1693 = vld [vmem:[#allocation5 + $0x1] sm:$0xff]
    %v1694 = vld [vmem:[#allocation5 + $0x11] sm:$0xff]
    %v1695 = vld [vmem:[#allocation5 + $0x21] sm:$0xff]
    %v1696 = vld [vmem:[#allocation5 + $0x31] sm:$0xff]
    %v1697 = vld [vmem:[#allocation5 + $0x41] sm:$0xff]
    %v1698 = vld [vmem:[#allocation5 + $0x51] sm:$0xff]
    %v1699 = vld [vmem:[#allocation5 + $0x61] sm:$0xff]
    %v1700 = vld [vmem:[#allocation5 + $0x71] sm:$0xff]
    %v1701 = vld [vmem:[#allocation5 + $0xa1] sm:$0xff]
    %v1702 = vld [vmem:[#allocation5 + $0xb1] sm:$0xff]
    %v1703 = vld [vmem:[#allocation5 + $0xc1] sm:$0xff]
    %v1704 = vld [vmem:[#allocation5 + $0xd1] sm:$0xff]
    %v1705 = vld [vmem:[#allocation5 + $0xe1] sm:$0xff]
    %v1706 = vld [vmem:[#allocation5 + $0xf1] sm:$0xff]
    %v1707 = vld [vmem:[#allocation5 + $0x101] sm:$0xff]
    %v1708 = vld [vmem:[#allocation5 + $0x111] sm:$0xff]
    %v1709 = vld [vmem:[%s506] sm:$0xff]
    %v1710 = vld [vmem:[%s506 + $0x10] sm:$0xff]
    %v1711 = vld [vmem:[%s506 + $0x20] sm:$0xff]
    %v1712 = vld [vmem:[%s506 + $0x30] sm:$0xff]
    %v1713 = vld [vmem:[%s506 + $0x40] sm:$0xff]
    %v1714 = vld [vmem:[%s506 + $0x50] sm:$0xff]
    %v1715 = vld [vmem:[%s506 + $0x60] sm:$0xff]
    %v1716 = vld [vmem:[%s506 + $0x70] sm:$0xff]
    %v1717 = vld [vmem:[%s506 + $0xa0] sm:$0xff]
    %v1718 = vld [vmem:[%s506 + $0xb0] sm:$0xff]
    %v1719 = vld [vmem:[%s506 + $0xc0] sm:$0xff]
    %v1720 = vld [vmem:[%s506 + $0xd0] sm:$0xff]
    %v1721 = vld [vmem:[%s506 + $0xe0] sm:$0xff]
    %v1722 = vld [vmem:[%s506 + $0xf0] sm:$0xff]
    %v1723 = vld [vmem:[%s506 + $0x100] sm:$0xff]
    %v1724 = vld [vmem:[%s506 + $0x110] sm:$0xff]
    %v1725 = vld [vmem:[%s587 + $0x1] sm:$0xff]
    %v1726 = vld [vmem:[%s587 + $0x11] sm:$0xff]
    %v1727 = vld [vmem:[%s587 + $0x21] sm:$0xff]
    %v1728 = vld [vmem:[%s587 + $0x31] sm:$0xff]
    %v1729 = vld [vmem:[%s587 + $0x41] sm:$0xff]
    %v1730 = vld [vmem:[%s587 + $0x51] sm:$0xff]
    %v1731 = vld [vmem:[%s587 + $0x61] sm:$0xff]
    %v1732 = vld [vmem:[%s587 + $0x71] sm:$0xff]
    %v1733 = vld [vmem:[%s587 + $0xa1] sm:$0xff]
    %v1734 = vld [vmem:[%s587 + $0xb1] sm:$0xff]
    %v1735 = vld [vmem:[%s587 + $0xc1] sm:$0xff]
    %v1736 = vld [vmem:[%s587 + $0xd1] sm:$0xff]
    %v1737 = vld [vmem:[%s587 + $0xe1] sm:$0xff]
    %v1738 = vld [vmem:[%s587 + $0xf1] sm:$0xff]
    %v1739 = vld [vmem:[%s587 + $0x101] sm:$0xff]
    %v1740 = vld [vmem:[%s587 + $0x111] sm:$0xff]
    %v1741 = vld [vmem:[%s506 + $0x1] sm:$0xff]
    %v1742 = vld [vmem:[%s506 + $0x11] sm:$0xff]
    %v1743 = vld [vmem:[%s506 + $0x21] sm:$0xff]
    %v1744 = vld [vmem:[%s506 + $0x31] sm:$0xff]
    %v1745 = vld [vmem:[%s506 + $0x41] sm:$0xff]
    %v1746 = vld [vmem:[%s506 + $0x51] sm:$0xff]
    %v1747 = vld [vmem:[%s506 + $0x61] sm:$0xff]
    %v1748 = vld [vmem:[%s506 + $0x71] sm:$0xff]
    %v1749 = vld [vmem:[%s506 + $0xa1] sm:$0xff]
    %v1750 = vld [vmem:[%s506 + $0xb1] sm:$0xff]
    %v1751 = vld [vmem:[%s506 + $0xc1] sm:$0xff]
    %v1752 = vld [vmem:[%s506 + $0xd1] sm:$0xff]
    %v1753 = vld [vmem:[%s506 + $0xe1] sm:$0xff]
    %v1754 = vld [vmem:[%s506 + $0xf1] sm:$0xff]
    %v1755 = vld [vmem:[%s506 + $0x101] sm:$0xff]
    %v1756 = vld [vmem:[%s506 + $0x111] sm:$0xff]
    %1773 = vrot.lane.b32.xlu0 %v1629, 4
    %v1774 = vpop.permute.xlu0 %1773
    %1775 = vrot.lane.b32.xlu0 %v1630, 4
    %v1776 = vpop.permute.xlu0 %1775
    %1777 = vrot.lane.b32.xlu0 %v1631, 4
    %v1778 = vpop.permute.xlu0 %1777
    %1779 = vrot.lane.b32.xlu0 %v1632, 4
    %v1780 = vpop.permute.xlu0 %1779
    %1781 = vrot.lane.b32.xlu0 %v1633, 4
    %v1782 = vpop.permute.xlu0 %1781
    %1783 = vrot.lane.b32.xlu0 %v1634, 4
    %v1784 = vpop.permute.xlu0 %1783
    %1785 = vrot.lane.b32.xlu0 %v1635, 4
    %v1786 = vpop.permute.xlu0 %1785
    %1787 = vrot.lane.b32.xlu0 %v1636, 4
    %v1788 = vpop.permute.xlu0 %1787
    %1789 = vrot.lane.b32.xlu0 %v1637, 4
    %v1790 = vpop.permute.xlu0 %1789
    %1791 = vrot.lane.b32.xlu0 %v1638, 4
    %v1792 = vpop.permute.xlu0 %1791
    %1793 = vrot.lane.b32.xlu0 %v1639, 4
    %v1794 = vpop.permute.xlu0 %1793
    %1795 = vrot.lane.b32.xlu0 %v1640, 4
    %v1796 = vpop.permute.xlu0 %1795
    %1797 = vrot.lane.b32.xlu0 %v1641, 4
    %v1798 = vpop.permute.xlu0 %1797
    %1799 = vrot.lane.b32.xlu0 %v1642, 4
    %v1800 = vpop.permute.xlu0 %1799
    %1801 = vrot.lane.b32.xlu0 %v1643, 4
    %v1802 = vpop.permute.xlu0 %1801
    %1803 = vrot.lane.b32.xlu0 %v1644, 4
    %v1804 = vpop.permute.xlu0 %1803
    %1837 = vrot.lane.b32.xlu0 %v1645, 8
    %v1838 = vpop.permute.xlu0 %1837
    %1839 = vrot.lane.b32.xlu0 %v1646, 8
    %v1840 = vpop.permute.xlu0 %1839
    %1841 = vrot.lane.b32.xlu0 %v1647, 8
    %v1842 = vpop.permute.xlu0 %1841
    %1843 = vrot.lane.b32.xlu0 %v1648, 8
    %v1844 = vpop.permute.xlu0 %1843
    %1845 = vrot.lane.b32.xlu0 %v1649, 8
    %v1846 = vpop.permute.xlu0 %1845
    %1847 = vrot.lane.b32.xlu0 %v1650, 8
    %v1848 = vpop.permute.xlu0 %1847
    %1849 = vrot.lane.b32.xlu0 %v1651, 8
    %v1850 = vpop.permute.xlu0 %1849
    %1851 = vrot.lane.b32.xlu0 %v1652, 8
    %v1852 = vpop.permute.xlu0 %1851
    %1853 = vrot.lane.b32.xlu0 %v1653, 8
    %v1854 = vpop.permute.xlu0 %1853
    %1855 = vrot.lane.b32.xlu0 %v1654, 8
    %v1856 = vpop.permute.xlu0 %1855
    %1857 = vrot.lane.b32.xlu0 %v1655, 8
    %v1858 = vpop.permute.xlu0 %1857
    %1859 = vrot.lane.b32.xlu0 %v1656, 8
    %v1860 = vpop.permute.xlu0 %1859
    %1861 = vrot.lane.b32.xlu0 %v1657, 8
    %v1862 = vpop.permute.xlu0 %1861
    %1863 = vrot.lane.b32.xlu0 %v1658, 8
    %v1864 = vpop.permute.xlu0 %1863
    %1865 = vrot.lane.b32.xlu0 %v1659, 8
    %v1866 = vpop.permute.xlu0 %1865
    %1867 = vrot.lane.b32.xlu0 %v1660, 8
    %v1868 = vpop.permute.xlu0 %1867
    %1901 = vrot.lane.b32.xlu0 %v1661, 12
    %v1902 = vpop.permute.xlu0 %1901
    %1903 = vrot.lane.b32.xlu0 %v1662, 12
    %v1904 = vpop.permute.xlu0 %1903
    %1905 = vrot.lane.b32.xlu0 %v1663, 12
    %v1906 = vpop.permute.xlu0 %1905
    %1907 = vrot.lane.b32.xlu0 %v1664, 12
    %v1908 = vpop.permute.xlu0 %1907
    %1909 = vrot.lane.b32.xlu0 %v1665, 12
    %v1910 = vpop.permute.xlu0 %1909
    %1911 = vrot.lane.b32.xlu0 %v1666, 12
    %v1912 = vpop.permute.xlu0 %1911
    %1913 = vrot.lane.b32.xlu0 %v1667, 12
    %v1914 = vpop.permute.xlu0 %1913
    %1915 = vrot.lane.b32.xlu0 %v1668, 12
    %v1916 = vpop.permute.xlu0 %1915
    %1917 = vrot.lane.b32.xlu0 %v1669, 12
    %v1918 = vpop.permute.xlu0 %1917
    %1919 = vrot.lane.b32.xlu0 %v1670, 12
    %v1920 = vpop.permute.xlu0 %1919
    %1921 = vrot.lane.b32.xlu0 %v1671, 12
    %v1922 = vpop.permute.xlu0 %1921
    %1923 = vrot.lane.b32.xlu0 %v1672, 12
    %v1924 = vpop.permute.xlu0 %1923
    %1925 = vrot.lane.b32.xlu0 %v1673, 12
    %v1926 = vpop.permute.xlu0 %1925
    %1927 = vrot.lane.b32.xlu0 %v1674, 12
    %v1928 = vpop.permute.xlu0 %1927
    %1929 = vrot.lane.b32.xlu0 %v1675, 12
    %v1930 = vpop.permute.xlu0 %1929
    %1931 = vrot.lane.b32.xlu0 %v1676, 12
    %v1932 = vpop.permute.xlu0 %1931
    %1965 = vrot.lane.b32.xlu0 %v1677, 16
    %v1966 = vpop.permute.xlu0 %1965
    %1967 = vrot.lane.b32.xlu0 %v1678, 16
    %v1968 = vpop.permute.xlu0 %1967
    %1969 = vrot.lane.b32.xlu0 %v1679, 16
    %v1970 = vpop.permute.xlu0 %1969
    %1971 = vrot.lane.b32.xlu0 %v1680, 16
    %v1972 = vpop.permute.xlu0 %1971
    %1973 = vrot.lane.b32.xlu0 %v1681, 16
    %v1974 = vpop.permute.xlu0 %1973
    %1975 = vrot.lane.b32.xlu0 %v1682, 16
    %v1976 = vpop.permute.xlu0 %1975
    %1977 = vrot.lane.b32.xlu0 %v1683, 16
    %v1978 = vpop.permute.xlu0 %1977
    %1979 = vrot.lane.b32.xlu0 %v1684, 16
    %v1980 = vpop.permute.xlu0 %1979
    %1981 = vrot.lane.b32.xlu0 %v1685, 16
    %v1982 = vpop.permute.xlu0 %1981
    %1983 = vrot.lane.b32.xlu0 %v1686, 16
    %v1984 = vpop.permute.xlu0 %1983
    %1985 = vrot.lane.b32.xlu0 %v1687, 16
    %v1986 = vpop.permute.xlu0 %1985
    %1987 = vrot.lane.b32.xlu0 %v1688, 16
    %v1988 = vpop.permute.xlu0 %1987
    %1989 = vrot.lane.b32.xlu0 %v1689, 16
    %v1990 = vpop.permute.xlu0 %1989
    %1991 = vrot.lane.b32.xlu0 %v1690, 16
    %v1992 = vpop.permute.xlu0 %1991
    %1993 = vrot.lane.b32.xlu0 %v1691, 16
    %v1994 = vpop.permute.xlu0 %1993
    %1995 = vrot.lane.b32.xlu0 %v1692, 16
    %v1996 = vpop.permute.xlu0 %1995
    %2029 = vrot.lane.b32.xlu0 %v1693, 20
    %v2030 = vpop.permute.xlu0 %2029
    %2031 = vrot.lane.b32.xlu0 %v1694, 20
    %v2032 = vpop.permute.xlu0 %2031
    %2033 = vrot.lane.b32.xlu0 %v1695, 20
    %v2034 = vpop.permute.xlu0 %2033
    %2035 = vrot.lane.b32.xlu0 %v1696, 20
    %v2036 = vpop.permute.xlu0 %2035
    %2037 = vrot.lane.b32.xlu0 %v1697, 20
    %v2038 = vpop.permute.xlu0 %2037
    %2039 = vrot.lane.b32.xlu0 %v1698, 20
    %v2040 = vpop.permute.xlu0 %2039
    %2041 = vrot.lane.b32.xlu0 %v1699, 20
    %v2042 = vpop.permute.xlu0 %2041
    %2043 = vrot.lane.b32.xlu0 %v1700, 20
    %v2044 = vpop.permute.xlu0 %2043
    %2045 = vrot.lane.b32.xlu0 %v1701, 20
    %v2046 = vpop.permute.xlu0 %2045
    %2047 = vrot.lane.b32.xlu0 %v1702, 20
    %v2048 = vpop.permute.xlu0 %2047
    %2049 = vrot.lane.b32.xlu0 %v1703, 20
    %v2050 = vpop.permute.xlu0 %2049
    %2051 = vrot.lane.b32.xlu0 %v1704, 20
    %v2052 = vpop.permute.xlu0 %2051
    %2053 = vrot.lane.b32.xlu0 %v1705, 20
    %v2054 = vpop.permute.xlu0 %2053
    %2055 = vrot.lane.b32.xlu0 %v1706, 20
    %v2056 = vpop.permute.xlu0 %2055
    %2057 = vrot.lane.b32.xlu0 %v1707, 20
    %v2058 = vpop.permute.xlu0 %2057
    %2059 = vrot.lane.b32.xlu0 %v1708, 20
    %v2060 = vpop.permute.xlu0 %2059
    %2093 = vrot.lane.b32.xlu0 %v1709, 24
    %v2094 = vpop.permute.xlu0 %2093
    %2095 = vrot.lane.b32.xlu0 %v1710, 24
    %v2096 = vpop.permute.xlu0 %2095
    %2097 = vrot.lane.b32.xlu0 %v1711, 24
    %v2098 = vpop.permute.xlu0 %2097
    %2099 = vrot.lane.b32.xlu0 %v1712, 24
    %v2100 = vpop.permute.xlu0 %2099
    %2101 = vrot.lane.b32.xlu0 %v1713, 24
    %v2102 = vpop.permute.xlu0 %2101
    %2103 = vrot.lane.b32.xlu0 %v1714, 24
    %v2104 = vpop.permute.xlu0 %2103
    %2105 = vrot.lane.b32.xlu0 %v1715, 24
    %v2106 = vpop.permute.xlu0 %2105
    %2107 = vrot.lane.b32.xlu0 %v1716, 24
    %v2108 = vpop.permute.xlu0 %2107
    %2109 = vrot.lane.b32.xlu0 %v1717, 24
    %v2110 = vpop.permute.xlu0 %2109
    %2111 = vrot.lane.b32.xlu0 %v1718, 24
    %v2112 = vpop.permute.xlu0 %2111
    %2113 = vrot.lane.b32.xlu0 %v1719, 24
    %v2114 = vpop.permute.xlu0 %2113
    %2115 = vrot.lane.b32.xlu0 %v1720, 24
    %v2116 = vpop.permute.xlu0 %2115
    %2117 = vrot.lane.b32.xlu0 %v1721, 24
    %v2118 = vpop.permute.xlu0 %2117
    %2119 = vrot.lane.b32.xlu0 %v1722, 24
    %v2120 = vpop.permute.xlu0 %2119
    %2121 = vrot.lane.b32.xlu0 %v1723, 24
    %v2122 = vpop.permute.xlu0 %2121
    %2123 = vrot.lane.b32.xlu0 %v1724, 24
    %v2124 = vpop.permute.xlu0 %2123
    %2157 = vrot.lane.b32.xlu0 %v1725, 28
    %v2158 = vpop.permute.xlu0 %2157
    %2159 = vrot.lane.b32.xlu0 %v1726, 28
    %v2160 = vpop.permute.xlu0 %2159
    %2161 = vrot.lane.b32.xlu0 %v1727, 28
    %v2162 = vpop.permute.xlu0 %2161
    %2163 = vrot.lane.b32.xlu0 %v1728, 28
    %v2164 = vpop.permute.xlu0 %2163
    %2165 = vrot.lane.b32.xlu0 %v1729, 28
    %v2166 = vpop.permute.xlu0 %2165
    %2167 = vrot.lane.b32.xlu0 %v1730, 28
    %v2168 = vpop.permute.xlu0 %2167
    %2169 = vrot.lane.b32.xlu0 %v1731, 28
    %v2170 = vpop.permute.xlu0 %2169
    %2171 = vrot.lane.b32.xlu0 %v1732, 28
    %v2172 = vpop.permute.xlu0 %2171
    %2173 = vrot.lane.b32.xlu0 %v1733, 28
    %v2174 = vpop.permute.xlu0 %2173
    %2175 = vrot.lane.b32.xlu0 %v1734, 28
    %v2176 = vpop.permute.xlu0 %2175
    %2177 = vrot.lane.b32.xlu0 %v1735, 28
    %v2178 = vpop.permute.xlu0 %2177
    %2179 = vrot.lane.b32.xlu0 %v1736, 28
    %v2180 = vpop.permute.xlu0 %2179
    %2181 = vrot.lane.b32.xlu0 %v1737, 28
    %v2182 = vpop.permute.xlu0 %2181
    %2183 = vrot.lane.b32.xlu0 %v1738, 28
    %v2184 = vpop.permute.xlu0 %2183
    %2185 = vrot.lane.b32.xlu0 %v1739, 28
    %v2186 = vpop.permute.xlu0 %2185
    %2187 = vrot.lane.b32.xlu0 %v1740, 28
    %v2188 = vpop.permute.xlu0 %2187
    %2221 = vrot.lane.b32.xlu0 %v1741, 32
    %v2222 = vpop.permute.xlu0 %2221
    %2223 = vrot.lane.b32.xlu0 %v1742, 32
    %v2224 = vpop.permute.xlu0 %2223
    %2225 = vrot.lane.b32.xlu0 %v1743, 32
    %v2226 = vpop.permute.xlu0 %2225
    %2227 = vrot.lane.b32.xlu0 %v1744, 32
    %v2228 = vpop.permute.xlu0 %2227
    %2229 = vrot.lane.b32.xlu0 %v1745, 32
    %v2230 = vpop.permute.xlu0 %2229
    %2231 = vrot.lane.b32.xlu0 %v1746, 32
    %v2232 = vpop.permute.xlu0 %2231
    %2233 = vrot.lane.b32.xlu0 %v1747, 32
    %v2234 = vpop.permute.xlu0 %2233
    %2235 = vrot.lane.b32.xlu0 %v1748, 32
    %v2236 = vpop.permute.xlu0 %2235
    %2237 = vrot.lane.b32.xlu0 %v1749, 32
    %v2238 = vpop.permute.xlu0 %2237
    %2239 = vrot.lane.b32.xlu0 %v1750, 32
    %v2240 = vpop.permute.xlu0 %2239
    %2241 = vrot.lane.b32.xlu0 %v1751, 32
    %v2242 = vpop.permute.xlu0 %2241
    %2243 = vrot.lane.b32.xlu0 %v1752, 32
    %v2244 = vpop.permute.xlu0 %2243
    %2245 = vrot.lane.b32.xlu0 %v1753, 32
    %v2246 = vpop.permute.xlu0 %2245
    %2247 = vrot.lane.b32.xlu0 %v1754, 32
    %v2248 = vpop.permute.xlu0 %2247
    %2249 = vrot.lane.b32.xlu0 %v1755, 32
    %v2250 = vpop.permute.xlu0 %2249
    %2251 = vrot.lane.b32.xlu0 %v1756, 32
    %v2252 = vpop.permute.xlu0 %2251
    %v2269 = vsel %vm68, %v1613, %v1774
    %v2270 = vsel %vm68, %v1614, %v1776
    %v2271 = vsel %vm68, %v1615, %v1778
    %v2272 = vsel %vm68, %v1616, %v1780
    %v2273 = vsel %vm68, %v1617, %v1782
    %v2274 = vsel %vm68, %v1618, %v1784
    %v2275 = vsel %vm68, %v1619, %v1786
    %v2276 = vsel %vm68, %v1620, %v1788
    %v2277 = vsel %vm68, %v1621, %v1790
    %v2278 = vsel %vm68, %v1622, %v1792
    %v2279 = vsel %vm68, %v1623, %v1794
    %v2280 = vsel %vm68, %v1624, %v1796
    %v2281 = vsel %vm68, %v1625, %v1798
    %v2282 = vsel %vm68, %v1626, %v1800
    %v2283 = vsel %vm68, %v1627, %v1802
    %v2284 = vsel %vm68, %v1628, %v1804
    %v2285 = vsel %vm74, %v2269, %v1838
    %v2286 = vsel %vm74, %v2270, %v1840
    %v2287 = vsel %vm74, %v2271, %v1842
    %v2288 = vsel %vm74, %v2272, %v1844
    %v2289 = vsel %vm74, %v2273, %v1846
    %v2290 = vsel %vm74, %v2274, %v1848
    %v2291 = vsel %vm74, %v2275, %v1850
    %v2292 = vsel %vm74, %v2276, %v1852
    %v2293 = vsel %vm74, %v2277, %v1854
    %v2294 = vsel %vm74, %v2278, %v1856
    %v2295 = vsel %vm74, %v2279, %v1858
    %v2296 = vsel %vm74, %v2280, %v1860
    %v2297 = vsel %vm74, %v2281, %v1862
    %v2298 = vsel %vm74, %v2282, %v1864
    %v2299 = vsel %vm74, %v2283, %v1866
    %v2300 = vsel %vm74, %v2284, %v1868
    %v2301 = vsel %vm1292, %v2285, %v1902
    %v2302 = vsel %vm1292, %v2286, %v1904
    %v2303 = vsel %vm1292, %v2287, %v1906
    %v2304 = vsel %vm1292, %v2288, %v1908
    %v2305 = vsel %vm1292, %v2289, %v1910
    %v2306 = vsel %vm1292, %v2290, %v1912
    %v2307 = vsel %vm1292, %v2291, %v1914
    %v2308 = vsel %vm1292, %v2292, %v1916
    %v2309 = vsel %vm1292, %v2293, %v1918
    %v2310 = vsel %vm1292, %v2294, %v1920
    %v2311 = vsel %vm1292, %v2295, %v1922
    %v2312 = vsel %vm1292, %v2296, %v1924
    %v2313 = vsel %vm1292, %v2297, %v1926
    %v2314 = vsel %vm1292, %v2298, %v1928
    %v2315 = vsel %vm1292, %v2299, %v1930
    %v2316 = vsel %vm1292, %v2300, %v1932
    %v2317 = vsel %vm1309, %v2301, %v1966
    %v2318 = vsel %vm1309, %v2302, %v1968
    %v2319 = vsel %vm1309, %v2303, %v1970
    %v2320 = vsel %vm1309, %v2304, %v1972
    %v2321 = vsel %vm1309, %v2305, %v1974
    %v2322 = vsel %vm1309, %v2306, %v1976
    %v2323 = vsel %vm1309, %v2307, %v1978
    %v2324 = vsel %vm1309, %v2308, %v1980
    %v2325 = vsel %vm1309, %v2309, %v1982
    %v2326 = vsel %vm1309, %v2310, %v1984
    %v2327 = vsel %vm1309, %v2311, %v1986
    %v2328 = vsel %vm1309, %v2312, %v1988
    %v2329 = vsel %vm1309, %v2313, %v1990
    %v2330 = vsel %vm1309, %v2314, %v1992
    %v2331 = vsel %vm1309, %v2315, %v1994
    %v2332 = vsel %vm1309, %v2316, %v1996
    %v2333 = vsel %vm1326, %v2317, %v2030
    %v2334 = vsel %vm1326, %v2318, %v2032
    %v2335 = vsel %vm1326, %v2319, %v2034
    %v2336 = vsel %vm1326, %v2320, %v2036
    %v2337 = vsel %vm1326, %v2321, %v2038
    %v2338 = vsel %vm1326, %v2322, %v2040
    %v2339 = vsel %vm1326, %v2323, %v2042
    %v2340 = vsel %vm1326, %v2324, %v2044
    %v2341 = vsel %vm1326, %v2325, %v2046
    %v2342 = vsel %vm1326, %v2326, %v2048
    %v2343 = vsel %vm1326, %v2327, %v2050
    %v2344 = vsel %vm1326, %v2328, %v2052
    %v2345 = vsel %vm1326, %v2329, %v2054
    %v2346 = vsel %vm1326, %v2330, %v2056
    %v2347 = vsel %vm1326, %v2331, %v2058
    %v2348 = vsel %vm1326, %v2332, %v2060
    %v2349 = vsel %vm1343, %v2333, %v2094
    %v2350 = vsel %vm1343, %v2334, %v2096
    %v2351 = vsel %vm1343, %v2335, %v2098
    %v2352 = vsel %vm1343, %v2336, %v2100
    %v2353 = vsel %vm1343, %v2337, %v2102
    %v2354 = vsel %vm1343, %v2338, %v2104
    %v2355 = vsel %vm1343, %v2339, %v2106
    %v2356 = vsel %vm1343, %v2340, %v2108
    %v2357 = vsel %vm1343, %v2341, %v2110
    %v2358 = vsel %vm1343, %v2342, %v2112
    %v2359 = vsel %vm1343, %v2343, %v2114
    %v2360 = vsel %vm1343, %v2344, %v2116
    %v2361 = vsel %vm1343, %v2345, %v2118
    %v2362 = vsel %vm1343, %v2346, %v2120
    %v2363 = vsel %vm1343, %v2347, %v2122
    %v2364 = vsel %vm1343, %v2348, %v2124
    %v2365 = vsel %vm1360, %v2349, %v2158
    %v2366 = vsel %vm1360, %v2350, %v2160
    %v2367 = vsel %vm1360, %v2351, %v2162
    %v2368 = vsel %vm1360, %v2352, %v2164
    %v2369 = vsel %vm1360, %v2353, %v2166
    %v2370 = vsel %vm1360, %v2354, %v2168
    %v2371 = vsel %vm1360, %v2355, %v2170
    %v2372 = vsel %vm1360, %v2356, %v2172
    %v2373 = vsel %vm1360, %v2357, %v2174
    %v2374 = vsel %vm1360, %v2358, %v2176
    %v2375 = vsel %vm1360, %v2359, %v2178
    %v2376 = vsel %vm1360, %v2360, %v2180
    %v2377 = vsel %vm1360, %v2361, %v2182
    %v2378 = vsel %vm1360, %v2362, %v2184
    %v2379 = vsel %vm1360, %v2363, %v2186
    %v2380 = vsel %vm1360, %v2364, %v2188
    %v2381 = vsel %vm1377, %v2365, %v2222
    %v2382 = vsel %vm1377, %v2366, %v2224
    %v2383 = vsel %vm1377, %v2367, %v2226
    %v2384 = vsel %vm1377, %v2368, %v2228
    %v2385 = vsel %vm1377, %v2369, %v2230
    %v2386 = vsel %vm1377, %v2370, %v2232
    %v2387 = vsel %vm1377, %v2371, %v2234
    %v2388 = vsel %vm1377, %v2372, %v2236
    %v2389 = vsel %vm1377, %v2373, %v2238
    %v2390 = vsel %vm1377, %v2374, %v2240
    %v2391 = vsel %vm1377, %v2375, %v2242
    %v2392 = vsel %vm1377, %v2376, %v2244
    %v2393 = vsel %vm1377, %v2377, %v2246
    %v2394 = vsel %vm1377, %v2378, %v2248
    %v2395 = vsel %vm1377, %v2379, %v2250
    %v2396 = vsel %vm1377, %v2380, %v2252
    %v2397 = vpack.c.bf16 %v2382, %v2381
    %v2398 = vpack.c.bf16 %v2384, %v2383
    %v2399 = vpack.c.bf16 %v2386, %v2385
    %v2400 = vpack.c.bf16 %v2388, %v2387
    %v2401 = vpack.c.bf16 %v2390, %v2389
    %v2402 = vpack.c.bf16 %v2392, %v2391
    %v2403 = vpack.c.bf16 %v2394, %v2393
    %v2404 = vpack.c.bf16 %v2396, %v2395
    %v2406 = vsel %vm1417, %v2397, 0
    %v2409 = vsel %vm1417, %v2398, 0
    %v2412 = vsel %vm1417, %v2399, 0
    %v2415 = vsel %vm1417, %v2400, 0
    %v2418 = vsel %vm1417, %v2401, 0
    %v2421 = vsel %vm1417, %v2402, 0
    %v2424 = vsel %vm1417, %v2403, 0
    %v2427 = vsel %vm1417, %v2404, 0
    %2429 = vmatprep.subr.bf16.mxu0 0
    %2430 = vmatpush1.bf16.msra.mxu0 %v1412
    %2431 = vmatprep.subr.bf16.mxu0 0
    %2432 = vmatpush1.bf16.msra.mxu0 %v1413
    %2433 = vmatprep.subr.bf16.mxu0 0
    %2434 = vmatpush1.bf16.msra.mxu0 %v1444
    %2435 = vmatprep.subr.bf16.mxu0 0
    %2436 = vmatpush1.bf16.msra.mxu0 0
    %2437 = vmatprep.subr.bf16.mxu0 0
    %2438 = vmatpush1.bf16.msra.mxu0 0
    %2439 = vmatprep.subr.bf16.mxu0 0
    %2440 = vmatpush1.bf16.msra.mxu0 0
    %2441 = vmatprep.subr.bf16.mxu0 0
    %2442 = vmatpush1.bf16.msra.mxu0 0
    %2443 = vmatprep.subr.bf16.mxu0 0
    %2444 = vmatpush1.bf16.msra.mxu0 0
    %2445 = vmatprep.subr.bf16.mxu0 0
    %2446 = vmatpush1.bf16.msra.mxu0 0
    %2447 = vmatprep.subr.bf16.mxu0 0
    %2448 = vmatpush1.bf16.msra.mxu0 0
    %2449 = vmatprep.subr.bf16.mxu0 0
    %2450 = vmatpush1.bf16.msra.mxu0 0
    %2451 = vmatprep.subr.bf16.mxu0 0
    %2452 = vmatpush1.bf16.msra.mxu0 0
    %2453 = vmatprep.subr.bf16.mxu0 0
    %2454 = vmatpush1.bf16.msra.mxu0 0
    %2455 = vmatprep.subr.bf16.mxu0 0
    %2456 = vmatpush1.bf16.msra.mxu0 0
    %2457 = vmatprep.subr.bf16.mxu0 0
    %2458 = vmatpush1.bf16.msra.mxu0 0
    %2459 = vmatprep.subr.bf16.mxu0 0
    %2460 = vmatpush1.bf16.msra.mxu0 0
    %2461 = vmatprep.mubr.bf16.mxu0 0
    %2462 = vmatmul.mubr.bf16.gmra.mrb[0].mxu0 %v2406
    %v2463 = vpop.f32.mrb[0].mxu0
    %v2464 = vadd.f32 0.0, %v2463
    %v2465 = vpop.f32.mrb[0].mxu0
    %v2466 = vpop.f32.mrb[0].mxu0
    %v2467 = vadd.f32 0.0, %v2466
    %v2468 = vpop.f32.mrb[0].mxu0
    %2469 = vmatprep.mubr.bf16.mxu0 0
    %2470 = vmatmul.mubr.bf16.gmra.mrb[0].mxu0 %v2409
    %v2471 = vpop.f32.mrb[0].mxu0
    %v2472 = vadd.f32 0.0, %v2471
    %v2473 = vpop.f32.mrb[0].mxu0
    %v2474 = vpop.f32.mrb[0].mxu0
    %v2475 = vadd.f32 0.0, %v2474
    %v2476 = vpop.f32.mrb[0].mxu0
    %2477 = vmatprep.mubr.bf16.mxu0 0
    %2478 = vmatmul.mubr.bf16.gmra.mrb[0].mxu0 %v2412
    %v2479 = vpop.f32.mrb[0].mxu0
    %v2480 = vadd.f32 0.0, %v2479
    %v2481 = vpop.f32.mrb[0].mxu0
    %v2482 = vpop.f32.mrb[0].mxu0
    %v2483 = vadd.f32 0.0, %v2482
    %v2484 = vpop.f32.mrb[0].mxu0
    %2485 = vmatprep.mubr.bf16.mxu0 0
    %2486 = vmatmul.mubr.bf16.gmra.mrb[0].mxu0 %v2415
    %v2487 = vpop.f32.mrb[0].mxu0
    %v2488 = vadd.f32 0.0, %v2487
    %v2489 = vpop.f32.mrb[0].mxu0
    %v2490 = vpop.f32.mrb[0].mxu0
    %v2491 = vadd.f32 0.0, %v2490
    %v2492 = vpop.f32.mrb[0].mxu0
    %2493 = vmatprep.mubr.bf16.mxu0 0
    %2494 = vmatmul.mubr.bf16.gmra.mrb[0].mxu0 %v2418
    %v2495 = vpop.f32.mrb[0].mxu0
    %v2496 = vadd.f32 0.0, %v2495
    %v2497 = vpop.f32.mrb[0].mxu0
    %v2498 = vpop.f32.mrb[0].mxu0
    %v2499 = vadd.f32 0.0, %v2498
    %v2500 = vpop.f32.mrb[0].mxu0
    %2501 = vmatprep.mubr.bf16.mxu0 0
    %2502 = vmatmul.mubr.bf16.gmra.mrb[0].mxu0 %v2421
    %v2503 = vpop.f32.mrb[0].mxu0
    %v2504 = vadd.f32 0.0, %v2503
    %v2505 = vpop.f32.mrb[0].mxu0
    %v2506 = vpop.f32.mrb[0].mxu0
    %v2507 = vadd.f32 0.0, %v2506
    %v2508 = vpop.f32.mrb[0].mxu0
    %2509 = vmatprep.mubr.bf16.mxu0 0
    %2510 = vmatmul.mubr.bf16.gmra.mrb[0].mxu0 %v2424
    %v2511 = vpop.f32.mrb[0].mxu0
    %v2512 = vadd.f32 0.0, %v2511
    %v2513 = vpop.f32.mrb[0].mxu0
    %v2514 = vpop.f32.mrb[0].mxu0
    %v2515 = vadd.f32 0.0, %v2514
    %v2516 = vpop.f32.mrb[0].mxu0
    %2517 = vmatprep.mubr.bf16.mxu0 0
    %2518 = vmatmul.mubr.bf16.gmra.mrb[0].mxu0 %v2427
    %v2519 = vpop.f32.mrb[0].mxu0
    %v2520 = vadd.f32 0.0, %v2519
    %v2521 = vpop.f32.mrb[0].mxu0
    %v2522 = vpop.f32.mrb[0].mxu0
    %v2523 = vadd.f32 0.0, %v2522
    %v2524 = vpop.f32.mrb[0].mxu0
    %2525 = vdwg.mxu0
    %vm2526 = vcmp.ge.f32.partialorder %v2464, 0.0
    %vm2527 = vcmp.ge.f32.partialorder %v2467, 0.0
    %vm2528 = vcmp.ge.f32.partialorder %v2472, 0.0
    %vm2529 = vcmp.ge.f32.partialorder %v2475, 0.0
    %vm2530 = vcmp.ge.f32.partialorder %v2480, 0.0
    %vm2531 = vcmp.ge.f32.partialorder %v2483, 0.0
    %vm2532 = vcmp.ge.f32.partialorder %v2488, 0.0
    %vm2533 = vcmp.ge.f32.partialorder %v2491, 0.0
    %vm2534 = vcmp.ge.f32.partialorder %v2496, 0.0
    %vm2535 = vcmp.ge.f32.partialorder %v2499, 0.0
    %vm2536 = vcmp.ge.f32.partialorder %v2504, 0.0
    %vm2537 = vcmp.ge.f32.partialorder %v2507, 0.0
    %vm2538 = vcmp.ge.f32.partialorder %v2512, 0.0
    %vm2539 = vcmp.ge.f32.partialorder %v2515, 0.0
    %vm2540 = vcmp.ge.f32.partialorder %v2520, 0.0
    %vm2541 = vcmp.ge.f32.partialorder %v2523, 0.0
    %v2542 = vmul.f32 %v2464, %v1563
    %v2543 = vmul.f32 %v2467, %v1563
    %v2544 = vmul.f32 %v2472, %v1563
    %v2545 = vmul.f32 %v2475, %v1563
    %v2546 = vmul.f32 %v2480, %v1563
    %v2547 = vmul.f32 %v2483, %v1563
    %v2548 = vmul.f32 %v2488, %v1563
    %v2549 = vmul.f32 %v2491, %v1563
    %v2550 = vmul.f32 %v2496, %v1563
    %v2551 = vmul.f32 %v2499, %v1563
    %v2552 = vmul.f32 %v2504, %v1563
    %v2553 = vmul.f32 %v2507, %v1563
    %v2554 = vmul.f32 %v2512, %v1563
    %v2555 = vmul.f32 %v2515, %v1563
    %v2556 = vmul.f32 %v2520, %v1563
    %v2557 = vmul.f32 %v2523, %v1563
    %v2558 = vsel %vm2526, %v2464, %v2542
    %v2559 = vsel %vm2527, %v2467, %v2543
    %v2560 = vsel %vm2528, %v2472, %v2544
    %v2561 = vsel %vm2529, %v2475, %v2545
    %v2562 = vsel %vm2530, %v2480, %v2546
    %v2563 = vsel %vm2531, %v2483, %v2547
    %v2564 = vsel %vm2532, %v2488, %v2548
    %v2565 = vsel %vm2533, %v2491, %v2549
    %v2566 = vsel %vm2534, %v2496, %v2550
    %v2567 = vsel %vm2535, %v2499, %v2551
    %v2568 = vsel %vm2536, %v2504, %v2552
    %v2569 = vsel %vm2537, %v2507, %v2553
    %v2570 = vsel %vm2538, %v2512, %v2554
    %v2571 = vsel %vm2539, %v2515, %v2555
    %v2572 = vsel %vm2540, %v2520, %v2556
    %v2573 = vsel %vm2541, %v2523, %v2557
    %2574 = vst.msk [vmem:[#allocation8 + $0x1] sm:$0xff] %vm74, %v2558
    %2575 = vst.msk [vmem:[#allocation8 + $0x11] sm:$0xff] %vm74, %v2559
    %2576 = vst.msk [vmem:[#allocation8 + $0x21] sm:$0xff] %vm74, %v2560
    %2577 = vst.msk [vmem:[#allocation8 + $0x31] sm:$0xff] %vm74, %v2561
    %2578 = vst.msk [vmem:[#allocation8 + $0x41] sm:$0xff] %vm74, %v2562
    %2579 = vst.msk [vmem:[#allocation8 + $0x51] sm:$0xff] %vm74, %v2563
    %2580 = vst.msk [vmem:[#allocation8 + $0x61] sm:$0xff] %vm74, %v2564
    %2581 = vst.msk [vmem:[#allocation8 + $0x71] sm:$0xff] %vm74, %v2565
    %2582 = vst.msk [vmem:[#allocation8 + $0xa1] sm:$0xff] %vm74, %v2566
    %2583 = vst.msk [vmem:[#allocation8 + $0xb1] sm:$0xff] %vm74, %v2567
    %2584 = vst.msk [vmem:[#allocation8 + $0xc1] sm:$0xff] %vm74, %v2568
    %2585 = vst.msk [vmem:[#allocation8 + $0xd1] sm:$0xff] %vm74, %v2569
    %2586 = vst.msk [vmem:[#allocation8 + $0xe1] sm:$0xff] %vm74, %v2570
    %2587 = vst.msk [vmem:[#allocation8 + $0xf1] sm:$0xff] %vm74, %v2571
    %2588 = vst.msk [vmem:[#allocation8 + $0x101] sm:$0xff] %vm74, %v2572
    %2589 = vst.msk [vmem:[#allocation8 + $0x111] sm:$0xff] %vm74, %v2573
    %v2590 = vld [vmem:[#allocation4] sm:$0xff]
    %v2591 = vld [vmem:[#allocation4 + $0x10] sm:$0xff]
    %v2592 = vld [vmem:[#allocation4 + $0x20] sm:$0xff]
    %v2593 = vld [vmem:[#allocation4 + $0x30] sm:$0xff]
    %v2594 = vld [vmem:[#allocation4 + $0x40] sm:$0xff]
    %v2595 = vld [vmem:[#allocation4 + $0x50] sm:$0xff]
    %v2596 = vld [vmem:[#allocation4 + $0x60] sm:$0xff]
    %v2597 = vld [vmem:[#allocation4 + $0x70] sm:$0xff]
    %v2598 = vld [vmem:[#allocation4 + $0xa0] sm:$0xff]
    %v2599 = vld [vmem:[#allocation4 + $0xb0] sm:$0xff]
    %v2600 = vld [vmem:[#allocation4 + $0xc0] sm:$0xff]
    %v2601 = vld [vmem:[#allocation4 + $0xd0] sm:$0xff]
    %v2602 = vld [vmem:[#allocation4 + $0xe0] sm:$0xff]
    %v2603 = vld [vmem:[#allocation4 + $0xf0] sm:$0xff]
    %v2604 = vld [vmem:[#allocation4 + $0x100] sm:$0xff]
    %v2605 = vld [vmem:[#allocation4 + $0x110] sm:$0xff]
    %v2606 = vld [vmem:[#allocation5] sm:$0xff]
    %v2607 = vld [vmem:[#allocation5 + $0x10] sm:$0xff]
    %v2608 = vld [vmem:[#allocation5 + $0x20] sm:$0xff]
    %v2609 = vld [vmem:[#allocation5 + $0x30] sm:$0xff]
    %v2610 = vld [vmem:[#allocation5 + $0x40] sm:$0xff]
    %v2611 = vld [vmem:[#allocation5 + $0x50] sm:$0xff]
    %v2612 = vld [vmem:[#allocation5 + $0x60] sm:$0xff]
    %v2613 = vld [vmem:[#allocation5 + $0x70] sm:$0xff]
    %v2614 = vld [vmem:[#allocation5 + $0xa0] sm:$0xff]
    %v2615 = vld [vmem:[#allocation5 + $0xb0] sm:$0xff]
    %v2616 = vld [vmem:[#allocation5 + $0xc0] sm:$0xff]
    %v2617 = vld [vmem:[#allocation5 + $0xd0] sm:$0xff]
    %v2618 = vld [vmem:[#allocation5 + $0xe0] sm:$0xff]
    %v2619 = vld [vmem:[#allocation5 + $0xf0] sm:$0xff]
    %v2620 = vld [vmem:[#allocation5 + $0x100] sm:$0xff]
    %v2621 = vld [vmem:[#allocation5 + $0x110] sm:$0xff]
    %v2622 = vld [vmem:[#allocation4 + $0x1] sm:$0xff]
    %v2623 = vld [vmem:[#allocation4 + $0x11] sm:$0xff]
    %v2624 = vld [vmem:[#allocation4 + $0x21] sm:$0xff]
    %v2625 = vld [vmem:[#allocation4 + $0x31] sm:$0xff]
    %v2626 = vld [vmem:[#allocation4 + $0x41] sm:$0xff]
    %v2627 = vld [vmem:[#allocation4 + $0x51] sm:$0xff]
    %v2628 = vld [vmem:[#allocation4 + $0x61] sm:$0xff]
    %v2629 = vld [vmem:[#allocation4 + $0x71] sm:$0xff]
    %v2630 = vld [vmem:[#allocation4 + $0xa1] sm:$0xff]
    %v2631 = vld [vmem:[#allocation4 + $0xb1] sm:$0xff]
    %v2632 = vld [vmem:[#allocation4 + $0xc1] sm:$0xff]
    %v2633 = vld [vmem:[#allocation4 + $0xd1] sm:$0xff]
    %v2634 = vld [vmem:[#allocation4 + $0xe1] sm:$0xff]
    %v2635 = vld [vmem:[#allocation4 + $0xf1] sm:$0xff]
    %v2636 = vld [vmem:[#allocation4 + $0x101] sm:$0xff]
    %v2637 = vld [vmem:[#allocation4 + $0x111] sm:$0xff]
    %v2638 = vld [vmem:[%s587] sm:$0xff]
    %v2639 = vld [vmem:[%s587 + $0x10] sm:$0xff]
    %v2640 = vld [vmem:[%s587 + $0x20] sm:$0xff]
    %v2641 = vld [vmem:[%s587 + $0x30] sm:$0xff]
    %v2642 = vld [vmem:[%s587 + $0x40] sm:$0xff]
    %v2643 = vld [vmem:[%s587 + $0x50] sm:$0xff]
    %v2644 = vld [vmem:[%s587 + $0x60] sm:$0xff]
    %v2645 = vld [vmem:[%s587 + $0x70] sm:$0xff]
    %v2646 = vld [vmem:[%s587 + $0xa0] sm:$0xff]
    %v2647 = vld [vmem:[%s587 + $0xb0] sm:$0xff]
    %v2648 = vld [vmem:[%s587 + $0xc0] sm:$0xff]
    %v2649 = vld [vmem:[%s587 + $0xd0] sm:$0xff]
    %v2650 = vld [vmem:[%s587 + $0xe0] sm:$0xff]
    %v2651 = vld [vmem:[%s587 + $0xf0] sm:$0xff]
    %v2652 = vld [vmem:[%s587 + $0x100] sm:$0xff]
    %v2653 = vld [vmem:[%s587 + $0x110] sm:$0xff]
    %v2654 = vld [vmem:[%s506] sm:$0xff]
    %v2655 = vld [vmem:[%s506 + $0x10] sm:$0xff]
    %v2656 = vld [vmem:[%s506 + $0x20] sm:$0xff]
    %v2657 = vld [vmem:[%s506 + $0x30] sm:$0xff]
    %v2658 = vld [vmem:[%s506 + $0x40] sm:$0xff]
    %v2659 = vld [vmem:[%s506 + $0x50] sm:$0xff]
    %v2660 = vld [vmem:[%s506 + $0x60] sm:$0xff]
    %v2661 = vld [vmem:[%s506 + $0x70] sm:$0xff]
    %v2662 = vld [vmem:[%s506 + $0xa0] sm:$0xff]
    %v2663 = vld [vmem:[%s506 + $0xb0] sm:$0xff]
    %v2664 = vld [vmem:[%s506 + $0xc0] sm:$0xff]
    %v2665 = vld [vmem:[%s506 + $0xd0] sm:$0xff]
    %v2666 = vld [vmem:[%s506 + $0xe0] sm:$0xff]
    %v2667 = vld [vmem:[%s506 + $0xf0] sm:$0xff]
    %v2668 = vld [vmem:[%s506 + $0x100] sm:$0xff]
    %v2669 = vld [vmem:[%s506 + $0x110] sm:$0xff]
    %v2670 = vld [vmem:[%s587 + $0x1] sm:$0xff]
    %v2671 = vld [vmem:[%s587 + $0x11] sm:$0xff]
    %v2672 = vld [vmem:[%s587 + $0x21] sm:$0xff]
    %v2673 = vld [vmem:[%s587 + $0x31] sm:$0xff]
    %v2674 = vld [vmem:[%s587 + $0x41] sm:$0xff]
    %v2675 = vld [vmem:[%s587 + $0x51] sm:$0xff]
    %v2676 = vld [vmem:[%s587 + $0x61] sm:$0xff]
    %v2677 = vld [vmem:[%s587 + $0x71] sm:$0xff]
    %v2678 = vld [vmem:[%s587 + $0xa1] sm:$0xff]
    %v2679 = vld [vmem:[%s587 + $0xb1] sm:$0xff]
    %v2680 = vld [vmem:[%s587 + $0xc1] sm:$0xff]
    %v2681 = vld [vmem:[%s587 + $0xd1] sm:$0xff]
    %v2682 = vld [vmem:[%s587 + $0xe1] sm:$0xff]
    %v2683 = vld [vmem:[%s587 + $0xf1] sm:$0xff]
    %v2684 = vld [vmem:[%s587 + $0x101] sm:$0xff]
    %v2685 = vld [vmem:[%s587 + $0x111] sm:$0xff]
    %s2686 = scalar_lea.vmem [#allocation4], 16
    %v2687 = vld [vmem:[%s2686] sm:$0xff]
    %v2688 = vld [vmem:[%s2686 + $0x10] sm:$0xff]
    %v2689 = vld [vmem:[%s2686 + $0x20] sm:$0xff]
    %v2690 = vld [vmem:[%s2686 + $0x30] sm:$0xff]
    %v2691 = vld [vmem:[%s2686 + $0x40] sm:$0xff]
    %v2692 = vld [vmem:[%s2686 + $0x50] sm:$0xff]
    %v2693 = vld [vmem:[%s2686 + $0x60] sm:$0xff]
    %v2694 = vld [vmem:[%s2686 + $0x70] sm:$0xff]
    %v2695 = vld [vmem:[%s2686 + $0xa0] sm:$0xff]
    %v2696 = vld [vmem:[%s2686 + $0xb0] sm:$0xff]
    %v2697 = vld [vmem:[%s2686 + $0xc0] sm:$0xff]
    %v2698 = vld [vmem:[%s2686 + $0xd0] sm:$0xff]
    %v2699 = vld [vmem:[%s2686 + $0xe0] sm:$0xff]
    %v2700 = vld [vmem:[%s2686 + $0xf0] sm:$0xff]
    %v2701 = vld [vmem:[%s2686 + $0x100] sm:$0xff]
    %v2702 = vld [vmem:[%s2686 + $0x110] sm:$0xff]
    %s2703 = scalar_lea.vmem [#allocation5], 16
    %v2704 = vld [vmem:[%s2703] sm:$0xff]
    %v2705 = vld [vmem:[%s2703 + $0x10] sm:$0xff]
    %v2706 = vld [vmem:[%s2703 + $0x20] sm:$0xff]
    %v2707 = vld [vmem:[%s2703 + $0x30] sm:$0xff]
    %v2708 = vld [vmem:[%s2703 + $0x40] sm:$0xff]
    %v2709 = vld [vmem:[%s2703 + $0x50] sm:$0xff]
    %v2710 = vld [vmem:[%s2703 + $0x60] sm:$0xff]
    %v2711 = vld [vmem:[%s2703 + $0x70] sm:$0xff]
    %v2712 = vld [vmem:[%s2703 + $0xa0] sm:$0xff]
    %v2713 = vld [vmem:[%s2703 + $0xb0] sm:$0xff]
    %v2714 = vld [vmem:[%s2703 + $0xc0] sm:$0xff]
    %v2715 = vld [vmem:[%s2703 + $0xd0] sm:$0xff]
    %v2716 = vld [vmem:[%s2703 + $0xe0] sm:$0xff]
    %v2717 = vld [vmem:[%s2703 + $0xf0] sm:$0xff]
    %v2718 = vld [vmem:[%s2703 + $0x100] sm:$0xff]
    %v2719 = vld [vmem:[%s2703 + $0x110] sm:$0xff]
    %v2720 = vld [vmem:[%s2686 + $0x1] sm:$0xff]
    %v2721 = vld [vmem:[%s2686 + $0x11] sm:$0xff]
    %v2722 = vld [vmem:[%s2686 + $0x21] sm:$0xff]
    %v2723 = vld [vmem:[%s2686 + $0x31] sm:$0xff]
    %v2724 = vld [vmem:[%s2686 + $0x41] sm:$0xff]
    %v2725 = vld [vmem:[%s2686 + $0x51] sm:$0xff]
    %v2726 = vld [vmem:[%s2686 + $0x61] sm:$0xff]
    %v2727 = vld [vmem:[%s2686 + $0x71] sm:$0xff]
    %v2728 = vld [vmem:[%s2686 + $0xa1] sm:$0xff]
    %v2729 = vld [vmem:[%s2686 + $0xb1] sm:$0xff]
    %v2730 = vld [vmem:[%s2686 + $0xc1] sm:$0xff]
    %v2731 = vld [vmem:[%s2686 + $0xd1] sm:$0xff]
    %v2732 = vld [vmem:[%s2686 + $0xe1] sm:$0xff]
    %v2733 = vld [vmem:[%s2686 + $0xf1] sm:$0xff]
    %v2734 = vld [vmem:[%s2686 + $0x101] sm:$0xff]
    %v2735 = vld [vmem:[%s2686 + $0x111] sm:$0xff]
    %2752 = vrot.lane.b32.xlu0 %v2606, 4
    %v2753 = vpop.permute.xlu0 %2752
    %2754 = vrot.lane.b32.xlu0 %v2607, 4
    %v2755 = vpop.permute.xlu0 %2754
    %2756 = vrot.lane.b32.xlu0 %v2608, 4
    %v2757 = vpop.permute.xlu0 %2756
    %2758 = vrot.lane.b32.xlu0 %v2609, 4
    %v2759 = vpop.permute.xlu0 %2758
    %2760 = vrot.lane.b32.xlu0 %v2610, 4
    %v2761 = vpop.permute.xlu0 %2760
    %2762 = vrot.lane.b32.xlu0 %v2611, 4
    %v2763 = vpop.permute.xlu0 %2762
    %2764 = vrot.lane.b32.xlu0 %v2612, 4
    %v2765 = vpop.permute.xlu0 %2764
    %2766 = vrot.lane.b32.xlu0 %v2613, 4
    %v2767 = vpop.permute.xlu0 %2766
    %2768 = vrot.lane.b32.xlu0 %v2614, 4
    %v2769 = vpop.permute.xlu0 %2768
    %2770 = vrot.lane.b32.xlu0 %v2615, 4
    %v2771 = vpop.permute.xlu0 %2770
    %2772 = vrot.lane.b32.xlu0 %v2616, 4
    %v2773 = vpop.permute.xlu0 %2772
    %2774 = vrot.lane.b32.xlu0 %v2617, 4
    %v2775 = vpop.permute.xlu0 %2774
    %2776 = vrot.lane.b32.xlu0 %v2618, 4
    %v2777 = vpop.permute.xlu0 %2776
    %2778 = vrot.lane.b32.xlu0 %v2619, 4
    %v2779 = vpop.permute.xlu0 %2778
    %2780 = vrot.lane.b32.xlu0 %v2620, 4
    %v2781 = vpop.permute.xlu0 %2780
    %2782 = vrot.lane.b32.xlu0 %v2621, 4
    %v2783 = vpop.permute.xlu0 %2782
    %2816 = vrot.lane.b32.xlu0 %v2622, 8
    %v2817 = vpop.permute.xlu0 %2816
    %2818 = vrot.lane.b32.xlu0 %v2623, 8
    %v2819 = vpop.permute.xlu0 %2818
    %2820 = vrot.lane.b32.xlu0 %v2624, 8
    %v2821 = vpop.permute.xlu0 %2820
    %2822 = vrot.lane.b32.xlu0 %v2625, 8
    %v2823 = vpop.permute.xlu0 %2822
    %2824 = vrot.lane.b32.xlu0 %v2626, 8
    %v2825 = vpop.permute.xlu0 %2824
    %2826 = vrot.lane.b32.xlu0 %v2627, 8
    %v2827 = vpop.permute.xlu0 %2826
    %2828 = vrot.lane.b32.xlu0 %v2628, 8
    %v2829 = vpop.permute.xlu0 %2828
    %2830 = vrot.lane.b32.xlu0 %v2629, 8
    %v2831 = vpop.permute.xlu0 %2830
    %2832 = vrot.lane.b32.xlu0 %v2630, 8
    %v2833 = vpop.permute.xlu0 %2832
    %2834 = vrot.lane.b32.xlu0 %v2631, 8
    %v2835 = vpop.permute.xlu0 %2834
    %2836 = vrot.lane.b32.xlu0 %v2632, 8
    %v2837 = vpop.permute.xlu0 %2836
    %2838 = vrot.lane.b32.xlu0 %v2633, 8
    %v2839 = vpop.permute.xlu0 %2838
    %2840 = vrot.lane.b32.xlu0 %v2634, 8
    %v2841 = vpop.permute.xlu0 %2840
    %2842 = vrot.lane.b32.xlu0 %v2635, 8
    %v2843 = vpop.permute.xlu0 %2842
    %2844 = vrot.lane.b32.xlu0 %v2636, 8
    %v2845 = vpop.permute.xlu0 %2844
    %2846 = vrot.lane.b32.xlu0 %v2637, 8
    %v2847 = vpop.permute.xlu0 %2846
    %2880 = vrot.lane.b32.xlu0 %v2638, 12
    %v2881 = vpop.permute.xlu0 %2880
    %2882 = vrot.lane.b32.xlu0 %v2639, 12
    %v2883 = vpop.permute.xlu0 %2882
    %2884 = vrot.lane.b32.xlu0 %v2640, 12
    %v2885 = vpop.permute.xlu0 %2884
    %2886 = vrot.lane.b32.xlu0 %v2641, 12
    %v2887 = vpop.permute.xlu0 %2886
    %2888 = vrot.lane.b32.xlu0 %v2642, 12
    %v2889 = vpop.permute.xlu0 %2888
    %2890 = vrot.lane.b32.xlu0 %v2643, 12
    %v2891 = vpop.permute.xlu0 %2890
    %2892 = vrot.lane.b32.xlu0 %v2644, 12
    %v2893 = vpop.permute.xlu0 %2892
    %2894 = vrot.lane.b32.xlu0 %v2645, 12
    %v2895 = vpop.permute.xlu0 %2894
    %2896 = vrot.lane.b32.xlu0 %v2646, 12
    %v2897 = vpop.permute.xlu0 %2896
    %2898 = vrot.lane.b32.xlu0 %v2647, 12
    %v2899 = vpop.permute.xlu0 %2898
    %2900 = vrot.lane.b32.xlu0 %v2648, 12
    %v2901 = vpop.permute.xlu0 %2900
    %2902 = vrot.lane.b32.xlu0 %v2649, 12
    %v2903 = vpop.permute.xlu0 %2902
    %2904 = vrot.lane.b32.xlu0 %v2650, 12
    %v2905 = vpop.permute.xlu0 %2904
    %2906 = vrot.lane.b32.xlu0 %v2651, 12
    %v2907 = vpop.permute.xlu0 %2906
    %2908 = vrot.lane.b32.xlu0 %v2652, 12
    %v2909 = vpop.permute.xlu0 %2908
    %2910 = vrot.lane.b32.xlu0 %v2653, 12
    %v2911 = vpop.permute.xlu0 %2910
    %2944 = vrot.lane.b32.xlu0 %v2654, 16
    %v2945 = vpop.permute.xlu0 %2944
    %2946 = vrot.lane.b32.xlu0 %v2655, 16
    %v2947 = vpop.permute.xlu0 %2946
    %2948 = vrot.lane.b32.xlu0 %v2656, 16
    %v2949 = vpop.permute.xlu0 %2948
    %2950 = vrot.lane.b32.xlu0 %v2657, 16
    %v2951 = vpop.permute.xlu0 %2950
    %2952 = vrot.lane.b32.xlu0 %v2658, 16
    %v2953 = vpop.permute.xlu0 %2952
    %2954 = vrot.lane.b32.xlu0 %v2659, 16
    %v2955 = vpop.permute.xlu0 %2954
    %2956 = vrot.lane.b32.xlu0 %v2660, 16
    %v2957 = vpop.permute.xlu0 %2956
    %2958 = vrot.lane.b32.xlu0 %v2661, 16
    %v2959 = vpop.permute.xlu0 %2958
    %2960 = vrot.lane.b32.xlu0 %v2662, 16
    %v2961 = vpop.permute.xlu0 %2960
    %2962 = vrot.lane.b32.xlu0 %v2663, 16
    %v2963 = vpop.permute.xlu0 %2962
    %2964 = vrot.lane.b32.xlu0 %v2664, 16
    %v2965 = vpop.permute.xlu0 %2964
    %2966 = vrot.lane.b32.xlu0 %v2665, 16
    %v2967 = vpop.permute.xlu0 %2966
    %2968 = vrot.lane.b32.xlu0 %v2666, 16
    %v2969 = vpop.permute.xlu0 %2968
    %2970 = vrot.lane.b32.xlu0 %v2667, 16
    %v2971 = vpop.permute.xlu0 %2970
    %2972 = vrot.lane.b32.xlu0 %v2668, 16
    %v2973 = vpop.permute.xlu0 %2972
    %2974 = vrot.lane.b32.xlu0 %v2669, 16
    %v2975 = vpop.permute.xlu0 %2974
    %3008 = vrot.lane.b32.xlu0 %v2670, 20
    %v3009 = vpop.permute.xlu0 %3008
    %3010 = vrot.lane.b32.xlu0 %v2671, 20
    %v3011 = vpop.permute.xlu0 %3010
    %3012 = vrot.lane.b32.xlu0 %v2672, 20
    %v3013 = vpop.permute.xlu0 %3012
    %3014 = vrot.lane.b32.xlu0 %v2673, 20
    %v3015 = vpop.permute.xlu0 %3014
    %3016 = vrot.lane.b32.xlu0 %v2674, 20
    %v3017 = vpop.permute.xlu0 %3016
    %3018 = vrot.lane.b32.xlu0 %v2675, 20
    %v3019 = vpop.permute.xlu0 %3018
    %3020 = vrot.lane.b32.xlu0 %v2676, 20
    %v3021 = vpop.permute.xlu0 %3020
    %3022 = vrot.lane.b32.xlu0 %v2677, 20
    %v3023 = vpop.permute.xlu0 %3022
    %3024 = vrot.lane.b32.xlu0 %v2678, 20
    %v3025 = vpop.permute.xlu0 %3024
    %3026 = vrot.lane.b32.xlu0 %v2679, 20
    %v3027 = vpop.permute.xlu0 %3026
    %3028 = vrot.lane.b32.xlu0 %v2680, 20
    %v3029 = vpop.permute.xlu0 %3028
    %3030 = vrot.lane.b32.xlu0 %v2681, 20
    %v3031 = vpop.permute.xlu0 %3030
    %3032 = vrot.lane.b32.xlu0 %v2682, 20
    %v3033 = vpop.permute.xlu0 %3032
    %3034 = vrot.lane.b32.xlu0 %v2683, 20
    %v3035 = vpop.permute.xlu0 %3034
    %3036 = vrot.lane.b32.xlu0 %v2684, 20
    %v3037 = vpop.permute.xlu0 %3036
    %3038 = vrot.lane.b32.xlu0 %v2685, 20
    %v3039 = vpop.permute.xlu0 %3038
    %3072 = vrot.lane.b32.xlu0 %v2687, 24
    %v3073 = vpop.permute.xlu0 %3072
    %3074 = vrot.lane.b32.xlu0 %v2688, 24
    %v3075 = vpop.permute.xlu0 %3074
    %3076 = vrot.lane.b32.xlu0 %v2689, 24
    %v3077 = vpop.permute.xlu0 %3076
    %3078 = vrot.lane.b32.xlu0 %v2690, 24
    %v3079 = vpop.permute.xlu0 %3078
    %3080 = vrot.lane.b32.xlu0 %v2691, 24
    %v3081 = vpop.permute.xlu0 %3080
    %3082 = vrot.lane.b32.xlu0 %v2692, 24
    %v3083 = vpop.permute.xlu0 %3082
    %3084 = vrot.lane.b32.xlu0 %v2693, 24
    %v3085 = vpop.permute.xlu0 %3084
    %3086 = vrot.lane.b32.xlu0 %v2694, 24
    %v3087 = vpop.permute.xlu0 %3086
    %3088 = vrot.lane.b32.xlu0 %v2695, 24
    %v3089 = vpop.permute.xlu0 %3088
    %3090 = vrot.lane.b32.xlu0 %v2696, 24
    %v3091 = vpop.permute.xlu0 %3090
    %3092 = vrot.lane.b32.xlu0 %v2697, 24
    %v3093 = vpop.permute.xlu0 %3092
    %3094 = vrot.lane.b32.xlu0 %v2698, 24
    %v3095 = vpop.permute.xlu0 %3094
    %3096 = vrot.lane.b32.xlu0 %v2699, 24
    %v3097 = vpop.permute.xlu0 %3096
    %3098 = vrot.lane.b32.xlu0 %v2700, 24
    %v3099 = vpop.permute.xlu0 %3098
    %3100 = vrot.lane.b32.xlu0 %v2701, 24
    %v3101 = vpop.permute.xlu0 %3100
    %3102 = vrot.lane.b32.xlu0 %v2702, 24
    %v3103 = vpop.permute.xlu0 %3102
    %3136 = vrot.lane.b32.xlu0 %v2704, 28
    %v3137 = vpop.permute.xlu0 %3136
    %3138 = vrot.lane.b32.xlu0 %v2705, 28
    %v3139 = vpop.permute.xlu0 %3138
    %3140 = vrot.lane.b32.xlu0 %v2706, 28
    %v3141 = vpop.permute.xlu0 %3140
    %3142 = vrot.lane.b32.xlu0 %v2707, 28
    %v3143 = vpop.permute.xlu0 %3142
    %3144 = vrot.lane.b32.xlu0 %v2708, 28
    %v3145 = vpop.permute.xlu0 %3144
    %3146 = vrot.lane.b32.xlu0 %v2709, 28
    %v3147 = vpop.permute.xlu0 %3146
    %3148 = vrot.lane.b32.xlu0 %v2710, 28
    %v3149 = vpop.permute.xlu0 %3148
    %3150 = vrot.lane.b32.xlu0 %v2711, 28
    %v3151 = vpop.permute.xlu0 %3150
    %3152 = vrot.lane.b32.xlu0 %v2712, 28
    %v3153 = vpop.permute.xlu0 %3152
    %3154 = vrot.lane.b32.xlu0 %v2713, 28
    %v3155 = vpop.permute.xlu0 %3154
    %3156 = vrot.lane.b32.xlu0 %v2714, 28
    %v3157 = vpop.permute.xlu0 %3156
    %3158 = vrot.lane.b32.xlu0 %v2715, 28
    %v3159 = vpop.permute.xlu0 %3158
    %3160 = vrot.lane.b32.xlu0 %v2716, 28
    %v3161 = vpop.permute.xlu0 %3160
    %3162 = vrot.lane.b32.xlu0 %v2717, 28
    %v3163 = vpop.permute.xlu0 %3162
    %3164 = vrot.lane.b32.xlu0 %v2718, 28
    %v3165 = vpop.permute.xlu0 %3164
    %3166 = vrot.lane.b32.xlu0 %v2719, 28
    %v3167 = vpop.permute.xlu0 %3166
    %3200 = vrot.lane.b32.xlu0 %v2720, 32
    %v3201 = vpop.permute.xlu0 %3200
    %3202 = vrot.lane.b32.xlu0 %v2721, 32
    %v3203 = vpop.permute.xlu0 %3202
    %3204 = vrot.lane.b32.xlu0 %v2722, 32
    %v3205 = vpop.permute.xlu0 %3204
    %3206 = vrot.lane.b32.xlu0 %v2723, 32
    %v3207 = vpop.permute.xlu0 %3206
    %3208 = vrot.lane.b32.xlu0 %v2724, 32
    %v3209 = vpop.permute.xlu0 %3208
    %3210 = vrot.lane.b32.xlu0 %v2725, 32
    %v3211 = vpop.permute.xlu0 %3210
    %3212 = vrot.lane.b32.xlu0 %v2726, 32
    %v3213 = vpop.permute.xlu0 %3212
    %3214 = vrot.lane.b32.xlu0 %v2727, 32
    %v3215 = vpop.permute.xlu0 %3214
    %3216 = vrot.lane.b32.xlu0 %v2728, 32
    %v3217 = vpop.permute.xlu0 %3216
    %3218 = vrot.lane.b32.xlu0 %v2729, 32
    %v3219 = vpop.permute.xlu0 %3218
    %3220 = vrot.lane.b32.xlu0 %v2730, 32
    %v3221 = vpop.permute.xlu0 %3220
    %3222 = vrot.lane.b32.xlu0 %v2731, 32
    %v3223 = vpop.permute.xlu0 %3222
    %3224 = vrot.lane.b32.xlu0 %v2732, 32
    %v3225 = vpop.permute.xlu0 %3224
    %3226 = vrot.lane.b32.xlu0 %v2733, 32
    %v3227 = vpop.permute.xlu0 %3226
    %3228 = vrot.lane.b32.xlu0 %v2734, 32
    %v3229 = vpop.permute.xlu0 %3228
    %3230 = vrot.lane.b32.xlu0 %v2735, 32
    %v3231 = vpop.permute.xlu0 %3230
    %v3248 = vsel %vm68, %v2590, %v2753
    %v3249 = vsel %vm68, %v2591, %v2755
    %v3250 = vsel %vm68, %v2592, %v2757
    %v3251 = vsel %vm68, %v2593, %v2759
    %v3252 = vsel %vm68, %v2594, %v2761
    %v3253 = vsel %vm68, %v2595, %v2763
    %v3254 = vsel %vm68, %v2596, %v2765
    %v3255 = vsel %vm68, %v2597, %v2767
    %v3256 = vsel %vm68, %v2598, %v2769
    %v3257 = vsel %vm68, %v2599, %v2771
    %v3258 = vsel %vm68, %v2600, %v2773
    %v3259 = vsel %vm68, %v2601, %v2775
    %v3260 = vsel %vm68, %v2602, %v2777
    %v3261 = vsel %vm68, %v2603, %v2779
    %v3262 = vsel %vm68, %v2604, %v2781
    %v3263 = vsel %vm68, %v2605, %v2783
    %v3264 = vsel %vm74, %v3248, %v2817
    %v3265 = vsel %vm74, %v3249, %v2819
    %v3266 = vsel %vm74, %v3250, %v2821
    %v3267 = vsel %vm74, %v3251, %v2823
    %v3268 = vsel %vm74, %v3252, %v2825
    %v3269 = vsel %vm74, %v3253, %v2827
    %v3270 = vsel %vm74, %v3254, %v2829
    %v3271 = vsel %vm74, %v3255, %v2831
    %v3272 = vsel %vm74, %v3256, %v2833
    %v3273 = vsel %vm74, %v3257, %v2835
    %v3274 = vsel %vm74, %v3258, %v2837
    %v3275 = vsel %vm74, %v3259, %v2839
    %v3276 = vsel %vm74, %v3260, %v2841
    %v3277 = vsel %vm74, %v3261, %v2843
    %v3278 = vsel %vm74, %v3262, %v2845
    %v3279 = vsel %vm74, %v3263, %v2847
    %v3280 = vsel %vm1292, %v3264, %v2881
    %v3281 = vsel %vm1292, %v3265, %v2883
    %v3282 = vsel %vm1292, %v3266, %v2885
    %v3283 = vsel %vm1292, %v3267, %v2887
    %v3284 = vsel %vm1292, %v3268, %v2889
    %v3285 = vsel %vm1292, %v3269, %v2891
    %v3286 = vsel %vm1292, %v3270, %v2893
    %v3287 = vsel %vm1292, %v3271, %v2895
    %v3288 = vsel %vm1292, %v3272, %v2897
    %v3289 = vsel %vm1292, %v3273, %v2899
    %v3290 = vsel %vm1292, %v3274, %v2901
    %v3291 = vsel %vm1292, %v3275, %v2903
    %v3292 = vsel %vm1292, %v3276, %v2905
    %v3293 = vsel %vm1292, %v3277, %v2907
    %v3294 = vsel %vm1292, %v3278, %v2909
    %v3295 = vsel %vm1292, %v3279, %v2911
    %v3296 = vsel %vm1309, %v3280, %v2945
    %v3297 = vsel %vm1309, %v3281, %v2947
    %v3298 = vsel %vm1309, %v3282, %v2949
    %v3299 = vsel %vm1309, %v3283, %v2951
    %v3300 = vsel %vm1309, %v3284, %v2953
    %v3301 = vsel %vm1309, %v3285, %v2955
    %v3302 = vsel %vm1309, %v3286, %v2957
    %v3303 = vsel %vm1309, %v3287, %v2959
    %v3304 = vsel %vm1309, %v3288, %v2961
    %v3305 = vsel %vm1309, %v3289, %v2963
    %v3306 = vsel %vm1309, %v3290, %v2965
    %v3307 = vsel %vm1309, %v3291, %v2967
    %v3308 = vsel %vm1309, %v3292, %v2969
    %v3309 = vsel %vm1309, %v3293, %v2971
    %v3310 = vsel %vm1309, %v3294, %v2973
    %v3311 = vsel %vm1309, %v3295, %v2975
    %v3312 = vsel %vm1326, %v3296, %v3009
    %v3313 = vsel %vm1326, %v3297, %v3011
    %v3314 = vsel %vm1326, %v3298, %v3013
    %v3315 = vsel %vm1326, %v3299, %v3015
    %v3316 = vsel %vm1326, %v3300, %v3017
    %v3317 = vsel %vm1326, %v3301, %v3019
    %v3318 = vsel %vm1326, %v3302, %v3021
    %v3319 = vsel %vm1326, %v3303, %v3023
    %v3320 = vsel %vm1326, %v3304, %v3025
    %v3321 = vsel %vm1326, %v3305, %v3027
    %v3322 = vsel %vm1326, %v3306, %v3029
    %v3323 = vsel %vm1326, %v3307, %v3031
    %v3324 = vsel %vm1326, %v3308, %v3033
    %v3325 = vsel %vm1326, %v3309, %v3035
    %v3326 = vsel %vm1326, %v3310, %v3037
    %v3327 = vsel %vm1326, %v3311, %v3039
    %v3328 = vsel %vm1343, %v3312, %v3073
    %v3329 = vsel %vm1343, %v3313, %v3075
    %v3330 = vsel %vm1343, %v3314, %v3077
    %v3331 = vsel %vm1343, %v3315, %v3079
    %v3332 = vsel %vm1343, %v3316, %v3081
    %v3333 = vsel %vm1343, %v3317, %v3083
    %v3334 = vsel %vm1343, %v3318, %v3085
    %v3335 = vsel %vm1343, %v3319, %v3087
    %v3336 = vsel %vm1343, %v3320, %v3089
    %v3337 = vsel %vm1343, %v3321, %v3091
    %v3338 = vsel %vm1343, %v3322, %v3093
    %v3339 = vsel %vm1343, %v3323, %v3095
    %v3340 = vsel %vm1343, %v3324, %v3097
    %v3341 = vsel %vm1343, %v3325, %v3099
    %v3342 = vsel %vm1343, %v3326, %v3101
    %v3343 = vsel %vm1343, %v3327, %v3103
    %v3344 = vsel %vm1360, %v3328, %v3137
    %v3345 = vsel %vm1360, %v3329, %v3139
    %v3346 = vsel %vm1360, %v3330, %v3141
    %v3347 = vsel %vm1360, %v3331, %v3143
    %v3348 = vsel %vm1360, %v3332, %v3145
    %v3349 = vsel %vm1360, %v3333, %v3147
    %v3350 = vsel %vm1360, %v3334, %v3149
    %v3351 = vsel %vm1360, %v3335, %v3151
    %v3352 = vsel %vm1360, %v3336, %v3153
    %v3353 = vsel %vm1360, %v3337, %v3155
    %v3354 = vsel %vm1360, %v3338, %v3157
    %v3355 = vsel %vm1360, %v3339, %v3159
    %v3356 = vsel %vm1360, %v3340, %v3161
    %v3357 = vsel %vm1360, %v3341, %v3163
    %v3358 = vsel %vm1360, %v3342, %v3165
    %v3359 = vsel %vm1360, %v3343, %v3167
    %v3360 = vsel %vm1377, %v3344, %v3201
    %v3361 = vsel %vm1377, %v3345, %v3203
    %v3362 = vsel %vm1377, %v3346, %v3205
    %v3363 = vsel %vm1377, %v3347, %v3207
    %v3364 = vsel %vm1377, %v3348, %v3209
    %v3365 = vsel %vm1377, %v3349, %v3211
    %v3366 = vsel %vm1377, %v3350, %v3213
    %v3367 = vsel %vm1377, %v3351, %v3215
    %v3368 = vsel %vm1377, %v3352, %v3217
    %v3369 = vsel %vm1377, %v3353, %v3219
    %v3370 = vsel %vm1377, %v3354, %v3221
    %v3371 = vsel %vm1377, %v3355, %v3223
    %v3372 = vsel %vm1377, %v3356, %v3225
    %v3373 = vsel %vm1377, %v3357, %v3227
    %v3374 = vsel %vm1377, %v3358, %v3229
    %v3375 = vsel %vm1377, %v3359, %v3231
    %v3376 = vpack.c.bf16 %v3361, %v3360
    %v3377 = vpack.c.bf16 %v3363, %v3362
    %v3378 = vpack.c.bf16 %v3365, %v3364
    %v3379 = vpack.c.bf16 %v3367, %v3366
    %v3380 = vpack.c.bf16 %v3369, %v3368
    %v3381 = vpack.c.bf16 %v3371, %v3370
    %v3382 = vpack.c.bf16 %v3373, %v3372
    %v3383 = vpack.c.bf16 %v3375, %v3374
    %v3385 = vsel %vm1417, %v3376, 0
    %v3388 = vsel %vm1417, %v3377, 0
    %v3391 = vsel %vm1417, %v3378, 0
    %v3394 = vsel %vm1417, %v3379, 0
    %v3397 = vsel %vm1417, %v3380, 0
    %v3400 = vsel %vm1417, %v3381, 0
    %v3403 = vsel %vm1417, %v3382, 0
    %v3406 = vsel %vm1417, %v3383, 0
    %3408 = vmatprep.subr.bf16.mxu0 0
    %3409 = vmatpush1.bf16.msra.mxu0 %v1412
    %3410 = vmatprep.subr.bf16.mxu0 0
    %3411 = vmatpush1.bf16.msra.mxu0 %v1413
    %3412 = vmatprep.subr.bf16.mxu0 0
    %3413 = vmatpush1.bf16.msra.mxu0 %v1444
    %3414 = vmatprep.subr.bf16.mxu0 0
    %3415 = vmatpush1.bf16.msra.mxu0 0
    %3416 = vmatprep.subr.bf16.mxu0 0
    %3417 = vmatpush1.bf16.msra.mxu0 0
    %3418 = vmatprep.subr.bf16.mxu0 0
    %3419 = vmatpush1.bf16.msra.mxu0 0
    %3420 = vmatprep.subr.bf16.mxu0 0
    %3421 = vmatpush1.bf16.msra.mxu0 0
    %3422 = vmatprep.subr.bf16.mxu0 0
    %3423 = vmatpush1.bf16.msra.mxu0 0
    %3424 = vmatprep.subr.bf16.mxu0 0
    %3425 = vmatpush1.bf16.msra.mxu0 0
    %3426 = vmatprep.subr.bf16.mxu0 0
    %3427 = vmatpush1.bf16.msra.mxu0 0
    %3428 = vmatprep.subr.bf16.mxu0 0
    %3429 = vmatpush1.bf16.msra.mxu0 0
    %3430 = vmatprep.subr.bf16.mxu0 0
    %3431 = vmatpush1.bf16.msra.mxu0 0
    %3432 = vmatprep.subr.bf16.mxu0 0
    %3433 = vmatpush1.bf16.msra.mxu0 0
    %3434 = vmatprep.subr.bf16.mxu0 0
    %3435 = vmatpush1.bf16.msra.mxu0 0
    %3436 = vmatprep.subr.bf16.mxu0 0
    %3437 = vmatpush1.bf16.msra.mxu0 0
    %3438 = vmatprep.subr.bf16.mxu0 0
    %3439 = vmatpush1.bf16.msra.mxu0 0
    %3440 = vmatprep.mubr.bf16.mxu0 0
    %3441 = vmatmul.mubr.bf16.gmra.mrb[0].mxu0 %v3385
    %v3442 = vpop.f32.mrb[0].mxu0
    %v3443 = vadd.f32 0.0, %v3442
    %v3444 = vpop.f32.mrb[0].mxu0
    %v3445 = vpop.f32.mrb[0].mxu0
    %v3446 = vadd.f32 0.0, %v3445
    %v3447 = vpop.f32.mrb[0].mxu0
    %3448 = vmatprep.mubr.bf16.mxu0 0
    %3449 = vmatmul.mubr.bf16.gmra.mrb[0].mxu0 %v3388
    %v3450 = vpop.f32.mrb[0].mxu0
    %v3451 = vadd.f32 0.0, %v3450
    %v3452 = vpop.f32.mrb[0].mxu0
    %v3453 = vpop.f32.mrb[0].mxu0
    %v3454 = vadd.f32 0.0, %v3453
    %v3455 = vpop.f32.mrb[0].mxu0
    %3456 = vmatprep.mubr.bf16.mxu0 0
    %3457 = vmatmul.mubr.bf16.gmra.mrb[0].mxu0 %v3391
    %v3458 = vpop.f32.mrb[0].mxu0
    %v3459 = vadd.f32 0.0, %v3458
    %v3460 = vpop.f32.mrb[0].mxu0
    %v3461 = vpop.f32.mrb[0].mxu0
    %v3462 = vadd.f32 0.0, %v3461
    %v3463 = vpop.f32.mrb[0].mxu0
    %3464 = vmatprep.mubr.bf16.mxu0 0
    %3465 = vmatmul.mubr.bf16.gmra.mrb[0].mxu0 %v3394
    %v3466 = vpop.f32.mrb[0].mxu0
    %v3467 = vadd.f32 0.0, %v3466
    %v3468 = vpop.f32.mrb[0].mxu0
    %v3469 = vpop.f32.mrb[0].mxu0
    %v3470 = vadd.f32 0.0, %v3469
    %v3471 = vpop.f32.mrb[0].mxu0
    %3472 = vmatprep.mubr.bf16.mxu0 0
    %3473 = vmatmul.mubr.bf16.gmra.mrb[0].mxu0 %v3397
    %v3474 = vpop.f32.mrb[0].mxu0
    %v3475 = vadd.f32 0.0, %v3474
    %v3476 = vpop.f32.mrb[0].mxu0
    %v3477 = vpop.f32.mrb[0].mxu0
    %v3478 = vadd.f32 0.0, %v3477
    %v3479 = vpop.f32.mrb[0].mxu0
    %3480 = vmatprep.mubr.bf16.mxu0 0
    %3481 = vmatmul.mubr.bf16.gmra.mrb[0].mxu0 %v3400
    %v3482 = vpop.f32.mrb[0].mxu0
    %v3483 = vadd.f32 0.0, %v3482
    %v3484 = vpop.f32.mrb[0].mxu0
    %v3485 = vpop.f32.mrb[0].mxu0
    %v3486 = vadd.f32 0.0, %v3485
    %v3487 = vpop.f32.mrb[0].mxu0
    %3488 = vmatprep.mubr.bf16.mxu0 0
    %3489 = vmatmul.mubr.bf16.gmra.mrb[0].mxu0 %v3403
    %v3490 = vpop.f32.mrb[0].mxu0
    %v3491 = vadd.f32 0.0, %v3490
    %v3492 = vpop.f32.mrb[0].mxu0
    %v3493 = vpop.f32.mrb[0].mxu0
    %v3494 = vadd.f32 0.0, %v3493
    %v3495 = vpop.f32.mrb[0].mxu0
    %3496 = vmatprep.mubr.bf16.mxu0 0
    %3497 = vmatmul.mubr.bf16.gmra.mrb[0].mxu0 %v3406
    %v3498 = vpop.f32.mrb[0].mxu0
    %v3499 = vadd.f32 0.0, %v3498
    %v3500 = vpop.f32.mrb[0].mxu0
    %v3501 = vpop.f32.mrb[0].mxu0
    %v3502 = vadd.f32 0.0, %v3501
    %v3503 = vpop.f32.mrb[0].mxu0
    %3504 = vdwg.mxu0
    %vm3505 = vcmp.ge.f32.partialorder %v3443, 0.0
    %vm3506 = vcmp.ge.f32.partialorder %v3446, 0.0
    %vm3507 = vcmp.ge.f32.partialorder %v3451, 0.0
    %vm3508 = vcmp.ge.f32.partialorder %v3454, 0.0
    %vm3509 = vcmp.ge.f32.partialorder %v3459, 0.0
    %vm3510 = vcmp.ge.f32.partialorder %v3462, 0.0
    %vm3511 = vcmp.ge.f32.partialorder %v3467, 0.0
    %vm3512 = vcmp.ge.f32.partialorder %v3470, 0.0
    %vm3513 = vcmp.ge.f32.partialorder %v3475, 0.0
    %vm3514 = vcmp.ge.f32.partialorder %v3478, 0.0
    %vm3515 = vcmp.ge.f32.partialorder %v3483, 0.0
    %vm3516 = vcmp.ge.f32.partialorder %v3486, 0.0
    %vm3517 = vcmp.ge.f32.partialorder %v3491, 0.0
    %vm3518 = vcmp.ge.f32.partialorder %v3494, 0.0
    %vm3519 = vcmp.ge.f32.partialorder %v3499, 0.0
    %vm3520 = vcmp.ge.f32.partialorder %v3502, 0.0
    %v3521 = vmul.f32 %v3443, %v1563
    %v3522 = vmul.f32 %v3446, %v1563
    %v3523 = vmul.f32 %v3451, %v1563
    %v3524 = vmul.f32 %v3454, %v1563
    %v3525 = vmul.f32 %v3459, %v1563
    %v3526 = vmul.f32 %v3462, %v1563
    %v3527 = vmul.f32 %v3467, %v1563
    %v3528 = vmul.f32 %v3470, %v1563
    %v3529 = vmul.f32 %v3475, %v1563
    %v3530 = vmul.f32 %v3478, %v1563
    %v3531 = vmul.f32 %v3483, %v1563
    %v3532 = vmul.f32 %v3486, %v1563
    %v3533 = vmul.f32 %v3491, %v1563
    %v3534 = vmul.f32 %v3494, %v1563
    %v3535 = vmul.f32 %v3499, %v1563
    %v3536 = vmul.f32 %v3502, %v1563
    %v3537 = vsel %vm3505, %v3443, %v3521
    %v3538 = vsel %vm3506, %v3446, %v3522
    %v3539 = vsel %vm3507, %v3451, %v3523
    %v3540 = vsel %vm3508, %v3454, %v3524
    %v3541 = vsel %vm3509, %v3459, %v3525
    %v3542 = vsel %vm3510, %v3462, %v3526
    %v3543 = vsel %vm3511, %v3467, %v3527
    %v3544 = vsel %vm3512, %v3470, %v3528
    %v3545 = vsel %vm3513, %v3475, %v3529
    %v3546 = vsel %vm3514, %v3478, %v3530
    %v3547 = vsel %vm3515, %v3483, %v3531
    %v3548 = vsel %vm3516, %v3486, %v3532
    %v3549 = vsel %vm3517, %v3491, %v3533
    %v3550 = vsel %vm3518, %v3494, %v3534
    %v3551 = vsel %vm3519, %v3499, %v3535
    %v3552 = vsel %vm3520, %v3502, %v3536
    %s3553 = scalar_lea.vmem [#allocation7], 16
    %3554 = vst.msk [vmem:[%s3553] sm:$0xff] %vm74, %v3537
    %3555 = vst.msk [vmem:[%s3553 + $0x10] sm:$0xff] %vm74, %v3538
    %3556 = vst.msk [vmem:[%s3553 + $0x20] sm:$0xff] %vm74, %v3539
    %3557 = vst.msk [vmem:[%s3553 + $0x30] sm:$0xff] %vm74, %v3540
    %3558 = vst.msk [vmem:[%s3553 + $0x40] sm:$0xff] %vm74, %v3541
    %3559 = vst.msk [vmem:[%s3553 + $0x50] sm:$0xff] %vm74, %v3542
    %3560 = vst.msk [vmem:[%s3553 + $0x60] sm:$0xff] %vm74, %v3543
    %3561 = vst.msk [vmem:[%s3553 + $0x70] sm:$0xff] %vm74, %v3544
    %3562 = vst.msk [vmem:[%s3553 + $0xa0] sm:$0xff] %vm74, %v3545
    %3563 = vst.msk [vmem:[%s3553 + $0xb0] sm:$0xff] %vm74, %v3546
    %3564 = vst.msk [vmem:[%s3553 + $0xc0] sm:$0xff] %vm74, %v3547
    %3565 = vst.msk [vmem:[%s3553 + $0xd0] sm:$0xff] %vm74, %v3548
    %3566 = vst.msk [vmem:[%s3553 + $0xe0] sm:$0xff] %vm74, %v3549
    %3567 = vst.msk [vmem:[%s3553 + $0xf0] sm:$0xff] %vm74, %v3550
    %3568 = vst.msk [vmem:[%s3553 + $0x100] sm:$0xff] %vm74, %v3551
    %3569 = vst.msk [vmem:[%s3553 + $0x110] sm:$0xff] %vm74, %v3552
    %v3570 = vld [vmem:[#allocation5] sm:$0xff]
    %v3571 = vld [vmem:[#allocation5 + $0x10] sm:$0xff]
    %v3572 = vld [vmem:[#allocation5 + $0x20] sm:$0xff]
    %v3573 = vld [vmem:[#allocation5 + $0x30] sm:$0xff]
    %v3574 = vld [vmem:[#allocation5 + $0x40] sm:$0xff]
    %v3575 = vld [vmem:[#allocation5 + $0x50] sm:$0xff]
    %v3576 = vld [vmem:[#allocation5 + $0x60] sm:$0xff]
    %v3577 = vld [vmem:[#allocation5 + $0x70] sm:$0xff]
    %v3578 = vld [vmem:[#allocation5 + $0xa0] sm:$0xff]
    %v3579 = vld [vmem:[#allocation5 + $0xb0] sm:$0xff]
    %v3580 = vld [vmem:[#allocation5 + $0xc0] sm:$0xff]
    %v3581 = vld [vmem:[#allocation5 + $0xd0] sm:$0xff]
    %v3582 = vld [vmem:[#allocation5 + $0xe0] sm:$0xff]
    %v3583 = vld [vmem:[#allocation5 + $0xf0] sm:$0xff]
    %v3584 = vld [vmem:[#allocation5 + $0x100] sm:$0xff]
    %v3585 = vld [vmem:[#allocation5 + $0x110] sm:$0xff]
    %v3586 = vld [vmem:[#allocation4 + $0x1] sm:$0xff]
    %v3587 = vld [vmem:[#allocation4 + $0x11] sm:$0xff]
    %v3588 = vld [vmem:[#allocation4 + $0x21] sm:$0xff]
    %v3589 = vld [vmem:[#allocation4 + $0x31] sm:$0xff]
    %v3590 = vld [vmem:[#allocation4 + $0x41] sm:$0xff]
    %v3591 = vld [vmem:[#allocation4 + $0x51] sm:$0xff]
    %v3592 = vld [vmem:[#allocation4 + $0x61] sm:$0xff]
    %v3593 = vld [vmem:[#allocation4 + $0x71] sm:$0xff]
    %v3594 = vld [vmem:[#allocation4 + $0xa1] sm:$0xff]
    %v3595 = vld [vmem:[#allocation4 + $0xb1] sm:$0xff]
    %v3596 = vld [vmem:[#allocation4 + $0xc1] sm:$0xff]
    %v3597 = vld [vmem:[#allocation4 + $0xd1] sm:$0xff]
    %v3598 = vld [vmem:[#allocation4 + $0xe1] sm:$0xff]
    %v3599 = vld [vmem:[#allocation4 + $0xf1] sm:$0xff]
    %v3600 = vld [vmem:[#allocation4 + $0x101] sm:$0xff]
    %v3601 = vld [vmem:[#allocation4 + $0x111] sm:$0xff]
    %v3602 = vld [vmem:[#allocation5 + $0x1] sm:$0xff]
    %v3603 = vld [vmem:[#allocation5 + $0x11] sm:$0xff]
    %v3604 = vld [vmem:[#allocation5 + $0x21] sm:$0xff]
    %v3605 = vld [vmem:[#allocation5 + $0x31] sm:$0xff]
    %v3606 = vld [vmem:[#allocation5 + $0x41] sm:$0xff]
    %v3607 = vld [vmem:[#allocation5 + $0x51] sm:$0xff]
    %v3608 = vld [vmem:[#allocation5 + $0x61] sm:$0xff]
    %v3609 = vld [vmem:[#allocation5 + $0x71] sm:$0xff]
    %v3610 = vld [vmem:[#allocation5 + $0xa1] sm:$0xff]
    %v3611 = vld [vmem:[#allocation5 + $0xb1] sm:$0xff]
    %v3612 = vld [vmem:[#allocation5 + $0xc1] sm:$0xff]
    %v3613 = vld [vmem:[#allocation5 + $0xd1] sm:$0xff]
    %v3614 = vld [vmem:[#allocation5 + $0xe1] sm:$0xff]
    %v3615 = vld [vmem:[#allocation5 + $0xf1] sm:$0xff]
    %v3616 = vld [vmem:[#allocation5 + $0x101] sm:$0xff]
    %v3617 = vld [vmem:[#allocation5 + $0x111] sm:$0xff]
    %v3618 = vld [vmem:[%s506] sm:$0xff]
    %v3619 = vld [vmem:[%s506 + $0x10] sm:$0xff]
    %v3620 = vld [vmem:[%s506 + $0x20] sm:$0xff]
    %v3621 = vld [vmem:[%s506 + $0x30] sm:$0xff]
    %v3622 = vld [vmem:[%s506 + $0x40] sm:$0xff]
    %v3623 = vld [vmem:[%s506 + $0x50] sm:$0xff]
    %v3624 = vld [vmem:[%s506 + $0x60] sm:$0xff]
    %v3625 = vld [vmem:[%s506 + $0x70] sm:$0xff]
    %v3626 = vld [vmem:[%s506 + $0xa0] sm:$0xff]
    %v3627 = vld [vmem:[%s506 + $0xb0] sm:$0xff]
    %v3628 = vld [vmem:[%s506 + $0xc0] sm:$0xff]
    %v3629 = vld [vmem:[%s506 + $0xd0] sm:$0xff]
    %v3630 = vld [vmem:[%s506 + $0xe0] sm:$0xff]
    %v3631 = vld [vmem:[%s506 + $0xf0] sm:$0xff]
    %v3632 = vld [vmem:[%s506 + $0x100] sm:$0xff]
    %v3633 = vld [vmem:[%s506 + $0x110] sm:$0xff]
    %v3634 = vld [vmem:[%s587 + $0x1] sm:$0xff]
    %v3635 = vld [vmem:[%s587 + $0x11] sm:$0xff]
    %v3636 = vld [vmem:[%s587 + $0x21] sm:$0xff]
    %v3637 = vld [vmem:[%s587 + $0x31] sm:$0xff]
    %v3638 = vld [vmem:[%s587 + $0x41] sm:$0xff]
    %v3639 = vld [vmem:[%s587 + $0x51] sm:$0xff]
    %v3640 = vld [vmem:[%s587 + $0x61] sm:$0xff]
    %v3641 = vld [vmem:[%s587 + $0x71] sm:$0xff]
    %v3642 = vld [vmem:[%s587 + $0xa1] sm:$0xff]
    %v3643 = vld [vmem:[%s587 + $0xb1] sm:$0xff]
    %v3644 = vld [vmem:[%s587 + $0xc1] sm:$0xff]
    %v3645 = vld [vmem:[%s587 + $0xd1] sm:$0xff]
    %v3646 = vld [vmem:[%s587 + $0xe1] sm:$0xff]
    %v3647 = vld [vmem:[%s587 + $0xf1] sm:$0xff]
    %v3648 = vld [vmem:[%s587 + $0x101] sm:$0xff]
    %v3649 = vld [vmem:[%s587 + $0x111] sm:$0xff]
    %v3650 = vld [vmem:[%s506 + $0x1] sm:$0xff]
    %v3651 = vld [vmem:[%s506 + $0x11] sm:$0xff]
    %v3652 = vld [vmem:[%s506 + $0x21] sm:$0xff]
    %v3653 = vld [vmem:[%s506 + $0x31] sm:$0xff]
    %v3654 = vld [vmem:[%s506 + $0x41] sm:$0xff]
    %v3655 = vld [vmem:[%s506 + $0x51] sm:$0xff]
    %v3656 = vld [vmem:[%s506 + $0x61] sm:$0xff]
    %v3657 = vld [vmem:[%s506 + $0x71] sm:$0xff]
    %v3658 = vld [vmem:[%s506 + $0xa1] sm:$0xff]
    %v3659 = vld [vmem:[%s506 + $0xb1] sm:$0xff]
    %v3660 = vld [vmem:[%s506 + $0xc1] sm:$0xff]
    %v3661 = vld [vmem:[%s506 + $0xd1] sm:$0xff]
    %v3662 = vld [vmem:[%s506 + $0xe1] sm:$0xff]
    %v3663 = vld [vmem:[%s506 + $0xf1] sm:$0xff]
    %v3664 = vld [vmem:[%s506 + $0x101] sm:$0xff]
    %v3665 = vld [vmem:[%s506 + $0x111] sm:$0xff]
    %v3666 = vld [vmem:[%s2703] sm:$0xff]
    %v3667 = vld [vmem:[%s2703 + $0x10] sm:$0xff]
    %v3668 = vld [vmem:[%s2703 + $0x20] sm:$0xff]
    %v3669 = vld [vmem:[%s2703 + $0x30] sm:$0xff]
    %v3670 = vld [vmem:[%s2703 + $0x40] sm:$0xff]
    %v3671 = vld [vmem:[%s2703 + $0x50] sm:$0xff]
    %v3672 = vld [vmem:[%s2703 + $0x60] sm:$0xff]
    %v3673 = vld [vmem:[%s2703 + $0x70] sm:$0xff]
    %v3674 = vld [vmem:[%s2703 + $0xa0] sm:$0xff]
    %v3675 = vld [vmem:[%s2703 + $0xb0] sm:$0xff]
    %v3676 = vld [vmem:[%s2703 + $0xc0] sm:$0xff]
    %v3677 = vld [vmem:[%s2703 + $0xd0] sm:$0xff]
    %v3678 = vld [vmem:[%s2703 + $0xe0] sm:$0xff]
    %v3679 = vld [vmem:[%s2703 + $0xf0] sm:$0xff]
    %v3680 = vld [vmem:[%s2703 + $0x100] sm:$0xff]
    %v3681 = vld [vmem:[%s2703 + $0x110] sm:$0xff]
    %v3682 = vld [vmem:[%s2686 + $0x1] sm:$0xff]
    %v3683 = vld [vmem:[%s2686 + $0x11] sm:$0xff]
    %v3684 = vld [vmem:[%s2686 + $0x21] sm:$0xff]
    %v3685 = vld [vmem:[%s2686 + $0x31] sm:$0xff]
    %v3686 = vld [vmem:[%s2686 + $0x41] sm:$0xff]
    %v3687 = vld [vmem:[%s2686 + $0x51] sm:$0xff]
    %v3688 = vld [vmem:[%s2686 + $0x61] sm:$0xff]
    %v3689 = vld [vmem:[%s2686 + $0x71] sm:$0xff]
    %v3690 = vld [vmem:[%s2686 + $0xa1] sm:$0xff]
    %v3691 = vld [vmem:[%s2686 + $0xb1] sm:$0xff]
    %v3692 = vld [vmem:[%s2686 + $0xc1] sm:$0xff]
    %v3693 = vld [vmem:[%s2686 + $0xd1] sm:$0xff]
    %v3694 = vld [vmem:[%s2686 + $0xe1] sm:$0xff]
    %v3695 = vld [vmem:[%s2686 + $0xf1] sm:$0xff]
    %v3696 = vld [vmem:[%s2686 + $0x101] sm:$0xff]
    %v3697 = vld [vmem:[%s2686 + $0x111] sm:$0xff]
    %v3698 = vld [vmem:[%s2703 + $0x1] sm:$0xff]
    %v3699 = vld [vmem:[%s2703 + $0x11] sm:$0xff]
    %v3700 = vld [vmem:[%s2703 + $0x21] sm:$0xff]
    %v3701 = vld [vmem:[%s2703 + $0x31] sm:$0xff]
    %v3702 = vld [vmem:[%s2703 + $0x41] sm:$0xff]
    %v3703 = vld [vmem:[%s2703 + $0x51] sm:$0xff]
    %v3704 = vld [vmem:[%s2703 + $0x61] sm:$0xff]
    %v3705 = vld [vmem:[%s2703 + $0x71] sm:$0xff]
    %v3706 = vld [vmem:[%s2703 + $0xa1] sm:$0xff]
    %v3707 = vld [vmem:[%s2703 + $0xb1] sm:$0xff]
    %v3708 = vld [vmem:[%s2703 + $0xc1] sm:$0xff]
    %v3709 = vld [vmem:[%s2703 + $0xd1] sm:$0xff]
    %v3710 = vld [vmem:[%s2703 + $0xe1] sm:$0xff]
    %v3711 = vld [vmem:[%s2703 + $0xf1] sm:$0xff]
    %v3712 = vld [vmem:[%s2703 + $0x101] sm:$0xff]
    %v3713 = vld [vmem:[%s2703 + $0x111] sm:$0xff]
    %3730 = vrot.lane.b32.xlu0 %v3586, 4
    %v3731 = vpop.permute.xlu0 %3730
    %3732 = vrot.lane.b32.xlu0 %v3587, 4
    %v3733 = vpop.permute.xlu0 %3732
    %3734 = vrot.lane.b32.xlu0 %v3588, 4
    %v3735 = vpop.permute.xlu0 %3734
    %3736 = vrot.lane.b32.xlu0 %v3589, 4
    %v3737 = vpop.permute.xlu0 %3736
    %3738 = vrot.lane.b32.xlu0 %v3590, 4
    %v3739 = vpop.permute.xlu0 %3738
    %3740 = vrot.lane.b32.xlu0 %v3591, 4
    %v3741 = vpop.permute.xlu0 %3740
    %3742 = vrot.lane.b32.xlu0 %v3592, 4
    %v3743 = vpop.permute.xlu0 %3742
    %3744 = vrot.lane.b32.xlu0 %v3593, 4
    %v3745 = vpop.permute.xlu0 %3744
    %3746 = vrot.lane.b32.xlu0 %v3594, 4
    %v3747 = vpop.permute.xlu0 %3746
    %3748 = vrot.lane.b32.xlu0 %v3595, 4
    %v3749 = vpop.permute.xlu0 %3748
    %3750 = vrot.lane.b32.xlu0 %v3596, 4
    %v3751 = vpop.permute.xlu0 %3750
    %3752 = vrot.lane.b32.xlu0 %v3597, 4
    %v3753 = vpop.permute.xlu0 %3752
    %3754 = vrot.lane.b32.xlu0 %v3598, 4
    %v3755 = vpop.permute.xlu0 %3754
    %3756 = vrot.lane.b32.xlu0 %v3599, 4
    %v3757 = vpop.permute.xlu0 %3756
    %3758 = vrot.lane.b32.xlu0 %v3600, 4
    %v3759 = vpop.permute.xlu0 %3758
    %3760 = vrot.lane.b32.xlu0 %v3601, 4
    %v3761 = vpop.permute.xlu0 %3760
    %3794 = vrot.lane.b32.xlu0 %v3602, 8
    %v3795 = vpop.permute.xlu0 %3794
    %3796 = vrot.lane.b32.xlu0 %v3603, 8
    %v3797 = vpop.permute.xlu0 %3796
    %3798 = vrot.lane.b32.xlu0 %v3604, 8
    %v3799 = vpop.permute.xlu0 %3798
    %3800 = vrot.lane.b32.xlu0 %v3605, 8
    %v3801 = vpop.permute.xlu0 %3800
    %3802 = vrot.lane.b32.xlu0 %v3606, 8
    %v3803 = vpop.permute.xlu0 %3802
    %3804 = vrot.lane.b32.xlu0 %v3607, 8
    %v3805 = vpop.permute.xlu0 %3804
    %3806 = vrot.lane.b32.xlu0 %v3608, 8
    %v3807 = vpop.permute.xlu0 %3806
    %3808 = vrot.lane.b32.xlu0 %v3609, 8
    %v3809 = vpop.permute.xlu0 %3808
    %3810 = vrot.lane.b32.xlu0 %v3610, 8
    %v3811 = vpop.permute.xlu0 %3810
    %3812 = vrot.lane.b32.xlu0 %v3611, 8
    %v3813 = vpop.permute.xlu0 %3812
    %3814 = vrot.lane.b32.xlu0 %v3612, 8
    %v3815 = vpop.permute.xlu0 %3814
    %3816 = vrot.lane.b32.xlu0 %v3613, 8
    %v3817 = vpop.permute.xlu0 %3816
    %3818 = vrot.lane.b32.xlu0 %v3614, 8
    %v3819 = vpop.permute.xlu0 %3818
    %3820 = vrot.lane.b32.xlu0 %v3615, 8
    %v3821 = vpop.permute.xlu0 %3820
    %3822 = vrot.lane.b32.xlu0 %v3616, 8
    %v3823 = vpop.permute.xlu0 %3822
    %3824 = vrot.lane.b32.xlu0 %v3617, 8
    %v3825 = vpop.permute.xlu0 %3824
    %3858 = vrot.lane.b32.xlu0 %v3618, 12
    %v3859 = vpop.permute.xlu0 %3858
    %3860 = vrot.lane.b32.xlu0 %v3619, 12
    %v3861 = vpop.permute.xlu0 %3860
    %3862 = vrot.lane.b32.xlu0 %v3620, 12
    %v3863 = vpop.permute.xlu0 %3862
    %3864 = vrot.lane.b32.xlu0 %v3621, 12
    %v3865 = vpop.permute.xlu0 %3864
    %3866 = vrot.lane.b32.xlu0 %v3622, 12
    %v3867 = vpop.permute.xlu0 %3866
    %3868 = vrot.lane.b32.xlu0 %v3623, 12
    %v3869 = vpop.permute.xlu0 %3868
    %3870 = vrot.lane.b32.xlu0 %v3624, 12
    %v3871 = vpop.permute.xlu0 %3870
    %3872 = vrot.lane.b32.xlu0 %v3625, 12
    %v3873 = vpop.permute.xlu0 %3872
    %3874 = vrot.lane.b32.xlu0 %v3626, 12
    %v3875 = vpop.permute.xlu0 %3874
    %3876 = vrot.lane.b32.xlu0 %v3627, 12
    %v3877 = vpop.permute.xlu0 %3876
    %3878 = vrot.lane.b32.xlu0 %v3628, 12
    %v3879 = vpop.permute.xlu0 %3878
    %3880 = vrot.lane.b32.xlu0 %v3629, 12
    %v3881 = vpop.permute.xlu0 %3880
    %3882 = vrot.lane.b32.xlu0 %v3630, 12
    %v3883 = vpop.permute.xlu0 %3882
    %3884 = vrot.lane.b32.xlu0 %v3631, 12
    %v3885 = vpop.permute.xlu0 %3884
    %3886 = vrot.lane.b32.xlu0 %v3632, 12
    %v3887 = vpop.permute.xlu0 %3886
    %3888 = vrot.lane.b32.xlu0 %v3633, 12
    %v3889 = vpop.permute.xlu0 %3888
    %3922 = vrot.lane.b32.xlu0 %v3634, 16
    %v3923 = vpop.permute.xlu0 %3922
    %3924 = vrot.lane.b32.xlu0 %v3635, 16
    %v3925 = vpop.permute.xlu0 %3924
    %3926 = vrot.lane.b32.xlu0 %v3636, 16
    %v3927 = vpop.permute.xlu0 %3926
    %3928 = vrot.lane.b32.xlu0 %v3637, 16
    %v3929 = vpop.permute.xlu0 %3928
    %3930 = vrot.lane.b32.xlu0 %v3638, 16
    %v3931 = vpop.permute.xlu0 %3930
    %3932 = vrot.lane.b32.xlu0 %v3639, 16
    %v3933 = vpop.permute.xlu0 %3932
    %3934 = vrot.lane.b32.xlu0 %v3640, 16
    %v3935 = vpop.permute.xlu0 %3934
    %3936 = vrot.lane.b32.xlu0 %v3641, 16
    %v3937 = vpop.permute.xlu0 %3936
    %3938 = vrot.lane.b32.xlu0 %v3642, 16
    %v3939 = vpop.permute.xlu0 %3938
    %3940 = vrot.lane.b32.xlu0 %v3643, 16
    %v3941 = vpop.permute.xlu0 %3940
    %3942 = vrot.lane.b32.xlu0 %v3644, 16
    %v3943 = vpop.permute.xlu0 %3942
    %3944 = vrot.lane.b32.xlu0 %v3645, 16
    %v3945 = vpop.permute.xlu0 %3944
    %3946 = vrot.lane.b32.xlu0 %v3646, 16
    %v3947 = vpop.permute.xlu0 %3946
    %3948 = vrot.lane.b32.xlu0 %v3647, 16
    %v3949 = vpop.permute.xlu0 %3948
    %3950 = vrot.lane.b32.xlu0 %v3648, 16
    %v3951 = vpop.permute.xlu0 %3950
    %3952 = vrot.lane.b32.xlu0 %v3649, 16
    %v3953 = vpop.permute.xlu0 %3952
    %3986 = vrot.lane.b32.xlu0 %v3650, 20
    %v3987 = vpop.permute.xlu0 %3986
    %3988 = vrot.lane.b32.xlu0 %v3651, 20
    %v3989 = vpop.permute.xlu0 %3988
    %3990 = vrot.lane.b32.xlu0 %v3652, 20
    %v3991 = vpop.permute.xlu0 %3990
    %3992 = vrot.lane.b32.xlu0 %v3653, 20
    %v3993 = vpop.permute.xlu0 %3992
    %3994 = vrot.lane.b32.xlu0 %v3654, 20
    %v3995 = vpop.permute.xlu0 %3994
    %3996 = vrot.lane.b32.xlu0 %v3655, 20
    %v3997 = vpop.permute.xlu0 %3996
    %3998 = vrot.lane.b32.xlu0 %v3656, 20
    %v3999 = vpop.permute.xlu0 %3998
    %4000 = vrot.lane.b32.xlu0 %v3657, 20
    %v4001 = vpop.permute.xlu0 %4000
    %4002 = vrot.lane.b32.xlu0 %v3658, 20
    %v4003 = vpop.permute.xlu0 %4002
    %4004 = vrot.lane.b32.xlu0 %v3659, 20
    %v4005 = vpop.permute.xlu0 %4004
    %4006 = vrot.lane.b32.xlu0 %v3660, 20
    %v4007 = vpop.permute.xlu0 %4006
    %4008 = vrot.lane.b32.xlu0 %v3661, 20
    %v4009 = vpop.permute.xlu0 %4008
    %4010 = vrot.lane.b32.xlu0 %v3662, 20
    %v4011 = vpop.permute.xlu0 %4010
    %4012 = vrot.lane.b32.xlu0 %v3663, 20
    %v4013 = vpop.permute.xlu0 %4012
    %4014 = vrot.lane.b32.xlu0 %v3664, 20
    %v4015 = vpop.permute.xlu0 %4014
    %4016 = vrot.lane.b32.xlu0 %v3665, 20
    %v4017 = vpop.permute.xlu0 %4016
    %4050 = vrot.lane.b32.xlu0 %v3666, 24
    %v4051 = vpop.permute.xlu0 %4050
    %4052 = vrot.lane.b32.xlu0 %v3667, 24
    %v4053 = vpop.permute.xlu0 %4052
    %4054 = vrot.lane.b32.xlu0 %v3668, 24
    %v4055 = vpop.permute.xlu0 %4054
    %4056 = vrot.lane.b32.xlu0 %v3669, 24
    %v4057 = vpop.permute.xlu0 %4056
    %4058 = vrot.lane.b32.xlu0 %v3670, 24
    %v4059 = vpop.permute.xlu0 %4058
    %4060 = vrot.lane.b32.xlu0 %v3671, 24
    %v4061 = vpop.permute.xlu0 %4060
    %4062 = vrot.lane.b32.xlu0 %v3672, 24
    %v4063 = vpop.permute.xlu0 %4062
    %4064 = vrot.lane.b32.xlu0 %v3673, 24
    %v4065 = vpop.permute.xlu0 %4064
    %4066 = vrot.lane.b32.xlu0 %v3674, 24
    %v4067 = vpop.permute.xlu0 %4066
    %4068 = vrot.lane.b32.xlu0 %v3675, 24
    %v4069 = vpop.permute.xlu0 %4068
    %4070 = vrot.lane.b32.xlu0 %v3676, 24
    %v4071 = vpop.permute.xlu0 %4070
    %4072 = vrot.lane.b32.xlu0 %v3677, 24
    %v4073 = vpop.permute.xlu0 %4072
    %4074 = vrot.lane.b32.xlu0 %v3678, 24
    %v4075 = vpop.permute.xlu0 %4074
    %4076 = vrot.lane.b32.xlu0 %v3679, 24
    %v4077 = vpop.permute.xlu0 %4076
    %4078 = vrot.lane.b32.xlu0 %v3680, 24
    %v4079 = vpop.permute.xlu0 %4078
    %4080 = vrot.lane.b32.xlu0 %v3681, 24
    %v4081 = vpop.permute.xlu0 %4080
    %4114 = vrot.lane.b32.xlu0 %v3682, 28
    %v4115 = vpop.permute.xlu0 %4114
    %4116 = vrot.lane.b32.xlu0 %v3683, 28
    %v4117 = vpop.permute.xlu0 %4116
    %4118 = vrot.lane.b32.xlu0 %v3684, 28
    %v4119 = vpop.permute.xlu0 %4118
    %4120 = vrot.lane.b32.xlu0 %v3685, 28
    %v4121 = vpop.permute.xlu0 %4120
    %4122 = vrot.lane.b32.xlu0 %v3686, 28
    %v4123 = vpop.permute.xlu0 %4122
    %4124 = vrot.lane.b32.xlu0 %v3687, 28
    %v4125 = vpop.permute.xlu0 %4124
    %4126 = vrot.lane.b32.xlu0 %v3688, 28
    %v4127 = vpop.permute.xlu0 %4126
    %4128 = vrot.lane.b32.xlu0 %v3689, 28
    %v4129 = vpop.permute.xlu0 %4128
    %4130 = vrot.lane.b32.xlu0 %v3690, 28
    %v4131 = vpop.permute.xlu0 %4130
    %4132 = vrot.lane.b32.xlu0 %v3691, 28
    %v4133 = vpop.permute.xlu0 %4132
    %4134 = vrot.lane.b32.xlu0 %v3692, 28
    %v4135 = vpop.permute.xlu0 %4134
    %4136 = vrot.lane.b32.xlu0 %v3693, 28
    %v4137 = vpop.permute.xlu0 %4136
    %4138 = vrot.lane.b32.xlu0 %v3694, 28
    %v4139 = vpop.permute.xlu0 %4138
    %4140 = vrot.lane.b32.xlu0 %v3695, 28
    %v4141 = vpop.permute.xlu0 %4140
    %4142 = vrot.lane.b32.xlu0 %v3696, 28
    %v4143 = vpop.permute.xlu0 %4142
    %4144 = vrot.lane.b32.xlu0 %v3697, 28
    %v4145 = vpop.permute.xlu0 %4144
    %4178 = vrot.lane.b32.xlu0 %v3698, 32
    %v4179 = vpop.permute.xlu0 %4178
    %4180 = vrot.lane.b32.xlu0 %v3699, 32
    %v4181 = vpop.permute.xlu0 %4180
    %4182 = vrot.lane.b32.xlu0 %v3700, 32
    %v4183 = vpop.permute.xlu0 %4182
    %4184 = vrot.lane.b32.xlu0 %v3701, 32
    %v4185 = vpop.permute.xlu0 %4184
    %4186 = vrot.lane.b32.xlu0 %v3702, 32
    %v4187 = vpop.permute.xlu0 %4186
    %4188 = vrot.lane.b32.xlu0 %v3703, 32
    %v4189 = vpop.permute.xlu0 %4188
    %4190 = vrot.lane.b32.xlu0 %v3704, 32
    %v4191 = vpop.permute.xlu0 %4190
    %4192 = vrot.lane.b32.xlu0 %v3705, 32
    %v4193 = vpop.permute.xlu0 %4192
    %4194 = vrot.lane.b32.xlu0 %v3706, 32
    %v4195 = vpop.permute.xlu0 %4194
    %4196 = vrot.lane.b32.xlu0 %v3707, 32
    %v4197 = vpop.permute.xlu0 %4196
    %4198 = vrot.lane.b32.xlu0 %v3708, 32
    %v4199 = vpop.permute.xlu0 %4198
    %4200 = vrot.lane.b32.xlu0 %v3709, 32
    %v4201 = vpop.permute.xlu0 %4200
    %4202 = vrot.lane.b32.xlu0 %v3710, 32
    %v4203 = vpop.permute.xlu0 %4202
    %4204 = vrot.lane.b32.xlu0 %v3711, 32
    %v4205 = vpop.permute.xlu0 %4204
    %4206 = vrot.lane.b32.xlu0 %v3712, 32
    %v4207 = vpop.permute.xlu0 %4206
    %4208 = vrot.lane.b32.xlu0 %v3713, 32
    %v4209 = vpop.permute.xlu0 %4208
    %v4226 = vsel %vm68, %v3570, %v3731
    %v4227 = vsel %vm68, %v3571, %v3733
    %v4228 = vsel %vm68, %v3572, %v3735
    %v4229 = vsel %vm68, %v3573, %v3737
    %v4230 = vsel %vm68, %v3574, %v3739
    %v4231 = vsel %vm68, %v3575, %v3741
    %v4232 = vsel %vm68, %v3576, %v3743
    %v4233 = vsel %vm68, %v3577, %v3745
    %v4234 = vsel %vm68, %v3578, %v3747
    %v4235 = vsel %vm68, %v3579, %v3749
    %v4236 = vsel %vm68, %v3580, %v3751
    %v4237 = vsel %vm68, %v3581, %v3753
    %v4238 = vsel %vm68, %v3582, %v3755
    %v4239 = vsel %vm68, %v3583, %v3757
    %v4240 = vsel %vm68, %v3584, %v3759
    %v4241 = vsel %vm68, %v3585, %v3761
    %v4242 = vsel %vm74, %v4226, %v3795
    %v4243 = vsel %vm74, %v4227, %v3797
    %v4244 = vsel %vm74, %v4228, %v3799
    %v4245 = vsel %vm74, %v4229, %v3801
    %v4246 = vsel %vm74, %v4230, %v3803
    %v4247 = vsel %vm74, %v4231, %v3805
    %v4248 = vsel %vm74, %v4232, %v3807
    %v4249 = vsel %vm74, %v4233, %v3809
    %v4250 = vsel %vm74, %v4234, %v3811
    %v4251 = vsel %vm74, %v4235, %v3813
    %v4252 = vsel %vm74, %v4236, %v3815
    %v4253 = vsel %vm74, %v4237, %v3817
    %v4254 = vsel %vm74, %v4238, %v3819
    %v4255 = vsel %vm74, %v4239, %v3821
    %v4256 = vsel %vm74, %v4240, %v3823
    %v4257 = vsel %vm74, %v4241, %v3825
    %v4258 = vsel %vm1292, %v4242, %v3859
    %v4259 = vsel %vm1292, %v4243, %v3861
    %v4260 = vsel %vm1292, %v4244, %v3863
    %v4261 = vsel %vm1292, %v4245, %v3865
    %v4262 = vsel %vm1292, %v4246, %v3867
    %v4263 = vsel %vm1292, %v4247, %v3869
    %v4264 = vsel %vm1292, %v4248, %v3871
    %v4265 = vsel %vm1292, %v4249, %v3873
    %v4266 = vsel %vm1292, %v4250, %v3875
    %v4267 = vsel %vm1292, %v4251, %v3877
    %v4268 = vsel %vm1292, %v4252, %v3879
    %v4269 = vsel %vm1292, %v4253, %v3881
    %v4270 = vsel %vm1292, %v4254, %v3883
    %v4271 = vsel %vm1292, %v4255, %v3885
    %v4272 = vsel %vm1292, %v4256, %v3887
    %v4273 = vsel %vm1292, %v4257, %v3889
    %v4274 = vsel %vm1309, %v4258, %v3923
    %v4275 = vsel %vm1309, %v4259, %v3925
    %v4276 = vsel %vm1309, %v4260, %v3927
    %v4277 = vsel %vm1309, %v4261, %v3929
    %v4278 = vsel %vm1309, %v4262, %v3931
    %v4279 = vsel %vm1309, %v4263, %v3933
    %v4280 = vsel %vm1309, %v4264, %v3935
    %v4281 = vsel %vm1309, %v4265, %v3937
    %v4282 = vsel %vm1309, %v4266, %v3939
    %v4283 = vsel %vm1309, %v4267, %v3941
    %v4284 = vsel %vm1309, %v4268, %v3943
    %v4285 = vsel %vm1309, %v4269, %v3945
    %v4286 = vsel %vm1309, %v4270, %v3947
    %v4287 = vsel %vm1309, %v4271, %v3949
    %v4288 = vsel %vm1309, %v4272, %v3951
    %v4289 = vsel %vm1309, %v4273, %v3953
    %v4290 = vsel %vm1326, %v4274, %v3987
    %v4291 = vsel %vm1326, %v4275, %v3989
    %v4292 = vsel %vm1326, %v4276, %v3991
    %v4293 = vsel %vm1326, %v4277, %v3993
    %v4294 = vsel %vm1326, %v4278, %v3995
    %v4295 = vsel %vm1326, %v4279, %v3997
    %v4296 = vsel %vm1326, %v4280, %v3999
    %v4297 = vsel %vm1326, %v4281, %v4001
    %v4298 = vsel %vm1326, %v4282, %v4003
    %v4299 = vsel %vm1326, %v4283, %v4005
    %v4300 = vsel %vm1326, %v4284, %v4007
    %v4301 = vsel %vm1326, %v4285, %v4009
    %v4302 = vsel %vm1326, %v4286, %v4011
    %v4303 = vsel %vm1326, %v4287, %v4013
    %v4304 = vsel %vm1326, %v4288, %v4015
    %v4305 = vsel %vm1326, %v4289, %v4017
    %v4306 = vsel %vm1343, %v4290, %v4051
    %v4307 = vsel %vm1343, %v4291, %v4053
    %v4308 = vsel %vm1343, %v4292, %v4055
    %v4309 = vsel %vm1343, %v4293, %v4057
    %v4310 = vsel %vm1343, %v4294, %v4059
    %v4311 = vsel %vm1343, %v4295, %v4061
    %v4312 = vsel %vm1343, %v4296, %v4063
    %v4313 = vsel %vm1343, %v4297, %v4065
    %v4314 = vsel %vm1343, %v4298, %v4067
    %v4315 = vsel %vm1343, %v4299, %v4069
    %v4316 = vsel %vm1343, %v4300, %v4071
    %v4317 = vsel %vm1343, %v4301, %v4073
    %v4318 = vsel %vm1343, %v4302, %v4075
    %v4319 = vsel %vm1343, %v4303, %v4077
    %v4320 = vsel %vm1343, %v4304, %v4079
    %v4321 = vsel %vm1343, %v4305, %v4081
    %v4322 = vsel %vm1360, %v4306, %v4115
    %v4323 = vsel %vm1360, %v4307, %v4117
    %v4324 = vsel %vm1360, %v4308, %v4119
    %v4325 = vsel %vm1360, %v4309, %v4121
    %v4326 = vsel %vm1360, %v4310, %v4123
    %v4327 = vsel %vm1360, %v4311, %v4125
    %v4328 = vsel %vm1360, %v4312, %v4127
    %v4329 = vsel %vm1360, %v4313, %v4129
    %v4330 = vsel %vm1360, %v4314, %v4131
    %v4331 = vsel %vm1360, %v4315, %v4133
    %v4332 = vsel %vm1360, %v4316, %v4135
    %v4333 = vsel %vm1360, %v4317, %v4137
    %v4334 = vsel %vm1360, %v4318, %v4139
    %v4335 = vsel %vm1360, %v4319, %v4141
    %v4336 = vsel %vm1360, %v4320, %v4143
    %v4337 = vsel %vm1360, %v4321, %v4145
    %v4338 = vsel %vm1377, %v4322, %v4179
    %v4339 = vsel %vm1377, %v4323, %v4181
    %v4340 = vsel %vm1377, %v4324, %v4183
    %v4341 = vsel %vm1377, %v4325, %v4185
    %v4342 = vsel %vm1377, %v4326, %v4187
    %v4343 = vsel %vm1377, %v4327, %v4189
    %v4344 = vsel %vm1377, %v4328, %v4191
    %v4345 = vsel %vm1377, %v4329, %v4193
    %v4346 = vsel %vm1377, %v4330, %v4195
    %v4347 = vsel %vm1377, %v4331, %v4197
    %v4348 = vsel %vm1377, %v4332, %v4199
    %v4349 = vsel %vm1377, %v4333, %v4201
    %v4350 = vsel %vm1377, %v4334, %v4203
    %v4351 = vsel %vm1377, %v4335, %v4205
    %v4352 = vsel %vm1377, %v4336, %v4207
    %v4353 = vsel %vm1377, %v4337, %v4209
    %v4354 = vpack.c.bf16 %v4339, %v4338
    %v4355 = vpack.c.bf16 %v4341, %v4340
    %v4356 = vpack.c.bf16 %v4343, %v4342
    %v4357 = vpack.c.bf16 %v4345, %v4344
    %v4358 = vpack.c.bf16 %v4347, %v4346
    %v4359 = vpack.c.bf16 %v4349, %v4348
    %v4360 = vpack.c.bf16 %v4351, %v4350
    %v4361 = vpack.c.bf16 %v4353, %v4352
    %v4363 = vsel %vm1417, %v4354, 0
    %v4366 = vsel %vm1417, %v4355, 0
    %v4369 = vsel %vm1417, %v4356, 0
    %v4372 = vsel %vm1417, %v4357, 0
    %v4375 = vsel %vm1417, %v4358, 0
    %v4378 = vsel %vm1417, %v4359, 0
    %v4381 = vsel %vm1417, %v4360, 0
    %v4384 = vsel %vm1417, %v4361, 0
    %4386 = vmatprep.subr.bf16.mxu0 0
    %4387 = vmatpush1.bf16.msra.mxu0 %v1412
    %4388 = vmatprep.subr.bf16.mxu0 0
    %4389 = vmatpush1.bf16.msra.mxu0 %v1413
    %4390 = vmatprep.subr.bf16.mxu0 0
    %4391 = vmatpush1.bf16.msra.mxu0 %v1444
    %4392 = vmatprep.subr.bf16.mxu0 0
    %4393 = vmatpush1.bf16.msra.mxu0 0
    %4394 = vmatprep.subr.bf16.mxu0 0
    %4395 = vmatpush1.bf16.msra.mxu0 0
    %4396 = vmatprep.subr.bf16.mxu0 0
    %4397 = vmatpush1.bf16.msra.mxu0 0
    %4398 = vmatprep.subr.bf16.mxu0 0
    %4399 = vmatpush1.bf16.msra.mxu0 0
    %4400 = vmatprep.subr.bf16.mxu0 0
    %4401 = vmatpush1.bf16.msra.mxu0 0
    %4402 = vmatprep.subr.bf16.mxu0 0
    %4403 = vmatpush1.bf16.msra.mxu0 0
    %4404 = vmatprep.subr.bf16.mxu0 0
    %4405 = vmatpush1.bf16.msra.mxu0 0
    %4406 = vmatprep.subr.bf16.mxu0 0
    %4407 = vmatpush1.bf16.msra.mxu0 0
    %4408 = vmatprep.subr.bf16.mxu0 0
    %4409 = vmatpush1.bf16.msra.mxu0 0
    %4410 = vmatprep.subr.bf16.mxu0 0
    %4411 = vmatpush1.bf16.msra.mxu0 0
    %4412 = vmatprep.subr.bf16.mxu0 0
    %4413 = vmatpush1.bf16.msra.mxu0 0
    %4414 = vmatprep.subr.bf16.mxu0 0
    %4415 = vmatpush1.bf16.msra.mxu0 0
    %4416 = vmatprep.subr.bf16.mxu0 0
    %4417 = vmatpush1.bf16.msra.mxu0 0
    %4418 = vmatprep.mubr.bf16.mxu0 0
    %4419 = vmatmul.mubr.bf16.gmra.mrb[0].mxu0 %v4363
    %v4420 = vpop.f32.mrb[0].mxu0
    %v4421 = vadd.f32 0.0, %v4420
    %v4422 = vpop.f32.mrb[0].mxu0
    %v4423 = vpop.f32.mrb[0].mxu0
    %v4424 = vadd.f32 0.0, %v4423
    %v4425 = vpop.f32.mrb[0].mxu0
    %4426 = vmatprep.mubr.bf16.mxu0 0
    %4427 = vmatmul.mubr.bf16.gmra.mrb[0].mxu0 %v4366
    %v4428 = vpop.f32.mrb[0].mxu0
    %v4429 = vadd.f32 0.0, %v4428
    %v4430 = vpop.f32.mrb[0].mxu0
    %v4431 = vpop.f32.mrb[0].mxu0
    %v4432 = vadd.f32 0.0, %v4431
    %v4433 = vpop.f32.mrb[0].mxu0
    %4434 = vmatprep.mubr.bf16.mxu0 0
    %4435 = vmatmul.mubr.bf16.gmra.mrb[0].mxu0 %v4369
    %v4436 = vpop.f32.mrb[0].mxu0
    %v4437 = vadd.f32 0.0, %v4436
    %v4438 = vpop.f32.mrb[0].mxu0
    %v4439 = vpop.f32.mrb[0].mxu0
    %v4440 = vadd.f32 0.0, %v4439
    %v4441 = vpop.f32.mrb[0].mxu0
    %4442 = vmatprep.mubr.bf16.mxu0 0
    %4443 = vmatmul.mubr.bf16.gmra.mrb[0].mxu0 %v4372
    %v4444 = vpop.f32.mrb[0].mxu0
    %v4445 = vadd.f32 0.0, %v4444
    %v4446 = vpop.f32.mrb[0].mxu0
    %v4447 = vpop.f32.mrb[0].mxu0
    %v4448 = vadd.f32 0.0, %v4447
    %v4449 = vpop.f32.mrb[0].mxu0
    %4450 = vmatprep.mubr.bf16.mxu0 0
    %4451 = vmatmul.mubr.bf16.gmra.mrb[0].mxu0 %v4375
    %v4452 = vpop.f32.mrb[0].mxu0
    %v4453 = vadd.f32 0.0, %v4452
    %v4454 = vpop.f32.mrb[0].mxu0
    %v4455 = vpop.f32.mrb[0].mxu0
    %v4456 = vadd.f32 0.0, %v4455
    %v4457 = vpop.f32.mrb[0].mxu0
    %4458 = vmatprep.mubr.bf16.mxu0 0
    %4459 = vmatmul.mubr.bf16.gmra.mrb[0].mxu0 %v4378
    %v4460 = vpop.f32.mrb[0].mxu0
    %v4461 = vadd.f32 0.0, %v4460
    %v4462 = vpop.f32.mrb[0].mxu0
    %v4463 = vpop.f32.mrb[0].mxu0
    %v4464 = vadd.f32 0.0, %v4463
    %v4465 = vpop.f32.mrb[0].mxu0
    %4466 = vmatprep.mubr.bf16.mxu0 0
    %4467 = vmatmul.mubr.bf16.gmra.mrb[0].mxu0 %v4381
    %v4468 = vpop.f32.mrb[0].mxu0
    %v4469 = vadd.f32 0.0, %v4468
    %v4470 = vpop.f32.mrb[0].mxu0
    %v4471 = vpop.f32.mrb[0].mxu0
    %v4472 = vadd.f32 0.0, %v4471
    %v4473 = vpop.f32.mrb[0].mxu0
    %4474 = vmatprep.mubr.bf16.mxu0 0
    %4475 = vmatmul.mubr.bf16.gmra.mrb[0].mxu0 %v4384
    %v4476 = vpop.f32.mrb[0].mxu0
    %v4477 = vadd.f32 0.0, %v4476
    %v4478 = vpop.f32.mrb[0].mxu0
    %v4479 = vpop.f32.mrb[0].mxu0
    %v4480 = vadd.f32 0.0, %v4479
    %v4481 = vpop.f32.mrb[0].mxu0
    %4482 = vdwg.mxu0
    %vm4483 = vcmp.ge.f32.partialorder %v4421, 0.0
    %vm4484 = vcmp.ge.f32.partialorder %v4424, 0.0
    %vm4485 = vcmp.ge.f32.partialorder %v4429, 0.0
    %vm4486 = vcmp.ge.f32.partialorder %v4432, 0.0
    %vm4487 = vcmp.ge.f32.partialorder %v4437, 0.0
    %vm4488 = vcmp.ge.f32.partialorder %v4440, 0.0
    %vm4489 = vcmp.ge.f32.partialorder %v4445, 0.0
    %vm4490 = vcmp.ge.f32.partialorder %v4448, 0.0
    %vm4491 = vcmp.ge.f32.partialorder %v4453, 0.0
    %vm4492 = vcmp.ge.f32.partialorder %v4456, 0.0
    %vm4493 = vcmp.ge.f32.partialorder %v4461, 0.0
    %vm4494 = vcmp.ge.f32.partialorder %v4464, 0.0
    %vm4495 = vcmp.ge.f32.partialorder %v4469, 0.0
    %vm4496 = vcmp.ge.f32.partialorder %v4472, 0.0
    %vm4497 = vcmp.ge.f32.partialorder %v4477, 0.0
    %vm4498 = vcmp.ge.f32.partialorder %v4480, 0.0
    %v4499 = vmul.f32 %v4421, %v1563
    %v4500 = vmul.f32 %v4424, %v1563
    %v4501 = vmul.f32 %v4429, %v1563
    %v4502 = vmul.f32 %v4432, %v1563
    %v4503 = vmul.f32 %v4437, %v1563
    %v4504 = vmul.f32 %v4440, %v1563
    %v4505 = vmul.f32 %v4445, %v1563
    %v4506 = vmul.f32 %v4448, %v1563
    %v4507 = vmul.f32 %v4453, %v1563
    %v4508 = vmul.f32 %v4456, %v1563
    %v4509 = vmul.f32 %v4461, %v1563
    %v4510 = vmul.f32 %v4464, %v1563
    %v4511 = vmul.f32 %v4469, %v1563
    %v4512 = vmul.f32 %v4472, %v1563
    %v4513 = vmul.f32 %v4477, %v1563
    %v4514 = vmul.f32 %v4480, %v1563
    %v4515 = vsel %vm4483, %v4421, %v4499
    %v4516 = vsel %vm4484, %v4424, %v4500
    %v4517 = vsel %vm4485, %v4429, %v4501
    %v4518 = vsel %vm4486, %v4432, %v4502
    %v4519 = vsel %vm4487, %v4437, %v4503
    %v4520 = vsel %vm4488, %v4440, %v4504
    %v4521 = vsel %vm4489, %v4445, %v4505
    %v4522 = vsel %vm4490, %v4448, %v4506
    %v4523 = vsel %vm4491, %v4453, %v4507
    %v4524 = vsel %vm4492, %v4456, %v4508
    %v4525 = vsel %vm4493, %v4461, %v4509
    %v4526 = vsel %vm4494, %v4464, %v4510
    %v4527 = vsel %vm4495, %v4469, %v4511
    %v4528 = vsel %vm4496, %v4472, %v4512
    %v4529 = vsel %vm4497, %v4477, %v4513
    %v4530 = vsel %vm4498, %v4480, %v4514
    %s4531 = scalar_lea.vmem [#allocation6], 16
    %4532 = vst.msk [vmem:[%s4531 + $0x1] sm:$0xff] %vm74, %v4515
    %4533 = vst.msk [vmem:[%s4531 + $0x11] sm:$0xff] %vm74, %v4516
    %4534 = vst.msk [vmem:[%s4531 + $0x21] sm:$0xff] %vm74, %v4517
    %4535 = vst.msk [vmem:[%s4531 + $0x31] sm:$0xff] %vm74, %v4518
    %4536 = vst.msk [vmem:[%s4531 + $0x41] sm:$0xff] %vm74, %v4519
    %4537 = vst.msk [vmem:[%s4531 + $0x51] sm:$0xff] %vm74, %v4520
    %4538 = vst.msk [vmem:[%s4531 + $0x61] sm:$0xff] %vm74, %v4521
    %4539 = vst.msk [vmem:[%s4531 + $0x71] sm:$0xff] %vm74, %v4522
    %4540 = vst.msk [vmem:[%s4531 + $0xa1] sm:$0xff] %vm74, %v4523
    %4541 = vst.msk [vmem:[%s4531 + $0xb1] sm:$0xff] %vm74, %v4524
    %4542 = vst.msk [vmem:[%s4531 + $0xc1] sm:$0xff] %vm74, %v4525
    %4543 = vst.msk [vmem:[%s4531 + $0xd1] sm:$0xff] %vm74, %v4526
    %4544 = vst.msk [vmem:[%s4531 + $0xe1] sm:$0xff] %vm74, %v4527
    %4545 = vst.msk [vmem:[%s4531 + $0xf1] sm:$0xff] %vm74, %v4528
    %4546 = vst.msk [vmem:[%s4531 + $0x101] sm:$0xff] %vm74, %v4529
    %4547 = vst.msk [vmem:[%s4531 + $0x111] sm:$0xff] %vm74, %v4530
    %v4548 = vld [vmem:[#allocation6] sm:$0xff]
    %v4549 = vld [vmem:[#allocation6 + $0x10] sm:$0xff]
    %v4550 = vld [vmem:[#allocation6 + $0x20] sm:$0xff]
    %v4551 = vld [vmem:[#allocation6 + $0x30] sm:$0xff]
    %v4552 = vld [vmem:[#allocation6 + $0x40] sm:$0xff]
    %v4553 = vld [vmem:[#allocation6 + $0x50] sm:$0xff]
    %v4554 = vld [vmem:[#allocation6 + $0x60] sm:$0xff]
    %v4555 = vld [vmem:[#allocation6 + $0x70] sm:$0xff]
    %v4556 = vld [vmem:[#allocation6 + $0xa0] sm:$0xff]
    %v4557 = vld [vmem:[#allocation6 + $0xb0] sm:$0xff]
    %v4558 = vld [vmem:[#allocation6 + $0xc0] sm:$0xff]
    %v4559 = vld [vmem:[#allocation6 + $0xd0] sm:$0xff]
    %v4560 = vld [vmem:[#allocation6 + $0xe0] sm:$0xff]
    %v4561 = vld [vmem:[#allocation6 + $0xf0] sm:$0xff]
    %v4562 = vld [vmem:[#allocation6 + $0x100] sm:$0xff]
    %v4563 = vld [vmem:[#allocation6 + $0x110] sm:$0xff]
    %v4564 = vld [vmem:[#allocation7] sm:$0xff]
    %v4565 = vld [vmem:[#allocation7 + $0x10] sm:$0xff]
    %v4566 = vld [vmem:[#allocation7 + $0x20] sm:$0xff]
    %v4567 = vld [vmem:[#allocation7 + $0x30] sm:$0xff]
    %v4568 = vld [vmem:[#allocation7 + $0x40] sm:$0xff]
    %v4569 = vld [vmem:[#allocation7 + $0x50] sm:$0xff]
    %v4570 = vld [vmem:[#allocation7 + $0x60] sm:$0xff]
    %v4571 = vld [vmem:[#allocation7 + $0x70] sm:$0xff]
    %v4572 = vld [vmem:[#allocation7 + $0xa0] sm:$0xff]
    %v4573 = vld [vmem:[#allocation7 + $0xb0] sm:$0xff]
    %v4574 = vld [vmem:[#allocation7 + $0xc0] sm:$0xff]
    %v4575 = vld [vmem:[#allocation7 + $0xd0] sm:$0xff]
    %v4576 = vld [vmem:[#allocation7 + $0xe0] sm:$0xff]
    %v4577 = vld [vmem:[#allocation7 + $0xf0] sm:$0xff]
    %v4578 = vld [vmem:[#allocation7 + $0x100] sm:$0xff]
    %v4579 = vld [vmem:[#allocation7 + $0x110] sm:$0xff]
    %v4580 = vld [vmem:[#allocation6 + $0x1] sm:$0xff]
    %v4581 = vld [vmem:[#allocation6 + $0x11] sm:$0xff]
    %v4582 = vld [vmem:[#allocation6 + $0x21] sm:$0xff]
    %v4583 = vld [vmem:[#allocation6 + $0x31] sm:$0xff]
    %v4584 = vld [vmem:[#allocation6 + $0x41] sm:$0xff]
    %v4585 = vld [vmem:[#allocation6 + $0x51] sm:$0xff]
    %v4586 = vld [vmem:[#allocation6 + $0x61] sm:$0xff]
    %v4587 = vld [vmem:[#allocation6 + $0x71] sm:$0xff]
    %v4588 = vld [vmem:[#allocation6 + $0xa1] sm:$0xff]
    %v4589 = vld [vmem:[#allocation6 + $0xb1] sm:$0xff]
    %v4590 = vld [vmem:[#allocation6 + $0xc1] sm:$0xff]
    %v4591 = vld [vmem:[#allocation6 + $0xd1] sm:$0xff]
    %v4592 = vld [vmem:[#allocation6 + $0xe1] sm:$0xff]
    %v4593 = vld [vmem:[#allocation6 + $0xf1] sm:$0xff]
    %v4594 = vld [vmem:[#allocation6 + $0x101] sm:$0xff]
    %v4595 = vld [vmem:[#allocation6 + $0x111] sm:$0xff]
    %v4596 = vld [vmem:[#allocation8] sm:$0xff]
    %v4597 = vld [vmem:[#allocation8 + $0x10] sm:$0xff]
    %v4598 = vld [vmem:[#allocation8 + $0x20] sm:$0xff]
    %v4599 = vld [vmem:[#allocation8 + $0x30] sm:$0xff]
    %v4600 = vld [vmem:[#allocation8 + $0x40] sm:$0xff]
    %v4601 = vld [vmem:[#allocation8 + $0x50] sm:$0xff]
    %v4602 = vld [vmem:[#allocation8 + $0x60] sm:$0xff]
    %v4603 = vld [vmem:[#allocation8 + $0x70] sm:$0xff]
    %v4604 = vld [vmem:[#allocation8 + $0xa0] sm:$0xff]
    %v4605 = vld [vmem:[#allocation8 + $0xb0] sm:$0xff]
    %v4606 = vld [vmem:[#allocation8 + $0xc0] sm:$0xff]
    %v4607 = vld [vmem:[#allocation8 + $0xd0] sm:$0xff]
    %v4608 = vld [vmem:[#allocation8 + $0xe0] sm:$0xff]
    %v4609 = vld [vmem:[#allocation8 + $0xf0] sm:$0xff]
    %v4610 = vld [vmem:[#allocation8 + $0x100] sm:$0xff]
    %v4611 = vld [vmem:[#allocation8 + $0x110] sm:$0xff]
    %v4612 = vld [vmem:[#allocation9] sm:$0xff]
    %v4613 = vld [vmem:[#allocation9 + $0x10] sm:$0xff]
    %v4614 = vld [vmem:[#allocation9 + $0x20] sm:$0xff]
    %v4615 = vld [vmem:[#allocation9 + $0x30] sm:$0xff]
    %v4616 = vld [vmem:[#allocation9 + $0x40] sm:$0xff]
    %v4617 = vld [vmem:[#allocation9 + $0x50] sm:$0xff]
    %v4618 = vld [vmem:[#allocation9 + $0x60] sm:$0xff]
    %v4619 = vld [vmem:[#allocation9 + $0x70] sm:$0xff]
    %v4620 = vld [vmem:[#allocation9 + $0xa0] sm:$0xff]
    %v4621 = vld [vmem:[#allocation9 + $0xb0] sm:$0xff]
    %v4622 = vld [vmem:[#allocation9 + $0xc0] sm:$0xff]
    %v4623 = vld [vmem:[#allocation9 + $0xd0] sm:$0xff]
    %v4624 = vld [vmem:[#allocation9 + $0xe0] sm:$0xff]
    %v4625 = vld [vmem:[#allocation9 + $0xf0] sm:$0xff]
    %v4626 = vld [vmem:[#allocation9 + $0x100] sm:$0xff]
    %v4627 = vld [vmem:[#allocation9 + $0x110] sm:$0xff]
    %v4628 = vld [vmem:[#allocation8 + $0x1] sm:$0xff]
    %v4629 = vld [vmem:[#allocation8 + $0x11] sm:$0xff]
    %v4630 = vld [vmem:[#allocation8 + $0x21] sm:$0xff]
    %v4631 = vld [vmem:[#allocation8 + $0x31] sm:$0xff]
    %v4632 = vld [vmem:[#allocation8 + $0x41] sm:$0xff]
    %v4633 = vld [vmem:[#allocation8 + $0x51] sm:$0xff]
    %v4634 = vld [vmem:[#allocation8 + $0x61] sm:$0xff]
    %v4635 = vld [vmem:[#allocation8 + $0x71] sm:$0xff]
    %v4636 = vld [vmem:[#allocation8 + $0xa1] sm:$0xff]
    %v4637 = vld [vmem:[#allocation8 + $0xb1] sm:$0xff]
    %v4638 = vld [vmem:[#allocation8 + $0xc1] sm:$0xff]
    %v4639 = vld [vmem:[#allocation8 + $0xd1] sm:$0xff]
    %v4640 = vld [vmem:[#allocation8 + $0xe1] sm:$0xff]
    %v4641 = vld [vmem:[#allocation8 + $0xf1] sm:$0xff]
    %v4642 = vld [vmem:[#allocation8 + $0x101] sm:$0xff]
    %v4643 = vld [vmem:[#allocation8 + $0x111] sm:$0xff]
    %v4644 = vld [vmem:[%s4531] sm:$0xff]
    %v4645 = vld [vmem:[%s4531 + $0x10] sm:$0xff]
    %v4646 = vld [vmem:[%s4531 + $0x20] sm:$0xff]
    %v4647 = vld [vmem:[%s4531 + $0x30] sm:$0xff]
    %v4648 = vld [vmem:[%s4531 + $0x40] sm:$0xff]
    %v4649 = vld [vmem:[%s4531 + $0x50] sm:$0xff]
    %v4650 = vld [vmem:[%s4531 + $0x60] sm:$0xff]
    %v4651 = vld [vmem:[%s4531 + $0x70] sm:$0xff]
    %v4652 = vld [vmem:[%s4531 + $0xa0] sm:$0xff]
    %v4653 = vld [vmem:[%s4531 + $0xb0] sm:$0xff]
    %v4654 = vld [vmem:[%s4531 + $0xc0] sm:$0xff]
    %v4655 = vld [vmem:[%s4531 + $0xd0] sm:$0xff]
    %v4656 = vld [vmem:[%s4531 + $0xe0] sm:$0xff]
    %v4657 = vld [vmem:[%s4531 + $0xf0] sm:$0xff]
    %v4658 = vld [vmem:[%s4531 + $0x100] sm:$0xff]
    %v4659 = vld [vmem:[%s4531 + $0x110] sm:$0xff]
    %v4660 = vld [vmem:[%s3553] sm:$0xff]
    %v4661 = vld [vmem:[%s3553 + $0x10] sm:$0xff]
    %v4662 = vld [vmem:[%s3553 + $0x20] sm:$0xff]
    %v4663 = vld [vmem:[%s3553 + $0x30] sm:$0xff]
    %v4664 = vld [vmem:[%s3553 + $0x40] sm:$0xff]
    %v4665 = vld [vmem:[%s3553 + $0x50] sm:$0xff]
    %v4666 = vld [vmem:[%s3553 + $0x60] sm:$0xff]
    %v4667 = vld [vmem:[%s3553 + $0x70] sm:$0xff]
    %v4668 = vld [vmem:[%s3553 + $0xa0] sm:$0xff]
    %v4669 = vld [vmem:[%s3553 + $0xb0] sm:$0xff]
    %v4670 = vld [vmem:[%s3553 + $0xc0] sm:$0xff]
    %v4671 = vld [vmem:[%s3553 + $0xd0] sm:$0xff]
    %v4672 = vld [vmem:[%s3553 + $0xe0] sm:$0xff]
    %v4673 = vld [vmem:[%s3553 + $0xf0] sm:$0xff]
    %v4674 = vld [vmem:[%s3553 + $0x100] sm:$0xff]
    %v4675 = vld [vmem:[%s3553 + $0x110] sm:$0xff]
    %v4676 = vld [vmem:[%s4531 + $0x1] sm:$0xff]
    %v4677 = vld [vmem:[%s4531 + $0x11] sm:$0xff]
    %v4678 = vld [vmem:[%s4531 + $0x21] sm:$0xff]
    %v4679 = vld [vmem:[%s4531 + $0x31] sm:$0xff]
    %v4680 = vld [vmem:[%s4531 + $0x41] sm:$0xff]
    %v4681 = vld [vmem:[%s4531 + $0x51] sm:$0xff]
    %v4682 = vld [vmem:[%s4531 + $0x61] sm:$0xff]
    %v4683 = vld [vmem:[%s4531 + $0x71] sm:$0xff]
    %v4684 = vld [vmem:[%s4531 + $0xa1] sm:$0xff]
    %v4685 = vld [vmem:[%s4531 + $0xb1] sm:$0xff]
    %v4686 = vld [vmem:[%s4531 + $0xc1] sm:$0xff]
    %v4687 = vld [vmem:[%s4531 + $0xd1] sm:$0xff]
    %v4688 = vld [vmem:[%s4531 + $0xe1] sm:$0xff]
    %v4689 = vld [vmem:[%s4531 + $0xf1] sm:$0xff]
    %v4690 = vld [vmem:[%s4531 + $0x101] sm:$0xff]
    %v4691 = vld [vmem:[%s4531 + $0x111] sm:$0xff]
    %4708 = vrot.lane.b32.xlu0 %v4564, 8
    %v4709 = vpop.permute.xlu0 %4708
    %4710 = vrot.lane.b32.xlu0 %v4565, 8
    %v4711 = vpop.permute.xlu0 %4710
    %4712 = vrot.lane.b32.xlu0 %v4566, 8
    %v4713 = vpop.permute.xlu0 %4712
    %4714 = vrot.lane.b32.xlu0 %v4567, 8
    %v4715 = vpop.permute.xlu0 %4714
    %4716 = vrot.lane.b32.xlu0 %v4568, 8
    %v4717 = vpop.permute.xlu0 %4716
    %4718 = vrot.lane.b32.xlu0 %v4569, 8
    %v4719 = vpop.permute.xlu0 %4718
    %4720 = vrot.lane.b32.xlu0 %v4570, 8
    %v4721 = vpop.permute.xlu0 %4720
    %4722 = vrot.lane.b32.xlu0 %v4571, 8
    %v4723 = vpop.permute.xlu0 %4722
    %4724 = vrot.lane.b32.xlu0 %v4572, 8
    %v4725 = vpop.permute.xlu0 %4724
    %4726 = vrot.lane.b32.xlu0 %v4573, 8
    %v4727 = vpop.permute.xlu0 %4726
    %4728 = vrot.lane.b32.xlu0 %v4574, 8
    %v4729 = vpop.permute.xlu0 %4728
    %4730 = vrot.lane.b32.xlu0 %v4575, 8
    %v4731 = vpop.permute.xlu0 %4730
    %4732 = vrot.lane.b32.xlu0 %v4576, 8
    %v4733 = vpop.permute.xlu0 %4732
    %4734 = vrot.lane.b32.xlu0 %v4577, 8
    %v4735 = vpop.permute.xlu0 %4734
    %4736 = vrot.lane.b32.xlu0 %v4578, 8
    %v4737 = vpop.permute.xlu0 %4736
    %4738 = vrot.lane.b32.xlu0 %v4579, 8
    %v4739 = vpop.permute.xlu0 %4738
    %4772 = vrot.lane.b32.xlu0 %v4580, 16
    %v4773 = vpop.permute.xlu0 %4772
    %4774 = vrot.lane.b32.xlu0 %v4581, 16
    %v4775 = vpop.permute.xlu0 %4774
    %4776 = vrot.lane.b32.xlu0 %v4582, 16
    %v4777 = vpop.permute.xlu0 %4776
    %4778 = vrot.lane.b32.xlu0 %v4583, 16
    %v4779 = vpop.permute.xlu0 %4778
    %4780 = vrot.lane.b32.xlu0 %v4584, 16
    %v4781 = vpop.permute.xlu0 %4780
    %4782 = vrot.lane.b32.xlu0 %v4585, 16
    %v4783 = vpop.permute.xlu0 %4782
    %4784 = vrot.lane.b32.xlu0 %v4586, 16
    %v4785 = vpop.permute.xlu0 %4784
    %4786 = vrot.lane.b32.xlu0 %v4587, 16
    %v4787 = vpop.permute.xlu0 %4786
    %4788 = vrot.lane.b32.xlu0 %v4588, 16
    %v4789 = vpop.permute.xlu0 %4788
    %4790 = vrot.lane.b32.xlu0 %v4589, 16
    %v4791 = vpop.permute.xlu0 %4790
    %4792 = vrot.lane.b32.xlu0 %v4590, 16
    %v4793 = vpop.permute.xlu0 %4792
    %4794 = vrot.lane.b32.xlu0 %v4591, 16
    %v4795 = vpop.permute.xlu0 %4794
    %4796 = vrot.lane.b32.xlu0 %v4592, 16
    %v4797 = vpop.permute.xlu0 %4796
    %4798 = vrot.lane.b32.xlu0 %v4593, 16
    %v4799 = vpop.permute.xlu0 %4798
    %4800 = vrot.lane.b32.xlu0 %v4594, 16
    %v4801 = vpop.permute.xlu0 %4800
    %4802 = vrot.lane.b32.xlu0 %v4595, 16
    %v4803 = vpop.permute.xlu0 %4802
    %4836 = vrot.lane.b32.xlu0 %v4596, 24
    %v4837 = vpop.permute.xlu0 %4836
    %4838 = vrot.lane.b32.xlu0 %v4597, 24
    %v4839 = vpop.permute.xlu0 %4838
    %4840 = vrot.lane.b32.xlu0 %v4598, 24
    %v4841 = vpop.permute.xlu0 %4840
    %4842 = vrot.lane.b32.xlu0 %v4599, 24
    %v4843 = vpop.permute.xlu0 %4842
    %4844 = vrot.lane.b32.xlu0 %v4600, 24
    %v4845 = vpop.permute.xlu0 %4844
    %4846 = vrot.lane.b32.xlu0 %v4601, 24
    %v4847 = vpop.permute.xlu0 %4846
    %4848 = vrot.lane.b32.xlu0 %v4602, 24
    %v4849 = vpop.permute.xlu0 %4848
    %4850 = vrot.lane.b32.xlu0 %v4603, 24
    %v4851 = vpop.permute.xlu0 %4850
    %4852 = vrot.lane.b32.xlu0 %v4604, 24
    %v4853 = vpop.permute.xlu0 %4852
    %4854 = vrot.lane.b32.xlu0 %v4605, 24
    %v4855 = vpop.permute.xlu0 %4854
    %4856 = vrot.lane.b32.xlu0 %v4606, 24
    %v4857 = vpop.permute.xlu0 %4856
    %4858 = vrot.lane.b32.xlu0 %v4607, 24
    %v4859 = vpop.permute.xlu0 %4858
    %4860 = vrot.lane.b32.xlu0 %v4608, 24
    %v4861 = vpop.permute.xlu0 %4860
    %4862 = vrot.lane.b32.xlu0 %v4609, 24
    %v4863 = vpop.permute.xlu0 %4862
    %4864 = vrot.lane.b32.xlu0 %v4610, 24
    %v4865 = vpop.permute.xlu0 %4864
    %4866 = vrot.lane.b32.xlu0 %v4611, 24
    %v4867 = vpop.permute.xlu0 %4866
    %4900 = vrot.lane.b32.xlu0 %v4612, 32
    %v4901 = vpop.permute.xlu0 %4900
    %4902 = vrot.lane.b32.xlu0 %v4613, 32
    %v4903 = vpop.permute.xlu0 %4902
    %4904 = vrot.lane.b32.xlu0 %v4614, 32
    %v4905 = vpop.permute.xlu0 %4904
    %4906 = vrot.lane.b32.xlu0 %v4615, 32
    %v4907 = vpop.permute.xlu0 %4906
    %4908 = vrot.lane.b32.xlu0 %v4616, 32
    %v4909 = vpop.permute.xlu0 %4908
    %4910 = vrot.lane.b32.xlu0 %v4617, 32
    %v4911 = vpop.permute.xlu0 %4910
    %4912 = vrot.lane.b32.xlu0 %v4618, 32
    %v4913 = vpop.permute.xlu0 %4912
    %4914 = vrot.lane.b32.xlu0 %v4619, 32
    %v4915 = vpop.permute.xlu0 %4914
    %4916 = vrot.lane.b32.xlu0 %v4620, 32
    %v4917 = vpop.permute.xlu0 %4916
    %4918 = vrot.lane.b32.xlu0 %v4621, 32
    %v4919 = vpop.permute.xlu0 %4918
    %4920 = vrot.lane.b32.xlu0 %v4622, 32
    %v4921 = vpop.permute.xlu0 %4920
    %4922 = vrot.lane.b32.xlu0 %v4623, 32
    %v4923 = vpop.permute.xlu0 %4922
    %4924 = vrot.lane.b32.xlu0 %v4624, 32
    %v4925 = vpop.permute.xlu0 %4924
    %4926 = vrot.lane.b32.xlu0 %v4625, 32
    %v4927 = vpop.permute.xlu0 %4926
    %4928 = vrot.lane.b32.xlu0 %v4626, 32
    %v4929 = vpop.permute.xlu0 %4928
    %4930 = vrot.lane.b32.xlu0 %v4627, 32
    %v4931 = vpop.permute.xlu0 %4930
    %4964 = vrot.lane.b32.xlu0 %v4628, 40
    %v4965 = vpop.permute.xlu0 %4964
    %4966 = vrot.lane.b32.xlu0 %v4629, 40
    %v4967 = vpop.permute.xlu0 %4966
    %4968 = vrot.lane.b32.xlu0 %v4630, 40
    %v4969 = vpop.permute.xlu0 %4968
    %4970 = vrot.lane.b32.xlu0 %v4631, 40
    %v4971 = vpop.permute.xlu0 %4970
    %4972 = vrot.lane.b32.xlu0 %v4632, 40
    %v4973 = vpop.permute.xlu0 %4972
    %4974 = vrot.lane.b32.xlu0 %v4633, 40
    %v4975 = vpop.permute.xlu0 %4974
    %4976 = vrot.lane.b32.xlu0 %v4634, 40
    %v4977 = vpop.permute.xlu0 %4976
    %4978 = vrot.lane.b32.xlu0 %v4635, 40
    %v4979 = vpop.permute.xlu0 %4978
    %4980 = vrot.lane.b32.xlu0 %v4636, 40
    %v4981 = vpop.permute.xlu0 %4980
    %4982 = vrot.lane.b32.xlu0 %v4637, 40
    %v4983 = vpop.permute.xlu0 %4982
    %4984 = vrot.lane.b32.xlu0 %v4638, 40
    %v4985 = vpop.permute.xlu0 %4984
    %4986 = vrot.lane.b32.xlu0 %v4639, 40
    %v4987 = vpop.permute.xlu0 %4986
    %4988 = vrot.lane.b32.xlu0 %v4640, 40
    %v4989 = vpop.permute.xlu0 %4988
    %4990 = vrot.lane.b32.xlu0 %v4641, 40
    %v4991 = vpop.permute.xlu0 %4990
    %4992 = vrot.lane.b32.xlu0 %v4642, 40
    %v4993 = vpop.permute.xlu0 %4992
    %4994 = vrot.lane.b32.xlu0 %v4643, 40
    %v4995 = vpop.permute.xlu0 %4994
    %5028 = vrot.lane.b32.xlu0 %v4644, 48
    %v5029 = vpop.permute.xlu0 %5028
    %5030 = vrot.lane.b32.xlu0 %v4645, 48
    %v5031 = vpop.permute.xlu0 %5030
    %5032 = vrot.lane.b32.xlu0 %v4646, 48
    %v5033 = vpop.permute.xlu0 %5032
    %5034 = vrot.lane.b32.xlu0 %v4647, 48
    %v5035 = vpop.permute.xlu0 %5034
    %5036 = vrot.lane.b32.xlu0 %v4648, 48
    %v5037 = vpop.permute.xlu0 %5036
    %5038 = vrot.lane.b32.xlu0 %v4649, 48
    %v5039 = vpop.permute.xlu0 %5038
    %5040 = vrot.lane.b32.xlu0 %v4650, 48
    %v5041 = vpop.permute.xlu0 %5040
    %5042 = vrot.lane.b32.xlu0 %v4651, 48
    %v5043 = vpop.permute.xlu0 %5042
    %5044 = vrot.lane.b32.xlu0 %v4652, 48
    %v5045 = vpop.permute.xlu0 %5044
    %5046 = vrot.lane.b32.xlu0 %v4653, 48
    %v5047 = vpop.permute.xlu0 %5046
    %5048 = vrot.lane.b32.xlu0 %v4654, 48
    %v5049 = vpop.permute.xlu0 %5048
    %5050 = vrot.lane.b32.xlu0 %v4655, 48
    %v5051 = vpop.permute.xlu0 %5050
    %5052 = vrot.lane.b32.xlu0 %v4656, 48
    %v5053 = vpop.permute.xlu0 %5052
    %5054 = vrot.lane.b32.xlu0 %v4657, 48
    %v5055 = vpop.permute.xlu0 %5054
    %5056 = vrot.lane.b32.xlu0 %v4658, 48
    %v5057 = vpop.permute.xlu0 %5056
    %5058 = vrot.lane.b32.xlu0 %v4659, 48
    %v5059 = vpop.permute.xlu0 %5058
    %5092 = vrot.lane.b32.xlu0 %v4660, 56
    %v5093 = vpop.permute.xlu0 %5092
    %5094 = vrot.lane.b32.xlu0 %v4661, 56
    %v5095 = vpop.permute.xlu0 %5094
    %5096 = vrot.lane.b32.xlu0 %v4662, 56
    %v5097 = vpop.permute.xlu0 %5096
    %5098 = vrot.lane.b32.xlu0 %v4663, 56
    %v5099 = vpop.permute.xlu0 %5098
    %5100 = vrot.lane.b32.xlu0 %v4664, 56
    %v5101 = vpop.permute.xlu0 %5100
    %5102 = vrot.lane.b32.xlu0 %v4665, 56
    %v5103 = vpop.permute.xlu0 %5102
    %5104 = vrot.lane.b32.xlu0 %v4666, 56
    %v5105 = vpop.permute.xlu0 %5104
    %5106 = vrot.lane.b32.xlu0 %v4667, 56
    %v5107 = vpop.permute.xlu0 %5106
    %5108 = vrot.lane.b32.xlu0 %v4668, 56
    %v5109 = vpop.permute.xlu0 %5108
    %5110 = vrot.lane.b32.xlu0 %v4669, 56
    %v5111 = vpop.permute.xlu0 %5110
    %5112 = vrot.lane.b32.xlu0 %v4670, 56
    %v5113 = vpop.permute.xlu0 %5112
    %5114 = vrot.lane.b32.xlu0 %v4671, 56
    %v5115 = vpop.permute.xlu0 %5114
    %5116 = vrot.lane.b32.xlu0 %v4672, 56
    %v5117 = vpop.permute.xlu0 %5116
    %5118 = vrot.lane.b32.xlu0 %v4673, 56
    %v5119 = vpop.permute.xlu0 %5118
    %5120 = vrot.lane.b32.xlu0 %v4674, 56
    %v5121 = vpop.permute.xlu0 %5120
    %5122 = vrot.lane.b32.xlu0 %v4675, 56
    %v5123 = vpop.permute.xlu0 %5122
    %5156 = vrot.lane.b32.xlu0 %v4676, 64
    %v5157 = vpop.permute.xlu0 %5156
    %5158 = vrot.lane.b32.xlu0 %v4677, 64
    %v5159 = vpop.permute.xlu0 %5158
    %5160 = vrot.lane.b32.xlu0 %v4678, 64
    %v5161 = vpop.permute.xlu0 %5160
    %5162 = vrot.lane.b32.xlu0 %v4679, 64
    %v5163 = vpop.permute.xlu0 %5162
    %5164 = vrot.lane.b32.xlu0 %v4680, 64
    %v5165 = vpop.permute.xlu0 %5164
    %5166 = vrot.lane.b32.xlu0 %v4681, 64
    %v5167 = vpop.permute.xlu0 %5166
    %5168 = vrot.lane.b32.xlu0 %v4682, 64
    %v5169 = vpop.permute.xlu0 %5168
    %5170 = vrot.lane.b32.xlu0 %v4683, 64
    %v5171 = vpop.permute.xlu0 %5170
    %5172 = vrot.lane.b32.xlu0 %v4684, 64
    %v5173 = vpop.permute.xlu0 %5172
    %5174 = vrot.lane.b32.xlu0 %v4685, 64
    %v5175 = vpop.permute.xlu0 %5174
    %5176 = vrot.lane.b32.xlu0 %v4686, 64
    %v5177 = vpop.permute.xlu0 %5176
    %5178 = vrot.lane.b32.xlu0 %v4687, 64
    %v5179 = vpop.permute.xlu0 %5178
    %5180 = vrot.lane.b32.xlu0 %v4688, 64
    %v5181 = vpop.permute.xlu0 %5180
    %5182 = vrot.lane.b32.xlu0 %v4689, 64
    %v5183 = vpop.permute.xlu0 %5182
    %5184 = vrot.lane.b32.xlu0 %v4690, 64
    %v5185 = vpop.permute.xlu0 %5184
    %5186 = vrot.lane.b32.xlu0 %v4691, 64
    %v5187 = vpop.permute.xlu0 %5186
    %v5204 = vsel %vm74, %v4548, %v4709
    %v5205 = vsel %vm74, %v4549, %v4711
    %v5206 = vsel %vm74, %v4550, %v4713
    %v5207 = vsel %vm74, %v4551, %v4715
    %v5208 = vsel %vm74, %v4552, %v4717
    %v5209 = vsel %vm74, %v4553, %v4719
    %v5210 = vsel %vm74, %v4554, %v4721
    %v5211 = vsel %vm74, %v4555, %v4723
    %v5212 = vsel %vm74, %v4556, %v4725
    %v5213 = vsel %vm74, %v4557, %v4727
    %v5214 = vsel %vm74, %v4558, %v4729
    %v5215 = vsel %vm74, %v4559, %v4731
    %v5216 = vsel %vm74, %v4560, %v4733
    %v5217 = vsel %vm74, %v4561, %v4735
    %v5218 = vsel %vm74, %v4562, %v4737
    %v5219 = vsel %vm74, %v4563, %v4739
    %v5220 = vsel %vm1309, %v5204, %v4773
    %v5221 = vsel %vm1309, %v5205, %v4775
    %v5222 = vsel %vm1309, %v5206, %v4777
    %v5223 = vsel %vm1309, %v5207, %v4779
    %v5224 = vsel %vm1309, %v5208, %v4781
    %v5225 = vsel %vm1309, %v5209, %v4783
    %v5226 = vsel %vm1309, %v5210, %v4785
    %v5227 = vsel %vm1309, %v5211, %v4787
    %v5228 = vsel %vm1309, %v5212, %v4789
    %v5229 = vsel %vm1309, %v5213, %v4791
    %v5230 = vsel %vm1309, %v5214, %v4793
    %v5231 = vsel %vm1309, %v5215, %v4795
    %v5232 = vsel %vm1309, %v5216, %v4797
    %v5233 = vsel %vm1309, %v5217, %v4799
    %v5234 = vsel %vm1309, %v5218, %v4801
    %v5235 = vsel %vm1309, %v5219, %v4803
    %v5236 = vsel %vm1343, %v5220, %v4837
    %v5237 = vsel %vm1343, %v5221, %v4839
    %v5238 = vsel %vm1343, %v5222, %v4841
    %v5239 = vsel %vm1343, %v5223, %v4843
    %v5240 = vsel %vm1343, %v5224, %v4845
    %v5241 = vsel %vm1343, %v5225, %v4847
    %v5242 = vsel %vm1343, %v5226, %v4849
    %v5243 = vsel %vm1343, %v5227, %v4851
    %v5244 = vsel %vm1343, %v5228, %v4853
    %v5245 = vsel %vm1343, %v5229, %v4855
    %v5246 = vsel %vm1343, %v5230, %v4857
    %v5247 = vsel %vm1343, %v5231, %v4859
    %v5248 = vsel %vm1343, %v5232, %v4861
    %v5249 = vsel %vm1343, %v5233, %v4863
    %v5250 = vsel %vm1343, %v5234, %v4865
    %v5251 = vsel %vm1343, %v5235, %v4867
    %v5252 = vsel %vm1377, %v5236, %v4901
    %v5253 = vsel %vm1377, %v5237, %v4903
    %v5254 = vsel %vm1377, %v5238, %v4905
    %v5255 = vsel %vm1377, %v5239, %v4907
    %v5256 = vsel %vm1377, %v5240, %v4909
    %v5257 = vsel %vm1377, %v5241, %v4911
    %v5258 = vsel %vm1377, %v5242, %v4913
    %v5259 = vsel %vm1377, %v5243, %v4915
    %v5260 = vsel %vm1377, %v5244, %v4917
    %v5261 = vsel %vm1377, %v5245, %v4919
    %v5262 = vsel %vm1377, %v5246, %v4921
    %v5263 = vsel %vm1377, %v5247, %v4923
    %v5264 = vsel %vm1377, %v5248, %v4925
    %v5265 = vsel %vm1377, %v5249, %v4927
    %v5266 = vsel %vm1377, %v5250, %v4929
    %v5267 = vsel %vm1377, %v5251, %v4931
    %vm5268 = vcmask 326656
    %v5269 = vsel %vm5268, %v5252, %v4965
    %v5270 = vsel %vm5268, %v5253, %v4967
    %v5271 = vsel %vm5268, %v5254, %v4969
    %v5272 = vsel %vm5268, %v5255, %v4971
    %v5273 = vsel %vm5268, %v5256, %v4973
    %v5274 = vsel %vm5268, %v5257, %v4975
    %v5275 = vsel %vm5268, %v5258, %v4977
    %v5276 = vsel %vm5268, %v5259, %v4979
    %v5277 = vsel %vm5268, %v5260, %v4981
    %v5278 = vsel %vm5268, %v5261, %v4983
    %v5279 = vsel %vm5268, %v5262, %v4985
    %v5280 = vsel %vm5268, %v5263, %v4987
    %v5281 = vsel %vm5268, %v5264, %v4989
    %v5282 = vsel %vm5268, %v5265, %v4991
    %v5283 = vsel %vm5268, %v5266, %v4993
    %v5284 = vsel %vm5268, %v5267, %v4995
    %vm5285 = vcmask 392192
    %v5286 = vsel %vm5285, %v5269, %v5029
    %v5287 = vsel %vm5285, %v5270, %v5031
    %v5288 = vsel %vm5285, %v5271, %v5033
    %v5289 = vsel %vm5285, %v5272, %v5035
    %v5290 = vsel %vm5285, %v5273, %v5037
    %v5291 = vsel %vm5285, %v5274, %v5039
    %v5292 = vsel %vm5285, %v5275, %v5041
    %v5293 = vsel %vm5285, %v5276, %v5043
    %v5294 = vsel %vm5285, %v5277, %v5045
    %v5295 = vsel %vm5285, %v5278, %v5047
    %v5296 = vsel %vm5285, %v5279, %v5049
    %v5297 = vsel %vm5285, %v5280, %v5051
    %v5298 = vsel %vm5285, %v5281, %v5053
    %v5299 = vsel %vm5285, %v5282, %v5055
    %v5300 = vsel %vm5285, %v5283, %v5057
    %v5301 = vsel %vm5285, %v5284, %v5059
    %vm5302 = vcmask 457728
    %v5303 = vsel %vm5302, %v5286, %v5093
    %v5304 = vsel %vm5302, %v5287, %v5095
    %v5305 = vsel %vm5302, %v5288, %v5097
    %v5306 = vsel %vm5302, %v5289, %v5099
    %v5307 = vsel %vm5302, %v5290, %v5101
    %v5308 = vsel %vm5302, %v5291, %v5103
    %v5309 = vsel %vm5302, %v5292, %v5105
    %v5310 = vsel %vm5302, %v5293, %v5107
    %v5311 = vsel %vm5302, %v5294, %v5109
    %v5312 = vsel %vm5302, %v5295, %v5111
    %v5313 = vsel %vm5302, %v5296, %v5113
    %v5314 = vsel %vm5302, %v5297, %v5115
    %v5315 = vsel %vm5302, %v5298, %v5117
    %v5316 = vsel %vm5302, %v5299, %v5119
    %v5317 = vsel %vm5302, %v5300, %v5121
    %v5318 = vsel %vm5302, %v5301, %v5123
    %vm5319 = vcmask 523264
    %v5320 = vsel %vm5319, %v5303, %v5157
    %v5321 = vsel %vm5319, %v5304, %v5159
    %v5322 = vsel %vm5319, %v5305, %v5161
    %v5323 = vsel %vm5319, %v5306, %v5163
    %v5324 = vsel %vm5319, %v5307, %v5165
    %v5325 = vsel %vm5319, %v5308, %v5167
    %v5326 = vsel %vm5319, %v5309, %v5169
    %v5327 = vsel %vm5319, %v5310, %v5171
    %v5328 = vsel %vm5319, %v5311, %v5173
    %v5329 = vsel %vm5319, %v5312, %v5175
    %v5330 = vsel %vm5319, %v5313, %v5177
    %v5331 = vsel %vm5319, %v5314, %v5179
    %v5332 = vsel %vm5319, %v5315, %v5181
    %v5333 = vsel %vm5319, %v5316, %v5183
    %v5334 = vsel %vm5319, %v5317, %v5185
    %v5335 = vsel %vm5319, %v5318, %v5187
    %v5336 = vpack.c.bf16 %v5321, %v5320
    %v5337 = vpack.c.bf16 %v5323, %v5322
    %v5338 = vpack.c.bf16 %v5325, %v5324
    %v5339 = vpack.c.bf16 %v5327, %v5326
    %v5340 = vpack.c.bf16 %v5329, %v5328
    %v5341 = vpack.c.bf16 %v5331, %v5330
    %v5342 = vpack.c.bf16 %v5333, %v5332
    %v5343 = vpack.c.bf16 %v5335, %v5334
    %v5353 = vunpack.c.l.b16 %v54
    %v5354 = vunpack.c.l.b16 %v55
    %v5355 = vunpack.c.l.b16 %v56
    %v5356 = vunpack.c.l.b16 %v57
    %v5357 = vunpack.c.l.b16 %v58
    %v5358 = vunpack.c.l.b16 %v59
    %v5359 = vunpack.c.l.b16 %v60
    %v5360 = vunpack.c.l.b16 %v61
    %v5361 = vunpack.c.l.b16 %v62
    %v5362 = vpack.c.b16 %v5354, %v5353
    %v5363 = vpack.c.b16 %v5356, %v5355
    %v5364 = vpack.c.b16 %v5358, %v5357
    %v5365 = vpack.c.b16 %v5360, %v5359
    %v5366 = vpack.c.b16 %v5361, %v5361
    %vm5371 = vcmask 588800
    %v5373 = vsel %vm5371, %v5336, 0
    %v5376 = vsel %vm5371, %v5337, 0
    %v5379 = vsel %vm5371, %v5338, 0
    %v5382 = vsel %vm5371, %v5339, 0
    %v5385 = vsel %vm5371, %v5340, 0
    %v5388 = vsel %vm5371, %v5341, 0
    %v5391 = vsel %vm5371, %v5342, 0
    %v5394 = vsel %vm5371, %v5343, 0
    %vm5396 = vcmask 1043456
    %v5398 = vsel %vm5396, %v5366, 0
    %5400 = vmatprep.subr.bf16.mxu0 0
    %5401 = vmatpush1.bf16.msra.mxu0 %v5362
    %5402 = vmatprep.subr.bf16.mxu0 0
    %5403 = vmatpush1.bf16.msra.mxu0 %v5363
    %5404 = vmatprep.subr.bf16.mxu0 0
    %5405 = vmatpush1.bf16.msra.mxu0 %v5364
    %5406 = vmatprep.subr.bf16.mxu0 0
    %5407 = vmatpush1.bf16.msra.mxu0 %v5365
    %5408 = vmatprep.subr.bf16.mxu0 0
    %5409 = vmatpush1.bf16.msra.mxu0 %v5398
    %5410 = vmatprep.subr.bf16.mxu0 0
    %5411 = vmatpush1.bf16.msra.mxu0 0
    %5412 = vmatprep.subr.bf16.mxu0 0
    %5413 = vmatpush1.bf16.msra.mxu0 0
    %5414 = vmatprep.subr.bf16.mxu0 0
    %5415 = vmatpush1.bf16.msra.mxu0 0
    %5416 = vmatprep.subr.bf16.mxu0 0
    %5417 = vmatpush1.bf16.msra.mxu0 0
    %5418 = vmatprep.subr.bf16.mxu0 0
    %5419 = vmatpush1.bf16.msra.mxu0 0
    %5420 = vmatprep.subr.bf16.mxu0 0
    %5421 = vmatpush1.bf16.msra.mxu0 0
    %5422 = vmatprep.subr.bf16.mxu0 0
    %5423 = vmatpush1.bf16.msra.mxu0 0
    %5424 = vmatprep.subr.bf16.mxu0 0
    %5425 = vmatpush1.bf16.msra.mxu0 0
    %5426 = vmatprep.subr.bf16.mxu0 0
    %5427 = vmatpush1.bf16.msra.mxu0 0
    %5428 = vmatprep.subr.bf16.mxu0 0
    %5429 = vmatpush1.bf16.msra.mxu0 0
    %5430 = vmatprep.subr.bf16.mxu0 0
    %5431 = vmatpush1.bf16.msra.mxu0 0
    %5432 = vmatprep.mubr.bf16.mxu0 0
    %5433 = vmatmul.mubr.bf16.gmra.mrb[0].mxu0 %v5373
    %v5434 = vpop.f32.mrb[0].mxu0
    %v5435 = vadd.f32 0.0, %v5434
    %v5436 = vpop.f32.mrb[0].mxu0
    %v5437 = vpop.f32.mrb[0].mxu0
    %v5438 = vadd.f32 0.0, %v5437
    %v5439 = vpop.f32.mrb[0].mxu0
    %5440 = vmatprep.mubr.bf16.mxu0 0
    %5441 = vmatmul.mubr.bf16.gmra.mrb[0].mxu0 %v5376
    %v5442 = vpop.f32.mrb[0].mxu0
    %v5443 = vadd.f32 0.0, %v5442
    %v5444 = vpop.f32.mrb[0].mxu0
    %v5445 = vpop.f32.mrb[0].mxu0
    %v5446 = vadd.f32 0.0, %v5445
    %v5447 = vpop.f32.mrb[0].mxu0
    %5448 = vmatprep.mubr.bf16.mxu0 0
    %5449 = vmatmul.mubr.bf16.gmra.mrb[0].mxu0 %v5379
    %v5450 = vpop.f32.mrb[0].mxu0
    %v5451 = vadd.f32 0.0, %v5450
    %v5452 = vpop.f32.mrb[0].mxu0
    %v5453 = vpop.f32.mrb[0].mxu0
    %v5454 = vadd.f32 0.0, %v5453
    %v5455 = vpop.f32.mrb[0].mxu0
    %5456 = vmatprep.mubr.bf16.mxu0 0
    %5457 = vmatmul.mubr.bf16.gmra.mrb[0].mxu0 %v5382
    %v5458 = vpop.f32.mrb[0].mxu0
    %v5459 = vadd.f32 0.0, %v5458
    %v5460 = vpop.f32.mrb[0].mxu0
    %v5461 = vpop.f32.mrb[0].mxu0
    %v5462 = vadd.f32 0.0, %v5461
    %v5463 = vpop.f32.mrb[0].mxu0
    %5464 = vmatprep.mubr.bf16.mxu0 0
    %5465 = vmatmul.mubr.bf16.gmra.mrb[0].mxu0 %v5385
    %v5466 = vpop.f32.mrb[0].mxu0
    %v5467 = vadd.f32 0.0, %v5466
    %v5468 = vpop.f32.mrb[0].mxu0
    %v5469 = vpop.f32.mrb[0].mxu0
    %v5470 = vadd.f32 0.0, %v5469
    %v5471 = vpop.f32.mrb[0].mxu0
    %5472 = vmatprep.mubr.bf16.mxu0 0
    %5473 = vmatmul.mubr.bf16.gmra.mrb[0].mxu0 %v5388
    %v5474 = vpop.f32.mrb[0].mxu0
    %v5475 = vadd.f32 0.0, %v5474
    %v5476 = vpop.f32.mrb[0].mxu0
    %v5477 = vpop.f32.mrb[0].mxu0
    %v5478 = vadd.f32 0.0, %v5477
    %v5479 = vpop.f32.mrb[0].mxu0
    %5480 = vmatprep.mubr.bf16.mxu0 0
    %5481 = vmatmul.mubr.bf16.gmra.mrb[0].mxu0 %v5391
    %v5482 = vpop.f32.mrb[0].mxu0
    %v5483 = vadd.f32 0.0, %v5482
    %v5484 = vpop.f32.mrb[0].mxu0
    %v5485 = vpop.f32.mrb[0].mxu0
    %v5486 = vadd.f32 0.0, %v5485
    %v5487 = vpop.f32.mrb[0].mxu0
    %5488 = vmatprep.mubr.bf16.mxu0 0
    %5489 = vmatmul.mubr.bf16.gmra.mrb[0].mxu0 %v5394
    %v5490 = vpop.f32.mrb[0].mxu0
    %v5491 = vadd.f32 0.0, %v5490
    %v5492 = vpop.f32.mrb[0].mxu0
    %v5493 = vpop.f32.mrb[0].mxu0
    %v5494 = vadd.f32 0.0, %v5493
    %v5495 = vpop.f32.mrb[0].mxu0
    %5496 = vdwg.mxu0
    %v5498 = vlaneseq
    %v5499 = vshrl.u32 %v5498, 7
    %v5500 = vsub.s32 0, %v5499
    %v5501 = vrot.slane %v66, %v5500
    %v5503 = vmul.f32 %v5435, %v5501
    %v5504 = vmul.f32 %v5438, %v5501
    %v5505 = vmul.f32 %v5443, %v5501
    %v5506 = vmul.f32 %v5446, %v5501
    %v5507 = vmul.f32 %v5451, %v5501
    %v5508 = vmul.f32 %v5454, %v5501
    %v5509 = vmul.f32 %v5459, %v5501
    %v5510 = vmul.f32 %v5462, %v5501
    %v5511 = vmul.f32 %v5467, %v5501
    %v5512 = vmul.f32 %v5470, %v5501
    %v5513 = vmul.f32 %v5475, %v5501
    %v5514 = vmul.f32 %v5478, %v5501
    %v5515 = vmul.f32 %v5483, %v5501
    %v5516 = vmul.f32 %v5486, %v5501
    %v5517 = vmul.f32 %v5491, %v5501
    %v5518 = vmul.f32 %v5494, %v5501
    %v5520 = vlaneseq
    %v5521 = vshrl.u32 %v5520, 7
    %v5522 = vsub.s32 0, %v5521
    %v5523 = vrot.slane %v67, %v5522
    %v5525 = vadd.f32 %v5503, %v5523
    %v5526 = vadd.f32 %v5504, %v5523
    %v5527 = vadd.f32 %v5505, %v5523
    %v5528 = vadd.f32 %v5506, %v5523
    %v5529 = vadd.f32 %v5507, %v5523
    %v5530 = vadd.f32 %v5508, %v5523
    %v5531 = vadd.f32 %v5509, %v5523
    %v5532 = vadd.f32 %v5510, %v5523
    %v5533 = vadd.f32 %v5511, %v5523
    %v5534 = vadd.f32 %v5512, %v5523
    %v5535 = vadd.f32 %v5513, %v5523
    %v5536 = vadd.f32 %v5514, %v5523
    %v5537 = vadd.f32 %v5515, %v5523
    %v5538 = vadd.f32 %v5516, %v5523
    %v5539 = vadd.f32 %v5517, %v5523
    %v5540 = vadd.f32 %v5518, %v5523
    %v5541 = vld [vmem:[%s0] sm:$0xf]
    %v5542 = vld [vmem:[%s0 + $0x4] sm:$0xf]
    %v5543 = vld [vmem:[%s0 + $0x8] sm:$0xf]
    %v5544 = vld [vmem:[%s0 + $0xc] sm:$0xf]
    %v5545 = vld [vmem:[%s0 + $0x10] sm:$0xf]
    %v5546 = vld [vmem:[%s0 + $0x14] sm:$0xf]
    %v5547 = vld [vmem:[%s0 + $0x18] sm:$0xf]
    %v5548 = vld [vmem:[%s0 + $0x1c] sm:$0xf]
    %v5549 = vld [vmem:[%s0 + $0x20] sm:$0xf]
    %v5550 = vld [vmem:[%s0 + $0x24] sm:$0xf]
    %v5551 = vld [vmem:[%s0 + $0x28] sm:$0xf]
    %v5552 = vld [vmem:[%s0 + $0x2c] sm:$0xf]
    %v5553 = vld [vmem:[%s0 + $0x30] sm:$0xf]
    %v5554 = vld [vmem:[%s0 + $0x34] sm:$0xf]
    %v5555 = vld [vmem:[%s0 + $0x38] sm:$0xf]
    %v5556 = vld [vmem:[%s0 + $0x3c] sm:$0xf]
    %v5557 = vunpack.c.l.bf16 %v5541
    %v5558 = vunpack.c.l.bf16 %v5542
    %v5559 = vunpack.c.l.bf16 %v5543
    %v5560 = vunpack.c.l.bf16 %v5544
    %v5561 = vunpack.c.l.bf16 %v5545
    %v5562 = vunpack.c.l.bf16 %v5546
    %v5563 = vunpack.c.l.bf16 %v5547
    %v5564 = vunpack.c.l.bf16 %v5548
    %v5565 = vunpack.c.l.bf16 %v5549
    %v5566 = vunpack.c.l.bf16 %v5550
    %v5567 = vunpack.c.l.bf16 %v5551
    %v5568 = vunpack.c.l.bf16 %v5552
    %v5569 = vunpack.c.l.bf16 %v5553
    %v5570 = vunpack.c.l.bf16 %v5554
    %v5571 = vunpack.c.l.bf16 %v5555
    %v5572 = vunpack.c.l.bf16 %v5556
    %v5573 = vpack.c.bf16 %v5558, %v5557
    %v5574 = vpack.c.bf16 %v5560, %v5559
    %v5575 = vpack.c.bf16 %v5562, %v5561
    %v5576 = vpack.c.bf16 %v5564, %v5563
    %v5577 = vpack.c.bf16 %v5566, %v5565
    %v5578 = vpack.c.bf16 %v5568, %v5567
    %v5579 = vpack.c.bf16 %v5570, %v5569
    %v5580 = vpack.c.bf16 %v5572, %v5571
    %v5581 = vld [vmem:[%s11] sm:$0x3]
    %v5583 = vsel %vm68, %v5573, 0
    %v5586 = vsel %vm68, %v5574, 0
    %v5589 = vsel %vm68, %v5575, 0
    %v5592 = vsel %vm68, %v5576, 0
    %v5595 = vsel %vm68, %v5577, 0
    %v5598 = vsel %vm68, %v5578, 0
    %v5601 = vsel %vm68, %v5579, 0
    %v5604 = vsel %vm68, %v5580, 0
    %v5607 = vsel %vm1442, %v5581, 0
    %5609 = vmatprep.subr.bf16.mxu0 0
    %5610 = vmatpush1.bf16.msra.mxu0 %v5607
    %5611 = vmatprep.subr.bf16.mxu0 0
    %5612 = vmatpush1.bf16.msra.mxu0 0
    %5613 = vmatprep.subr.bf16.mxu0 0
    %5614 = vmatpush1.bf16.msra.mxu0 0
    %5615 = vmatprep.subr.bf16.mxu0 0
    %5616 = vmatpush1.bf16.msra.mxu0 0
    %5617 = vmatprep.subr.bf16.mxu0 0
    %5618 = vmatpush1.bf16.msra.mxu0 0
    %5619 = vmatprep.subr.bf16.mxu0 0
    %5620 = vmatpush1.bf16.msra.mxu0 0
    %5621 = vmatprep.subr.bf16.mxu0 0
    %5622 = vmatpush1.bf16.msra.mxu0 0
    %5623 = vmatprep.subr.bf16.mxu0 0
    %5624 = vmatpush1.bf16.msra.mxu0 0
    %5625 = vmatprep.subr.bf16.mxu0 0
    %5626 = vmatpush1.bf16.msra.mxu0 0
    %5627 = vmatprep.subr.bf16.mxu0 0
    %5628 = vmatpush1.bf16.msra.mxu0 0
    %5629 = vmatprep.subr.bf16.mxu0 0
    %5630 = vmatpush1.bf16.msra.mxu0 0
    %5631 = vmatprep.subr.bf16.mxu0 0
    %5632 = vmatpush1.bf16.msra.mxu0 0
    %5633 = vmatprep.subr.bf16.mxu0 0
    %5634 = vmatpush1.bf16.msra.mxu0 0
    %5635 = vmatprep.subr.bf16.mxu0 0
    %5636 = vmatpush1.bf16.msra.mxu0 0
    %5637 = vmatprep.subr.bf16.mxu0 0
    %5638 = vmatpush1.bf16.msra.mxu0 0
    %5639 = vmatprep.subr.bf16.mxu0 0
    %5640 = vmatpush1.bf16.msra.mxu0 0
    %5641 = vmatprep.mubr.bf16.mxu0 0
    %5642 = vmatmul.mubr.bf16.gmra.mrb[0].mxu0 %v5583
    %v5643 = vpop.f32.mrb[0].mxu0
    %v5644 = vadd.f32 0.0, %v5643
    %v5645 = vpop.f32.mrb[0].mxu0
    %v5646 = vpop.f32.mrb[0].mxu0
    %v5647 = vadd.f32 0.0, %v5646
    %v5648 = vpop.f32.mrb[0].mxu0
    %5649 = vmatprep.mubr.bf16.mxu0 0
    %5650 = vmatmul.mubr.bf16.gmra.mrb[0].mxu0 %v5586
    %v5651 = vpop.f32.mrb[0].mxu0
    %v5652 = vadd.f32 0.0, %v5651
    %v5653 = vpop.f32.mrb[0].mxu0
    %v5654 = vpop.f32.mrb[0].mxu0
    %v5655 = vadd.f32 0.0, %v5654
    %v5656 = vpop.f32.mrb[0].mxu0
    %5657 = vmatprep.mubr.bf16.mxu0 0
    %5658 = vmatmul.mubr.bf16.gmra.mrb[0].mxu0 %v5589
    %v5659 = vpop.f32.mrb[0].mxu0
    %v5660 = vadd.f32 0.0, %v5659
    %v5661 = vpop.f32.mrb[0].mxu0
    %v5662 = vpop.f32.mrb[0].mxu0
    %v5663 = vadd.f32 0.0, %v5662
    %v5664 = vpop.f32.mrb[0].mxu0
    %5665 = vmatprep.mubr.bf16.mxu0 0
    %5666 = vmatmul.mubr.bf16.gmra.mrb[0].mxu0 %v5592
    %v5667 = vpop.f32.mrb[0].mxu0
    %v5668 = vadd.f32 0.0, %v5667
    %v5669 = vpop.f32.mrb[0].mxu0
    %v5670 = vpop.f32.mrb[0].mxu0
    %v5671 = vadd.f32 0.0, %v5670
    %v5672 = vpop.f32.mrb[0].mxu0
    %5673 = vmatprep.mubr.bf16.mxu0 0
    %5674 = vmatmul.mubr.bf16.gmra.mrb[0].mxu0 %v5595
    %v5675 = vpop.f32.mrb[0].mxu0
    %v5676 = vadd.f32 0.0, %v5675
    %v5677 = vpop.f32.mrb[0].mxu0
    %v5678 = vpop.f32.mrb[0].mxu0
    %v5679 = vadd.f32 0.0, %v5678
    %v5680 = vpop.f32.mrb[0].mxu0
    %5681 = vmatprep.mubr.bf16.mxu0 0
    %5682 = vmatmul.mubr.bf16.gmra.mrb[0].mxu0 %v5598
    %v5683 = vpop.f32.mrb[0].mxu0
    %v5684 = vadd.f32 0.0, %v5683
    %v5685 = vpop.f32.mrb[0].mxu0
    %v5686 = vpop.f32.mrb[0].mxu0
    %v5687 = vadd.f32 0.0, %v5686
    %v5688 = vpop.f32.mrb[0].mxu0
    %5689 = vmatprep.mubr.bf16.mxu0 0
    %5690 = vmatmul.mubr.bf16.gmra.mrb[0].mxu0 %v5601
    %v5691 = vpop.f32.mrb[0].mxu0
    %v5692 = vadd.f32 0.0, %v5691
    %v5693 = vpop.f32.mrb[0].mxu0
    %v5694 = vpop.f32.mrb[0].mxu0
    %v5695 = vadd.f32 0.0, %v5694
    %v5696 = vpop.f32.mrb[0].mxu0
    %5697 = vmatprep.mubr.bf16.mxu0 0
    %5698 = vmatmul.mubr.bf16.gmra.mrb[0].mxu0 %v5604
    %v5699 = vpop.f32.mrb[0].mxu0
    %v5700 = vadd.f32 0.0, %v5699
    %v5701 = vpop.f32.mrb[0].mxu0
    %v5702 = vpop.f32.mrb[0].mxu0
    %v5703 = vadd.f32 0.0, %v5702
    %v5704 = vpop.f32.mrb[0].mxu0
    %5705 = vdwg.mxu0
    %v5706 = vld [vmem:[%s12] sm:$0x1]
    %v5708 = vlaneseq
    %v5709 = vshrl.u32 %v5708, 7
    %v5710 = vsub.s32 0, %v5709
    %v5711 = vrot.slane %v5706, %v5710
    %v5713 = vmul.f32 %v5644, %v5711
    %v5714 = vmul.f32 %v5647, %v5711
    %v5715 = vmul.f32 %v5652, %v5711
    %v5716 = vmul.f32 %v5655, %v5711
    %v5717 = vmul.f32 %v5660, %v5711
    %v5718 = vmul.f32 %v5663, %v5711
    %v5719 = vmul.f32 %v5668, %v5711
    %v5720 = vmul.f32 %v5671, %v5711
    %v5721 = vmul.f32 %v5676, %v5711
    %v5722 = vmul.f32 %v5679, %v5711
    %v5723 = vmul.f32 %v5684, %v5711
    %v5724 = vmul.f32 %v5687, %v5711
    %v5725 = vmul.f32 %v5692, %v5711
    %v5726 = vmul.f32 %v5695, %v5711
    %v5727 = vmul.f32 %v5700, %v5711
    %v5728 = vmul.f32 %v5703, %v5711
    %v5729 = vld [vmem:[%s13] sm:$0x1]
    %v5731 = vlaneseq
    %v5732 = vshrl.u32 %v5731, 7
    %v5733 = vsub.s32 0, %v5732
    %v5734 = vrot.slane %v5729, %v5733
    %v5736 = vadd.f32 %v5713, %v5734
    %v5737 = vadd.f32 %v5714, %v5734
    %v5738 = vadd.f32 %v5715, %v5734
    %v5739 = vadd.f32 %v5716, %v5734
    %v5740 = vadd.f32 %v5717, %v5734
    %v5741 = vadd.f32 %v5718, %v5734
    %v5742 = vadd.f32 %v5719, %v5734
    %v5743 = vadd.f32 %v5720, %v5734
    %v5744 = vadd.f32 %v5721, %v5734
    %v5745 = vadd.f32 %v5722, %v5734
    %v5746 = vadd.f32 %v5723, %v5734
    %v5747 = vadd.f32 %v5724, %v5734
    %v5748 = vadd.f32 %v5725, %v5734
    %v5749 = vadd.f32 %v5726, %v5734
    %v5750 = vadd.f32 %v5727, %v5734
    %v5751 = vadd.f32 %v5728, %v5734
    %v5752 = vadd.f32 %v5525, %v5736
    %v5753 = vadd.f32 %v5526, %v5737
    %v5754 = vadd.f32 %v5527, %v5738
    %v5755 = vadd.f32 %v5528, %v5739
    %v5756 = vadd.f32 %v5529, %v5740
    %v5757 = vadd.f32 %v5530, %v5741
    %v5758 = vadd.f32 %v5531, %v5742
    %v5759 = vadd.f32 %v5532, %v5743
    %v5760 = vadd.f32 %v5533, %v5744
    %v5761 = vadd.f32 %v5534, %v5745
    %v5762 = vadd.f32 %v5535, %v5746
    %v5763 = vadd.f32 %v5536, %v5747
    %v5764 = vadd.f32 %v5537, %v5748
    %v5765 = vadd.f32 %v5538, %v5749
    %v5766 = vadd.f32 %v5539, %v5750
    %v5767 = vadd.f32 %v5540, %v5751
    %5768 = vst.msk [vmem:[#allocation10] sm:$0xff] %vm74, %v5752
    %5769 = vst.msk [vmem:[#allocation10 + $0x8] sm:$0xff] %vm74, %v5753
    %5770 = vst.msk [vmem:[#allocation10 + $0x10] sm:$0xff] %vm74, %v5754
    %5771 = vst.msk [vmem:[#allocation10 + $0x18] sm:$0xff] %vm74, %v5755
    %5772 = vst.msk [vmem:[#allocation10 + $0x20] sm:$0xff] %vm74, %v5756
    %5773 = vst.msk [vmem:[#allocation10 + $0x28] sm:$0xff] %vm74, %v5757
    %5774 = vst.msk [vmem:[#allocation10 + $0x30] sm:$0xff] %vm74, %v5758
    %5775 = vst.msk [vmem:[#allocation10 + $0x38] sm:$0xff] %vm74, %v5759
    %5776 = vst.msk [vmem:[#allocation10 + $0x40] sm:$0xff] %vm74, %v5760
    %5777 = vst.msk [vmem:[#allocation10 + $0x48] sm:$0xff] %vm74, %v5761
    %5778 = vst.msk [vmem:[#allocation10 + $0x50] sm:$0xff] %vm74, %v5762
    %5779 = vst.msk [vmem:[#allocation10 + $0x58] sm:$0xff] %vm74, %v5763
    %5780 = vst.msk [vmem:[#allocation10 + $0x60] sm:$0xff] %vm74, %v5764
    %5781 = vst.msk [vmem:[#allocation10 + $0x68] sm:$0xff] %vm74, %v5765
    %5782 = vst.msk [vmem:[#allocation10 + $0x70] sm:$0xff] %vm74, %v5766
    %5783 = vst.msk [vmem:[#allocation10 + $0x78] sm:$0xff] %vm74, %v5767
    // Predicated region
    $region58: #{tpu_custom_call.1} parent=1 // pred_check
      _
    $region59: #{tpu_custom_call.1} parent=1 // pred_check_branch
      %5785 = sbr.rel (0) target = $region61
    $region60: #{tpu_custom_call.1} parent=1 // pred_region
      %s5787 = ssub.s32 2048, 2048
      %5788 = vsyncadd [#allocation11], %s5787
      %s5789 = sshll.u32 [#allocation10], 4
      %s5790 = int_to_ptr.vmem [resolvable:$true] %s5789
      %5795 = dma.vmem_to_hbm [thread:$0]  %s5790, 2048, %s14, [#allocation11], 128, 128, 8
    $region61: #{tpu_custom_call.1} parent=1 // pred_fallthru
      _
    // Predicated region
    $region62: #{tpu_custom_call.1} parent=1 // pred_check
      _
    $region63: #{tpu_custom_call.1} parent=1 // pred_check_branch
      %5797 = sbr.rel (0) target = $region65
    $region64: #{tpu_custom_call.1} parent=1 // pred_region
      %5798 = dma.done [#allocation11], 2048
    $region65: #{tpu_custom_call.1} parent=1 // pred_fallthru
      _
    %5799 = vsyncpa [#allocation11], 1

</llo_original>
